<compile_context>
chip_gen: v6e
topology: v6e:2x2x1
jax: 0.10.0
libtpu: 0.0.40
codegen_flags: <defaults>
</compile_context>

<pallas_src>
import jax
import jax.numpy as jnp
from jax import lax
from jax.experimental import pallas as pl
from jax.experimental.pallas import tpu as pltpu

# --- quantization constants (NbitActive, num_bits=8, num_int=3) ---
_NUM_BITS = 8
_NUM_INT = 3
_QMIN = -(2.0 ** (_NUM_INT - 1))                                       # -4.0
_QMAX = _QMIN + 2.0 ** _NUM_INT - 1.0 / 2.0 ** (_NUM_BITS - _NUM_INT)  # 3.96875
_SCALE = 1.0 / 2.0 ** (_NUM_BITS - _NUM_INT)                           # 1/32
_INV_SCALE = 2.0 ** (_NUM_BITS - _NUM_INT)                             # 32

_LANE = 128
_TARGET_ROWS = 1024   # target matmul M (output rows, incl. padded width) per tile


def _round_up(x, m):
    return (x + m - 1) // m * m


def _pick_toh(oh, wp):
    """Output-row tile height. Biggest tile with ~<= _TARGET_ROWS matmul rows;
    when tiling OH it must be a multiple of 8 so the flat output block stays
    (8,128)-aligned; among candidates pick the one minimizing OH padding."""
    cap = max(1, _TARGET_ROWS // max(wp, 1))
    if oh <= cap:
        return oh                         # single tile: block == full dim
    cands = list(range(8, cap + 1, 8)) or [8]
    return min(cands, key=lambda t: (_round_up(oh, t), -t))


def _quantize(x_f32):
    """NbitActive: x - fmod(x, 1/32), clamped to [-4, 3.96875]."""
    q = jnp.trunc(x_f32 * _INV_SCALE) * _SCALE
    return jnp.clip(q, _QMIN, _QMAX)


# --------------------------------------------------------------------------
# stride == 1 fast path: flat (H*W, C_in) layout, contiguous tap offsets
# --------------------------------------------------------------------------
def _make_flat_kernel(*, kh, kw, toh, wp, c_in, c_out_pad, compute_dtype,
                      aligned):
    m = toh * wp                              # matmul rows per tile
    m_in = (toh + kh - 1) * wp + (kw - 1)     # input rows needed per tile

    def kernel(x_ref, w_ref, b_ref, o_ref, q_ref):
        # x_ref : (1, HP*WP, C_in)          flat padded image of batch item b (f32)
        # w_ref : (KH*KW, C_in, C_out_pad)  per-tap weight matrices
        # b_ref : (1, C_out_pad)            bias (f32)
        # o_ref : (1, TOH*WP, C_out_pad)    output tile (f32), used as accumulator
        # q_ref : (m_in, C_in)              quantized input window scratch
        t = pl.program_id(1)
        start = t * m
        if aligned:
            start = pl.multiple_of(start, 8)

        # --- NbitActive quantization, once per tile ------------------------
        xw = x_ref[0, pl.ds(start, m_in), :].astype(jnp.float32)
        q_ref[...] = _quantize(xw).astype(compute_dtype)

        # --- conv = sum over KH*KW taps; each tap is a contiguous offset ---
        tap = 0
        for dh in range(kh):
            for dw in range(kw):
                lhs = q_ref[pl.ds(dh * wp + dw, m), :]
                contrib = jnp.dot(lhs, w_ref[tap],
                                  preferred_element_type=jnp.float32)
                if tap == 0:
                    o_ref[0] = contrib
                else:
                    o_ref[0] += contrib
                tap += 1

        # --- bias + ReLU fused into the (lane-dense) output block ----------
        o_ref[0] = jnp.maximum(o_ref[0] + b_ref[...], 0.0)

    return kernel


# --------------------------------------------------------------------------
# stride > 1 fallback: windowed tap-decomposed matmuls (previous version)
# --------------------------------------------------------------------------
def _make_strided_kernel(*, kh, kw, stride, toh, ow, c_in, c_out_pad,
                         compute_dtype):
    toh_in = (toh - 1) * stride + kh
    m = toh * ow

    def kernel(x_ref, w_ref, b_ref, o_ref, acc_ref):
        t = pl.program_id(1)
        row0 = t * (toh * stride)
        x_win = x_ref[0, pl.ds(row0, toh_in), :, :].astype(jnp.float32)
        q = _quantize(x_win).astype(compute_dtype)
        first = True
        for dh in range(kh):
            for dw in range(kw):
                win = q[dh:dh + (toh - 1) * stride + 1:stride,
                        dw:dw + (ow - 1) * stride + 1:stride, :]
                lhs = win.reshape(m, c_in)
                contrib = jnp.dot(lhs, w_ref[dh * kw + dw],
                                  preferred_element_type=jnp.float32)
                if first:
                    acc_ref[...] = contrib
                    first = False
                else:
                    acc_ref[...] += contrib
        out = jnp.maximum(acc_ref[...] + b_ref[...], 0.0)
        o_ref[...] = out.reshape(1, toh, ow, c_out_pad).astype(o_ref.dtype)

    return kernel


def qconv2d_forward_nhwc(x_nhwc, weight, bias, *, stride, padding,
                         compute_dtype=jnp.bfloat16):
    """QConv2d forward, NHWC in / NHWC out.

    x_nhwc : [N, H, W, C_in]        float32
    weight : [C_out, C_in, KH, KW]  float32 (PyTorch conv weight layout)
    bias   : [C_out]                float32
    returns [N, OH, OW, C_out]      float32
    """
    n, h, w, c_in = x_nhwc.shape
    c_out, c_in_w, kh, kw = weight.shape
    assert c_in_w == c_in

    oh = (h + 2 * padding - kh) // stride + 1
    ow = (w + 2 * padding - kw) // stride + 1
    c_out_pad = _round_up(c_out, _LANE)

    # Weights: (C_out, C_in, KH, KW) -> (KH*KW, C_in, C_out_pad), compute dtype.
    w_taps = jnp.transpose(weight, (2, 3, 1, 0)).reshape(kh * kw, c_in, c_out)
    w_taps = jnp.pad(w_taps, ((0, 0), (0, 0), (0, c_out_pad - c_out)))
    w_taps = w_taps.astype(compute_dtype)
    b_pad = jnp.pad(bias.astype(jnp.float32),
                    (0, c_out_pad - c_out)).reshape(1, c_out_pad)

    if stride == 1:
        wp = w + 2 * padding
        toh = _pick_toh(oh, wp)
        oh_pad = _round_up(oh, toh)
        n_toh = oh_pad // toh
        # Bottom padding: OH-tail tile rows + (kh-1) conv rows + one extra row
        # so the last tap's flat window (offset (kh-1)*wp + kw-1) stays in-bounds.
        hp_pad = oh_pad + kh - 1 + (1 if kw > 1 else 0)
        xp = jnp.pad(x_nhwc.astype(jnp.float32),
                     ((0, 0),
                      (padding, hp_pad - h - padding),
                      (padding, padding),
                      (0, 0)))
        x_flat = xp.reshape(n, hp_pad * wp, c_in)

        m = toh * wp
        m_in = (toh + kh - 1) * wp + (kw - 1)
        aligned = (m % 8 == 0) or (n_toh == 1)

        kernel = _make_flat_kernel(kh=kh, kw=kw, toh=toh, wp=wp, c_in=c_in,
                                   c_out_pad=c_out_pad,
                                   compute_dtype=compute_dtype,
                                   aligned=aligned)

        out = pl.pallas_call(
            kernel,
            out_shape=jax.ShapeDtypeStruct((n, oh_pad * wp, c_out_pad),
                                           jnp.float32),
            grid_spec=pltpu.PrefetchScalarGridSpec(
                num_scalar_prefetch=0,
                grid=(n, n_toh),
                in_specs=[
                    # Whole flat padded image of batch item b; re-DMA'd only
                    # when b changes (index map constant in t).
                    pl.BlockSpec((1, hp_pad * wp, c_in), lambda b, t: (b, 0, 0)),
                    # Weights / bias resident across the whole grid.
                    pl.BlockSpec((kh * kw, c_in, c_out_pad),
                                 lambda b, t: (0, 0, 0)),
                    pl.BlockSpec((1, c_out_pad), lambda b, t: (0, 0)),
                ],
                out_specs=pl.BlockSpec((1, m, c_out_pad),
                                       lambda b, t: (b, t, 0)),
                scratch_shapes=[pltpu.VMEM((m_in, c_in), compute_dtype)],
            ),
            compiler_params=pltpu.CompilerParams(
                dimension_semantics=("parallel", "parallel")),
        )(x_flat, w_taps, b_pad)

        # Drop OH tail padding, the wp-ow junk columns and padded channels.
        out = out.reshape(n, oh_pad, wp, c_out_pad)
        return out[:, :oh, :ow, :c_out]

    # ---- stride > 1 fallback (not used by NIN, kept for completeness) ----
    toh = max(1, min(oh, _TARGET_ROWS // max(ow, 1)))
    oh_pad = _round_up(oh, toh)
    n_toh = oh_pad // toh
    wp = w + 2 * padding
    hp_pad = max(h + 2 * padding, (oh_pad - 1) * stride + kh)
    xp = jnp.pad(x_nhwc.astype(jnp.float32),
                 ((0, 0),
                  (padding, hp_pad - h - padding),
                  (padding, padding),
                  (0, 0)))
    kernel = _make_strided_kernel(kh=kh, kw=kw, stride=stride, toh=toh, ow=ow,
                                  c_in=c_in, c_out_pad=c_out_pad,
                                  compute_dtype=compute_dtype)
    out = pl.pallas_call(
        kernel,
        out_shape=jax.ShapeDtypeStruct((n, oh_pad, ow, c_out_pad), jnp.float32),
        grid_spec=pltpu.PrefetchScalarGridSpec(
            num_scalar_prefetch=0,
            grid=(n, n_toh),
            in_specs=[
                pl.BlockSpec((1, hp_pad, wp, c_in), lambda b, t: (b, 0, 0, 0)),
                pl.BlockSpec((kh * kw, c_in, c_out_pad), lambda b, t: (0, 0, 0)),
                pl.BlockSpec((1, c_out_pad), lambda b, t: (0, 0)),
            ],
            out_specs=pl.BlockSpec((1, toh, ow, c_out_pad),
                                   lambda b, t: (b, t, 0, 0)),
            scratch_shapes=[pltpu.VMEM((toh * ow, c_out_pad), jnp.float32)],
        ),
        compiler_params=pltpu.CompilerParams(
            dimension_semantics=("parallel", "parallel")),
    )(xp, w_taps, b_pad)
    return out[:, :oh, :, :c_out]


def qconv2d_forward(x_nchw, weight, bias, *, stride, padding,
                    compute_dtype=jnp.bfloat16):
    """NCHW convenience wrapper (PyTorch layout). In a full model, keep NHWC
    across layers and convert only at the model boundary."""
    x_nhwc = jnp.transpose(x_nchw, (0, 2, 3, 1))
    y = qconv2d_forward_nhwc(x_nhwc, weight, bias, stride=stride,
                             padding=padding, compute_dtype=compute_dtype)
    return jnp.transpose(y, (0, 3, 1, 2))


def _reference_forward(x_nchw, weight, bias, *, stride, padding):
    """Pure-JAX f32 reference for correctness checking."""
    xs = x_nchw * _INV_SCALE
    q = jnp.clip(jnp.trunc(xs) * _SCALE, _QMIN, _QMAX)
    y = lax.conv_general_dilated(
        q, weight, window_strides=(stride, stride),
        padding=[(padding, padding), (padding, padding)],
        dimension_numbers=("NCHW", "OIHW", "NCHW"))
    y = y + bias.reshape(1, -1, 1, 1)
    return jnp.maximum(y, 0.0)


if __name__ == "__main__":
    key = jax.random.PRNGKey(0)
    kx, kw_, kb = jax.random.split(key, 3)

    N, C_IN, H, W = 2, 4, 16, 16
    C_OUT, KH, KW = 8, 3, 3
    STRIDE, PADDING = 1, 1

    x = jax.random.normal(kx, (N, C_IN, H, W), dtype=jnp.float32) * 2.0
    fan_in = C_IN * KH * KW
    weight = jax.random.normal(kw_, (C_OUT, C_IN, KH, KW),
                               dtype=jnp.float32) / jnp.sqrt(fan_in)
    bias = jax.random.normal(kb, (C_OUT,), dtype=jnp.float32) * 0.1

    ref = jax.block_until_ready(
        _reference_forward(x, weight, bias, stride=STRIDE, padding=PADDING))

    # Exact-semantics path (f32 MXU feed): matches the PyTorch module.
    out_f32 = qconv2d_forward(x, weight, bias, stride=STRIDE, padding=PADDING,
                              compute_dtype=jnp.float32)
    out_f32 = jax.block_until_ready(out_f32)
    assert out_f32.shape == (N, C_OUT, H, W), out_f32.shape
    assert jnp.allclose(out_f32, ref, atol=1e-4, rtol=1e-4), \
        float(jnp.max(jnp.abs(out_f32 - ref)))

    # Fast path (bf16 MXU feed, f32 accumulate) — default for v6e/v7x.
    # Quantized activations (k/32, |k|<=127) are exact in bf16; only the
    # weight cast changes numerics, hence the relaxed tolerance.
    out_bf16 = qconv2d_forward(x, weight, bias, stride=STRIDE, padding=PADDING,
                               compute_dtype=jnp.bfloat16)
    out_bf16 = jax.block_until_ready(out_bf16)
    assert out_bf16.shape == (N, C_OUT, H, W), out_bf16.shape
    assert jnp.allclose(out_bf16, ref, atol=5e-2, rtol=5e-2), \
        float(jnp.max(jnp.abs(out_bf16 - ref)))

    print("KERNEL_OK")
</pallas_src>

<mosaic_0001>
module attributes {stable_mosaic.version = 11 : i64} {
  func.func @kernel(%arg0: i32, %arg1: i32, %arg2: memref<1x342x4xf32, #tpu.memory_space<vmem>>, %arg3: memref<9x4x128xf32, #tpu.memory_space<vmem>>, %arg4: memref<1x128xf32, #tpu.memory_space<vmem>>, %arg5: memref<1x288x128xf32, #tpu.memory_space<vmem>>, %arg6: memref<326x4xf32, #tpu.memory_space<vmem>>) attributes {dimension_semantics = [#tpu.dimension_semantics<parallel>, #tpu.dimension_semantics<parallel>], iteration_bounds = array<i64: 2, 1>, scalar_prefetch = 0 : i64, scratch_operands = 1 : i64, tpu.core_type = #tpu.core_type<tc>, window_params = [{transform_indices = @transform_0, window_bounds = array<i64: 1, 342, 4>}, {pipeline_mode = #tpu.pipeline_mode<synchronous>, transform_indices = @transform_1, window_bounds = array<i64: 9, 4, 128>}, {pipeline_mode = #tpu.pipeline_mode<synchronous>, transform_indices = @transform_2, window_bounds = array<i64: 1, 128>}, {transform_indices = @transform_3, window_bounds = array<i64: 1, 288, 128>}]} {
    %c288_i32 = arith.constant 288 : i32
    %0 = arith.muli %arg1, %c288_i32 : i32
    %1 = tpu.assume_multiple %0, 8 : i32
    %c0 = arith.constant 0 : index
    %2 = arith.index_cast %1 : i32 to index
    %c0_0 = arith.constant 0 : index
    %3 = vector.load %arg2[%c0, %2, %c0_0] : memref<1x342x4xf32, #tpu.memory_space<vmem>>, vector<1x326x4xf32>
    %4 = vector.shape_cast %3 : vector<1x326x4xf32> to vector<326x4xf32>
    %cst = arith.constant 3.200000e+01 : f32
    %5 = vector.broadcast %cst : f32 to vector<326x4xf32>
    %6 = arith.mulf %4, %5 : vector<326x4xf32>
    %cst_1 = arith.constant 0.000000e+00 : f32
    %7 = vector.broadcast %cst_1 : f32 to vector<326x4xf32>
    %8 = arith.cmpf olt, %6, %7 : vector<326x4xf32>
    %9 = math.ceil %6 : vector<326x4xf32>
    %10 = math.floor %6 : vector<326x4xf32>
    %11 = arith.select %8, %9, %10 : vector<326x4xi1>, vector<326x4xf32>
    %cst_2 = arith.constant 3.125000e-02 : f32
    %12 = vector.broadcast %cst_2 : f32 to vector<326x4xf32>
    %13 = arith.mulf %11, %12 : vector<326x4xf32>
    %cst_3 = arith.constant -4.000000e+00 : f32
    %cst_4 = arith.constant 3.968750e+00 : f32
    %14 = vector.broadcast %cst_3 : f32 to vector<326x4xf32>
    %15 = arith.maximumf %14, %13 : vector<326x4xf32>
    %16 = vector.broadcast %cst_4 : f32 to vector<326x4xf32>
    %17 = arith.minimumf %16, %15 : vector<326x4xf32>
    %c0_5 = arith.constant 0 : index
    %c0_6 = arith.constant 0 : index
    %18 = vector.load %arg6[%c0_5, %c0_6] : memref<326x4xf32, #tpu.memory_space<vmem>>, vector<326x4xf32>
    tpu.vector_store %arg6[%c0_5, %c0_6], %17 {strides = array<i32>} : memref<326x4xf32, #tpu.memory_space<vmem>>, vector<326x4xf32>,
    %c0_7 = arith.constant 0 : index
    %c0_8 = arith.constant 0 : index
    %19 = vector.load %arg6[%c0_7, %c0_8] : memref<326x4xf32, #tpu.memory_space<vmem>>, vector<288x4xf32>
    %c0_9 = arith.constant 0 : index
    %c0_10 = arith.constant 0 : index
    %c0_11 = arith.constant 0 : index
    %20 = vector.load %arg3[%c0_9, %c0_10, %c0_11] : memref<9x4x128xf32, #tpu.memory_space<vmem>>, vector<1x4x128xf32>
    %21 = vector.shape_cast %20 : vector<1x4x128xf32> to vector<4x128xf32>
    %cst_12 = arith.constant dense<0.000000e+00> : vector<288x128xf32>
    %22 = tpu.matmul %19, %21, %cst_12 {dimension_numbers = #tpu.dot_dimension_numbers<[1], [0], [0], [1], [0, 0, 1, 1], [], []>} : vector<288x4xf32>, vector<4x128xf32>, vector<288x128xf32> -> vector<288x128xf32>
    %c0_13 = arith.constant 0 : index
    %c0_14 = arith.constant 0 : index
    %c0_15 = arith.constant 0 : index
    %23 = vector.load %arg5[%c0_13, %c0_14, %c0_15] : memref<1x288x128xf32, #tpu.memory_space<vmem>>, vector<1x288x128xf32>
    %24 = vector.shape_cast %23 : vector<1x288x128xf32> to vector<288x128xf32>
    %25 = vector.shape_cast %22 : vector<288x128xf32> to vector<1x288x128xf32>
    tpu.vector_store %arg5[%c0_13, %c0_14, %c0_15], %25 {strides = array<i32>} : memref<1x288x128xf32, #tpu.memory_space<vmem>>, vector<1x288x128xf32>,
    %c1 = arith.constant 1 : index
    %c0_16 = arith.constant 0 : index
    %26 = vector.load %arg6[%c1, %c0_16] : memref<326x4xf32, #tpu.memory_space<vmem>>, vector<288x4xf32>
    %c1_17 = arith.constant 1 : index
    %c0_18 = arith.constant 0 : index
    %c0_19 = arith.constant 0 : index
    %27 = vector.load %arg3[%c1_17, %c0_18, %c0_19] : memref<9x4x128xf32, #tpu.memory_space<vmem>>, vector<1x4x128xf32>
    %28 = vector.shape_cast %27 : vector<1x4x128xf32> to vector<4x128xf32>
    %cst_20 = arith.constant dense<0.000000e+00> : vector<288x128xf32>
    %29 = tpu.matmul %26, %28, %cst_20 {dimension_numbers = #tpu.dot_dimension_numbers<[1], [0], [0], [1], [0, 0, 1, 1], [], []>} : vector<288x4xf32>, vector<4x128xf32>, vector<288x128xf32> -> vector<288x128xf32>
    %c0_21 = arith.constant 0 : index
    %c0_22 = arith.constant 0 : index
    %c0_23 = arith.constant 0 : index
    %30 = vector.load %arg5[%c0_21, %c0_22, %c0_23] : memref<1x288x128xf32, #tpu.memory_space<vmem>>, vector<1x288x128xf32>
    %31 = vector.shape_cast %30 : vector<1x288x128xf32> to vector<288x128xf32>
    %32 = arith.addf %31, %29 : vector<288x128xf32>
    %c0_24 = arith.constant 0 : index
    %c0_25 = arith.constant 0 : index
    %c0_26 = arith.constant 0 : index
    %33 = vector.load %arg5[%c0_24, %c0_25, %c0_26] : memref<1x288x128xf32, #tpu.memory_space<vmem>>, vector<1x288x128xf32>
    %34 = vector.shape_cast %33 : vector<1x288x128xf32> to vector<288x128xf32>
    %35 = vector.shape_cast %32 : vector<288x128xf32> to vector<1x288x128xf32>
    tpu.vector_store %arg5[%c0_24, %c0_25, %c0_26], %35 {strides = array<i32>} : memref<1x288x128xf32, #tpu.memory_space<vmem>>, vector<1x288x128xf32>,
    %c2 = arith.constant 2 : index
    %c0_27 = arith.constant 0 : index
    %36 = vector.load %arg6[%c2, %c0_27] : memref<326x4xf32, #tpu.memory_space<vmem>>, vector<288x4xf32>
    %c2_28 = arith.constant 2 : index
    %c0_29 = arith.constant 0 : index
    %c0_30 = arith.constant 0 : index
    %37 = vector.load %arg3[%c2_28, %c0_29, %c0_30] : memref<9x4x128xf32, #tpu.memory_space<vmem>>, vector<1x4x128xf32>
    %38 = vector.shape_cast %37 : vector<1x4x128xf32> to vector<4x128xf32>
    %cst_31 = arith.constant dense<0.000000e+00> : vector<288x128xf32>
    %39 = tpu.matmul %36, %38, %cst_31 {dimension_numbers = #tpu.dot_dimension_numbers<[1], [0], [0], [1], [0, 0, 1, 1], [], []>} : vector<288x4xf32>, vector<4x128xf32>, vector<288x128xf32> -> vector<288x128xf32>
    %c0_32 = arith.constant 0 : index
    %c0_33 = arith.constant 0 : index
    %c0_34 = arith.constant 0 : index
    %40 = vector.load %arg5[%c0_32, %c0_33, %c0_34] : memref<1x288x128xf32, #tpu.memory_space<vmem>>, vector<1x288x128xf32>
    %41 = vector.shape_cast %40 : vector<1x288x128xf32> to vector<288x128xf32>
    %42 = arith.addf %41, %39 : vector<288x128xf32>
    %c0_35 = arith.constant 0 : index
    %c0_36 = arith.constant 0 : index
    %c0_37 = arith.constant 0 : index
    %43 = vector.load %arg5[%c0_35, %c0_36, %c0_37] : memref<1x288x128xf32, #tpu.memory_space<vmem>>, vector<1x288x128xf32>
    %44 = vector.shape_cast %43 : vector<1x288x128xf32> to vector<288x128xf32>
    %45 = vector.shape_cast %42 : vector<288x128xf32> to vector<1x288x128xf32>
    tpu.vector_store %arg5[%c0_35, %c0_36, %c0_37], %45 {strides = array<i32>} : memref<1x288x128xf32, #tpu.memory_space<vmem>>, vector<1x288x128xf32>,
    %c18 = arith.constant 18 : index
    %c0_38 = arith.constant 0 : index
    %46 = vector.load %arg6[%c18, %c0_38] : memref<326x4xf32, #tpu.memory_space<vmem>>, vector<288x4xf32>
    %c3 = arith.constant 3 : index
    %c0_39 = arith.constant 0 : index
    %c0_40 = arith.constant 0 : index
    %47 = vector.load %arg3[%c3, %c0_39, %c0_40] : memref<9x4x128xf32, #tpu.memory_space<vmem>>, vector<1x4x128xf32>
    %48 = vector.shape_cast %47 : vector<1x4x128xf32> to vector<4x128xf32>
    %cst_41 = arith.constant dense<0.000000e+00> : vector<288x128xf32>
    %49 = tpu.matmul %46, %48, %cst_41 {dimension_numbers = #tpu.dot_dimension_numbers<[1], [0], [0], [1], [0, 0, 1, 1], [], []>} : vector<288x4xf32>, vector<4x128xf32>, vector<288x128xf32> -> vector<288x128xf32>
    %c0_42 = arith.constant 0 : index
    %c0_43 = arith.constant 0 : index
    %c0_44 = arith.constant 0 : index
    %50 = vector.load %arg5[%c0_42, %c0_43, %c0_44] : memref<1x288x128xf32, #tpu.memory_space<vmem>>, vector<1x288x128xf32>
    %51 = vector.shape_cast %50 : vector<1x288x128xf32> to vector<288x128xf32>
    %52 = arith.addf %51, %49 : vector<288x128xf32>
    %c0_45 = arith.constant 0 : index
    %c0_46 = arith.constant 0 : index
    %c0_47 = arith.constant 0 : index
    %53 = vector.load %arg5[%c0_45, %c0_46, %c0_47] : memref<1x288x128xf32, #tpu.memory_space<vmem>>, vector<1x288x128xf32>
    %54 = vector.shape_cast %53 : vector<1x288x128xf32> to vector<288x128xf32>
    %55 = vector.shape_cast %52 : vector<288x128xf32> to vector<1x288x128xf32>
    tpu.vector_store %arg5[%c0_45, %c0_46, %c0_47], %55 {strides = array<i32>} : memref<1x288x128xf32, #tpu.memory_space<vmem>>, vector<1x288x128xf32>,
    %c19 = arith.constant 19 : index
    %c0_48 = arith.constant 0 : index
    %56 = vector.load %arg6[%c19, %c0_48] : memref<326x4xf32, #tpu.memory_space<vmem>>, vector<288x4xf32>
    %c4 = arith.constant 4 : index
    %c0_49 = arith.constant 0 : index
    %c0_50 = arith.constant 0 : index
    %57 = vector.load %arg3[%c4, %c0_49, %c0_50] : memref<9x4x128xf32, #tpu.memory_space<vmem>>, vector<1x4x128xf32>
    %58 = vector.shape_cast %57 : vector<1x4x128xf32> to vector<4x128xf32>
    %cst_51 = arith.constant dense<0.000000e+00> : vector<288x128xf32>
    %59 = tpu.matmul %56, %58, %cst_51 {dimension_numbers = #tpu.dot_dimension_numbers<[1], [0], [0], [1], [0, 0, 1, 1], [], []>} : vector<288x4xf32>, vector<4x128xf32>, vector<288x128xf32> -> vector<288x128xf32>
    %c0_52 = arith.constant 0 : index
    %c0_53 = arith.constant 0 : index
    %c0_54 = arith.constant 0 : index
    %60 = vector.load %arg5[%c0_52, %c0_53, %c0_54] : memref<1x288x128xf32, #tpu.memory_space<vmem>>, vector<1x288x128xf32>
    %61 = vector.shape_cast %60 : vector<1x288x128xf32> to vector<288x128xf32>
    %62 = arith.addf %61, %59 : vector<288x128xf32>
    %c0_55 = arith.constant 0 : index
    %c0_56 = arith.constant 0 : index
    %c0_57 = arith.constant 0 : index
    %63 = vector.load %arg5[%c0_55, %c0_56, %c0_57] : memref<1x288x128xf32, #tpu.memory_space<vmem>>, vector<1x288x128xf32>
    %64 = vector.shape_cast %63 : vector<1x288x128xf32> to vector<288x128xf32>
    %65 = vector.shape_cast %62 : vector<288x128xf32> to vector<1x288x128xf32>
    tpu.vector_store %arg5[%c0_55, %c0_56, %c0_57], %65 {strides = array<i32>} : memref<1x288x128xf32, #tpu.memory_space<vmem>>, vector<1x288x128xf32>,
    %c20 = arith.constant 20 : index
    %c0_58 = arith.constant 0 : index
    %66 = vector.load %arg6[%c20, %c0_58] : memref<326x4xf32, #tpu.memory_space<vmem>>, vector<288x4xf32>
    %c5 = arith.constant 5 : index
    %c0_59 = arith.constant 0 : index
    %c0_60 = arith.constant 0 : index
    %67 = vector.load %arg3[%c5, %c0_59, %c0_60] : memref<9x4x128xf32, #tpu.memory_space<vmem>>, vector<1x4x128xf32>
    %68 = vector.shape_cast %67 : vector<1x4x128xf32> to vector<4x128xf32>
    %cst_61 = arith.constant dense<0.000000e+00> : vector<288x128xf32>
    %69 = tpu.matmul %66, %68, %cst_61 {dimension_numbers = #tpu.dot_dimension_numbers<[1], [0], [0], [1], [0, 0, 1, 1], [], []>} : vector<288x4xf32>, vector<4x128xf32>, vector<288x128xf32> -> vector<288x128xf32>
    %c0_62 = arith.constant 0 : index
    %c0_63 = arith.constant 0 : index
    %c0_64 = arith.constant 0 : index
    %70 = vector.load %arg5[%c0_62, %c0_63, %c0_64] : memref<1x288x128xf32, #tpu.memory_space<vmem>>, vector<1x288x128xf32>
    %71 = vector.shape_cast %70 : vector<1x288x128xf32> to vector<288x128xf32>
    %72 = arith.addf %71, %69 : vector<288x128xf32>
    %c0_65 = arith.constant 0 : index
    %c0_66 = arith.constant 0 : index
    %c0_67 = arith.constant 0 : index
    %73 = vector.load %arg5[%c0_65, %c0_66, %c0_67] : memref<1x288x128xf32, #tpu.memory_space<vmem>>, vector<1x288x128xf32>
    %74 = vector.shape_cast %73 : vector<1x288x128xf32> to vector<288x128xf32>
    %75 = vector.shape_cast %72 : vector<288x128xf32> to vector<1x288x128xf32>
    tpu.vector_store %arg5[%c0_65, %c0_66, %c0_67], %75 {strides = array<i32>} : memref<1x288x128xf32, #tpu.memory_space<vmem>>, vector<1x288x128xf32>,
    %c36 = arith.constant 36 : index
    %c0_68 = arith.constant 0 : index
    %76 = vector.load %arg6[%c36, %c0_68] : memref<326x4xf32, #tpu.memory_space<vmem>>, vector<288x4xf32>
    %c6 = arith.constant 6 : index
    %c0_69 = arith.constant 0 : index
    %c0_70 = arith.constant 0 : index
    %77 = vector.load %arg3[%c6, %c0_69, %c0_70] : memref<9x4x128xf32, #tpu.memory_space<vmem>>, vector<1x4x128xf32>
    %78 = vector.shape_cast %77 : vector<1x4x128xf32> to vector<4x128xf32>
    %cst_71 = arith.constant dense<0.000000e+00> : vector<288x128xf32>
    %79 = tpu.matmul %76, %78, %cst_71 {dimension_numbers = #tpu.dot_dimension_numbers<[1], [0], [0], [1], [0, 0, 1, 1], [], []>} : vector<288x4xf32>, vector<4x128xf32>, vector<288x128xf32> -> vector<288x128xf32>
    %c0_72 = arith.constant 0 : index
    %c0_73 = arith.constant 0 : index
    %c0_74 = arith.constant 0 : index
    %80 = vector.load %arg5[%c0_72, %c0_73, %c0_74] : memref<1x288x128xf32, #tpu.memory_space<vmem>>, vector<1x288x128xf32>
    %81 = vector.shape_cast %80 : vector<1x288x128xf32> to vector<288x128xf32>
    %82 = arith.addf %81, %79 : vector<288x128xf32>
    %c0_75 = arith.constant 0 : index
    %c0_76 = arith.constant 0 : index
    %c0_77 = arith.constant 0 : index
    %83 = vector.load %arg5[%c0_75, %c0_76, %c0_77] : memref<1x288x128xf32, #tpu.memory_space<vmem>>, vector<1x288x128xf32>
    %84 = vector.shape_cast %83 : vector<1x288x128xf32> to vector<288x128xf32>
    %85 = vector.shape_cast %82 : vector<288x128xf32> to vector<1x288x128xf32>
    tpu.vector_store %arg5[%c0_75, %c0_76, %c0_77], %85 {strides = array<i32>} : memref<1x288x128xf32, #tpu.memory_space<vmem>>, vector<1x288x128xf32>,
    %c37 = arith.constant 37 : index
    %c0_78 = arith.constant 0 : index
    %86 = vector.load %arg6[%c37, %c0_78] : memref<326x4xf32, #tpu.memory_space<vmem>>, vector<288x4xf32>
    %c7 = arith.constant 7 : index
    %c0_79 = arith.constant 0 : index
    %c0_80 = arith.constant 0 : index
    %87 = vector.load %arg3[%c7, %c0_79, %c0_80] : memref<9x4x128xf32, #tpu.memory_space<vmem>>, vector<1x4x128xf32>
    %88 = vector.shape_cast %87 : vector<1x4x128xf32> to vector<4x128xf32>
    %cst_81 = arith.constant dense<0.000000e+00> : vector<288x128xf32>
    %89 = tpu.matmul %86, %88, %cst_81 {dimension_numbers = #tpu.dot_dimension_numbers<[1], [0], [0], [1], [0, 0, 1, 1], [], []>} : vector<288x4xf32>, vector<4x128xf32>, vector<288x128xf32> -> vector<288x128xf32>
    %c0_82 = arith.constant 0 : index
    %c0_83 = arith.constant 0 : index
    %c0_84 = arith.constant 0 : index
    %90 = vector.load %arg5[%c0_82, %c0_83, %c0_84] : memref<1x288x128xf32, #tpu.memory_space<vmem>>, vector<1x288x128xf32>
    %91 = vector.shape_cast %90 : vector<1x288x128xf32> to vector<288x128xf32>
    %92 = arith.addf %91, %89 : vector<288x128xf32>
    %c0_85 = arith.constant 0 : index
    %c0_86 = arith.constant 0 : index
    %c0_87 = arith.constant 0 : index
    %93 = vector.load %arg5[%c0_85, %c0_86, %c0_87] : memref<1x288x128xf32, #tpu.memory_space<vmem>>, vector<1x288x128xf32>
    %94 = vector.shape_cast %93 : vector<1x288x128xf32> to vector<288x128xf32>
    %95 = vector.shape_cast %92 : vector<288x128xf32> to vector<1x288x128xf32>
    tpu.vector_store %arg5[%c0_85, %c0_86, %c0_87], %95 {strides = array<i32>} : memref<1x288x128xf32, #tpu.memory_space<vmem>>, vector<1x288x128xf32>,
    %c38 = arith.constant 38 : index
    %c0_88 = arith.constant 0 : index
    %96 = vector.load %arg6[%c38, %c0_88] : memref<326x4xf32, #tpu.memory_space<vmem>>, vector<288x4xf32>
    %c8 = arith.constant 8 : index
    %c0_89 = arith.constant 0 : index
    %c0_90 = arith.constant 0 : index
    %97 = vector.load %arg3[%c8, %c0_89, %c0_90] : memref<9x4x128xf32, #tpu.memory_space<vmem>>, vector<1x4x128xf32>
    %98 = vector.shape_cast %97 : vector<1x4x128xf32> to vector<4x128xf32>
    %cst_91 = arith.constant dense<0.000000e+00> : vector<288x128xf32>
    %99 = tpu.matmul %96, %98, %cst_91 {dimension_numbers = #tpu.dot_dimension_numbers<[1], [0], [0], [1], [0, 0, 1, 1], [], []>} : vector<288x4xf32>, vector<4x128xf32>, vector<288x128xf32> -> vector<288x128xf32>
    %c0_92 = arith.constant 0 : index
    %c0_93 = arith.constant 0 : index
    %c0_94 = arith.constant 0 : index
    %100 = vector.load %arg5[%c0_92, %c0_93, %c0_94] : memref<1x288x128xf32, #tpu.memory_space<vmem>>, vector<1x288x128xf32>
    %101 = vector.shape_cast %100 : vector<1x288x128xf32> to vector<288x128xf32>
    %102 = arith.addf %101, %99 : vector<288x128xf32>
    %c0_95 = arith.constant 0 : index
    %c0_96 = arith.constant 0 : index
    %c0_97 = arith.constant 0 : index
    %103 = vector.load %arg5[%c0_95, %c0_96, %c0_97] : memref<1x288x128xf32, #tpu.memory_space<vmem>>, vector<1x288x128xf32>
    %104 = vector.shape_cast %103 : vector<1x288x128xf32> to vector<288x128xf32>
    %105 = vector.shape_cast %102 : vector<288x128xf32> to vector<1x288x128xf32>
    tpu.vector_store %arg5[%c0_95, %c0_96, %c0_97], %105 {strides = array<i32>} : memref<1x288x128xf32, #tpu.memory_space<vmem>>, vector<1x288x128xf32>,
    %c0_98 = arith.constant 0 : index
    %c0_99 = arith.constant 0 : index
    %c0_100 = arith.constant 0 : index
    %106 = vector.load %arg5[%c0_98, %c0_99, %c0_100] : memref<1x288x128xf32, #tpu.memory_space<vmem>>, vector<1x288x128xf32>
    %107 = vector.shape_cast %106 : vector<1x288x128xf32> to vector<288x128xf32>
    %c0_101 = arith.constant 0 : index
    %c0_102 = arith.constant 0 : index
    %108 = vector.load %arg4[%c0_101, %c0_102] : memref<1x128xf32, #tpu.memory_space<vmem>>, vector<1x128xf32>
    %109 = vector.broadcast %108 : vector<1x128xf32> to vector<288x128xf32>
    %110 = arith.addf %107, %109 : vector<288x128xf32>
    %cst_103 = arith.constant 0.000000e+00 : f32
    %111 = vector.broadcast %cst_103 : f32 to vector<288x128xf32>
    %112 = arith.maximumf %110, %111 : vector<288x128xf32>
    %c0_104 = arith.constant 0 : index
    %c0_105 = arith.constant 0 : index
    %c0_106 = arith.constant 0 : index
    %113 = vector.load %arg5[%c0_104, %c0_105, %c0_106] : memref<1x288x128xf32, #tpu.memory_space<vmem>>, vector<1x288x128xf32>
    %114 = vector.shape_cast %113 : vector<1x288x128xf32> to vector<288x128xf32>
    %115 = vector.shape_cast %112 : vector<288x128xf32> to vector<1x288x128xf32>
    tpu.vector_store %arg5[%c0_104, %c0_105, %c0_106], %115 {strides = array<i32>} : memref<1x288x128xf32, #tpu.memory_space<vmem>>, vector<1x288x128xf32>,
    return
  }
  func.func @transform_0(%arg0: i32, %arg1: i32) -> (i32, i32, i32) {
    %c0_i32 = arith.constant 0 : i32
    %c0_i32_0 = arith.constant 0 : i32
    %c0_i32_1 = arith.constant 0 : i32
    return %arg0, %c0_i32, %c0_i32_0 : i32, i32, i32
  }
  func.func @transform_1(%arg0: i32, %arg1: i32) -> (i32, i32, i32) {
    %c0_i32 = arith.constant 0 : i32
    %c0_i32_0 = arith.constant 0 : i32
    %c0_i32_1 = arith.constant 0 : i32
    %c0_i32_2 = arith.constant 0 : i32
    return %c0_i32, %c0_i32_0, %c0_i32_1 : i32, i32, i32
  }
  func.func @transform_2(%arg0: i32, %arg1: i32) -> (i32, i32) {
    %c0_i32 = arith.constant 0 : i32
    %c0_i32_0 = arith.constant 0 : i32
    %c0_i32_1 = arith.constant 0 : i32
    return %c0_i32, %c0_i32_0 : i32, i32
  }
  func.func @transform_3(%arg0: i32, %arg1: i32) -> (i32, i32, i32) {
    %c0_i32 = arith.constant 0 : i32
    %c0_i32_0 = arith.constant 0 : i32
    return %arg0, %arg1, %c0_i32 : i32, i32, i32
  }
}

</mosaic_0001>

<llo_original>
// kernel: tpu_custom_call.1
$region0: #{tpu_custom_call.1}
  #allocation0 [shape = 'u32[]', space=smem, size = 0x4, offset = 0x4, fixed_abs, tag = 'smem constant byte address 0x4 - core index']
  #allocation1 [shape = 'u32[144,128]{1,0:T(1,128)}', space=vmem, size = 0x12000, scoped, tag = 'internal scratch']
  #allocation2 [shape = 'f32[326,4]{1,0:T(8,128)}', space=vmem, size = 0x29000, scoped, tag = 'scratch operand']
  %s0 = inlined_call_operand.vmem [shape: f32[2,342,4], index: 0, kind: input, shape index: {}]
  %s1 = inlined_call_operand.vmem [shape: f32[9,4,128], index: 1, kind: input, shape index: {}]
  %s2 = inlined_call_operand.vmem [shape: f32[1,128], index: 2, kind: input, shape index: {}]
  %s3 = inlined_call_operand.hbm [shape: f32[2,288,128], index: 3, kind: output, shape index: {}]
  %s4 = sld [smem:[#allocation0]]
  $region45: #{tpu_custom_call.1} parent=0
    _
  %s6 = ssub.s32 1, %s4
  %s7 = scalar_select 0, %s6, %s4
  $region1: #{tpu_custom_call.1} parent=0
    #allocation3 [shape = 'u8[294912]{0}', space=vmem, size = 0x48000, scoped, tag = 'output window, operand 0']
    #allocation4 [shape = 's32[2]{0}', space=sflag, size = 0x8, scoped, tag = 'scoped memory for tpu_custom_call.1']
    %8 = vsyncpa [#allocation4], 0
    %s9 = scalar_lea.sflag [#allocation4], 1
    %10 = vsyncpa %s9, 0
    loop: start=0, step=1, limit=4
    $region2: #{tpu_custom_call.1} parent=1 // loop_pre_header
      _
    $region3: #{tpu_custom_call.1} parent=1 // loop_header
      %s12 = sphi 0, %s16
      %p13 = scmp.ge.s32.totalorder %s12, 4
      %s19 = sphi 0, %s31
      %s20 = sphi 0, %s27
      %s21 = sphi 0, %s19
      %s22 = sphi 0, %s20
      %s23 = sphi 0, %s21
      %s24 = sphi 0, %s22
      %s34 = sphi 0, %s36
      %s37 = sphi 0, %s34
      %s38 = sphi 0, %s37
      %s54 = sphi 0, %s38
      %s58 = sphi 0, %s58
      %s60 = sphi 0, %s58
      %s61 = sphi 0, %s60
      %s75 = sphi 0, %s61
      %s79 = sphi 0, %s79
      %s81 = sphi 0, %s79
      %s82 = sphi 0, %s81
      %s96 = sphi 0, %s82
      %s104 = sphi 0, %s106
      %s107 = sphi 0, %s104
      %s108 = sphi 0, %s107
      %s124 = sphi 0, %s108
    $region4: #{tpu_custom_call.1} parent=1 // loop_header_branch
      %15 = sbr.rel (%p13) target = $region8
    $region5: #{tpu_custom_call.1} parent=1 // loop_body
      %s17 = ssub.s32 %s12, 1
      %s18 = ssub.s32 %s12, 2
      %s25 = sadd.s32 1, %s20
      %p26 = scmp.ge.s32.totalorder %s25, 1
      %s27 = scalar_select %p26, 0, %s25
      %s28 = sadd.s32 1, %s19
      %s29 = scalar_select %p26, %s28, %s19
      %p30 = scmp.ge.s32.totalorder %s29, 2
      %s31 = scalar_select %p30, 0, %s29
      %s32 = ssub.s32 %s19, %s31
      %p33 = scmp.eq.s32.totalorder %s32, 0
      %s35 = sadd.s32 %s34, 1
      %s36 = scalar_select %p33, %s34, %s35
      %p39 = pneg %p33
      %p40 = scmp.eq.s32.totalorder %s12, 1
      %p41 = por %p39, %p40
      %p42 = scmp.ne.s32.totalorder %s34, %s37
      %p43 = scmp.eq.s32.totalorder %s12, 0
      %p44 = por %p42, %p43
      %p45 = scmp.ne.s32.totalorder %s34, %s37
      %p46 = scmp.eq.s32.totalorder %s17, 1
      %p47 = por %p45, %p46
      %p48 = scmp.ne.s32.totalorder %s37, %s38
      %p49 = scmp.eq.s32.totalorder %s17, 0
      %p50 = por %p48, %p49
      %p51 = scmp.ne.s32.totalorder %s37, %s38
      %p52 = scmp.eq.s32.totalorder %s18, 1
      %p53 = por %p51, %p52
      %p55 = scmp.ne.s32.totalorder %s38, %s54
      %p56 = scmp.eq.s32.totalorder %s18, 0
      %p57 = por %p55, %p56
      %s59 = sadd.s32 %s58, 1
      %p62 = scmp.eq.s32.totalorder %s12, 1
      %p63 = scmp.ne.s32.totalorder %s58, %s60
      %p64 = scmp.eq.s32.totalorder %s12, 0
      %p65 = por %p63, %p64
      %p66 = scmp.ne.s32.totalorder %s58, %s60
      %p67 = scmp.eq.s32.totalorder %s17, 1
      %p68 = por %p66, %p67
      %p69 = scmp.ne.s32.totalorder %s60, %s61
      %p70 = scmp.eq.s32.totalorder %s17, 0
      %p71 = por %p69, %p70
      %p72 = scmp.ne.s32.totalorder %s60, %s61
      %p73 = scmp.eq.s32.totalorder %s18, 1
      %p74 = por %p72, %p73
      %p76 = scmp.ne.s32.totalorder %s61, %s75
      %p77 = scmp.eq.s32.totalorder %s18, 0
      %p78 = por %p76, %p77
      %s80 = sadd.s32 %s79, 1
      %p83 = scmp.eq.s32.totalorder %s12, 1
      %p84 = scmp.ne.s32.totalorder %s79, %s81
      %p85 = scmp.eq.s32.totalorder %s12, 0
      %p86 = por %p84, %p85
      %p87 = scmp.ne.s32.totalorder %s79, %s81
      %p88 = scmp.eq.s32.totalorder %s17, 1
      %p89 = por %p87, %p88
      %p90 = scmp.ne.s32.totalorder %s81, %s82
      %p91 = scmp.eq.s32.totalorder %s17, 0
      %p92 = por %p90, %p91
      %p93 = scmp.ne.s32.totalorder %s81, %s82
      %p94 = scmp.eq.s32.totalorder %s18, 1
      %p95 = por %p93, %p94
      %p97 = scmp.ne.s32.totalorder %s82, %s96
      %p98 = scmp.eq.s32.totalorder %s18, 0
      %p99 = por %p97, %p98
      %s100 = ssub.s32 %s19, %s31
      %s101 = ssub.s32 %s20, %s27
      %s102 = sor.u32 %s100, %s101
      %p103 = scmp.eq.s32.totalorder %s102, 0
      %s105 = sadd.s32 %s104, 1
      %s106 = scalar_select %p103, %s104, %s105
      %p109 = pneg %p103
      %p110 = scmp.eq.s32.totalorder %s12, 1
      %p111 = por %p109, %p110
      %p112 = scmp.ne.s32.totalorder %s104, %s107
      %p113 = scmp.eq.s32.totalorder %s12, 0
      %p114 = por %p112, %p113
      %p115 = scmp.ne.s32.totalorder %s104, %s107
      %p116 = scmp.eq.s32.totalorder %s17, 1
      %p117 = por %p115, %p116
      %p118 = scmp.ne.s32.totalorder %s107, %s108
      %p119 = scmp.eq.s32.totalorder %s17, 0
      %p120 = por %p118, %p119
      %p121 = scmp.ne.s32.totalorder %s107, %s108
      %p122 = scmp.eq.s32.totalorder %s18, 1
      %p123 = por %p121, %p122
      %p125 = scmp.ne.s32.totalorder %s108, %s124
      %p126 = scmp.eq.s32.totalorder %s18, 0
      %p127 = por %p125, %p126
      %p128 = scmp.le.s32.totalorder 1, %s12
      %p129 = scmp.lt.s32.totalorder %s12, 3
      %p130 = pnand %p128, %p129
      %p131 = pneg %p130
      // Predicated region
      $region9: #{tpu_custom_call.1} parent=5 // pred_check
        _
      $region10: #{tpu_custom_call.1} parent=5 // pred_check_branch
        %133 = sbr.rel (%p130) target = $region12
      $region11: #{tpu_custom_call.1} parent=5 // pred_region
        %s134 = ssub.s32 %s12, 1
        // Predicated region
        $region13: #{tpu_custom_call.1} parent=11 // pred_check
          %p135 = pneg %p71
        $region14: #{tpu_custom_call.1} parent=11 // pred_check_branch
          %137 = sbr.rel (%p135) target = $region16
        $region15: #{tpu_custom_call.1} parent=11 // pred_region
          _
        $region16: #{tpu_custom_call.1} parent=11 // pred_fallthru
          _
        // Predicated region
        $region17: #{tpu_custom_call.1} parent=11 // pred_check
          %p138 = pneg %p92
        $region18: #{tpu_custom_call.1} parent=11 // pred_check_branch
          %140 = sbr.rel (%p138) target = $region20
        $region19: #{tpu_custom_call.1} parent=11 // pred_region
          _
        $region20: #{tpu_custom_call.1} parent=11 // pred_fallthru
          _
      $region12: #{tpu_custom_call.1} parent=5 // pred_fallthru
        _
      %p141 = scmp.lt.s32.totalorder %s12, 2
      // Predicated region
      $region21: #{tpu_custom_call.1} parent=5 // pred_check
        %p142 = pneg %p141
      $region22: #{tpu_custom_call.1} parent=5 // pred_check_branch
        %144 = sbr.rel (%p142) target = $region24
      $region23: #{tpu_custom_call.1} parent=5 // pred_region
        // Predicated region
        $region25: #{tpu_custom_call.1} parent=23 // pred_check
          %p145 = pneg %p44
        $region26: #{tpu_custom_call.1} parent=23 // pred_check_branch
          %147 = sbr.rel (%p145) target = $region28
        $region27: #{tpu_custom_call.1} parent=23 // pred_region
          %p148 = scmp.lt.s32.totalorder %s19, 1
          %s149 = scalar_select %p148, %s19, 1
          %s150 = smul.addr %s149, 43
          %s151 = smul.addr %s150, 8
          %s152 = scalar_lea.vmem %s0, %s151
        $region28: #{tpu_custom_call.1} parent=23 // pred_fallthru
          _
      $region24: #{tpu_custom_call.1} parent=5 // pred_fallthru
        _
      %p153 = scmp.le.s32.totalorder 1, %s12
      %p154 = scmp.lt.s32.totalorder %s12, 3
      %p155 = pnand %p153, %p154
      %p156 = pneg %p155
      // Predicated region
      $region29: #{tpu_custom_call.1} parent=5 // pred_check
        _
      $region30: #{tpu_custom_call.1} parent=5 // pred_check_branch
        %158 = sbr.rel (%p155) target = $region32
      $region31: #{tpu_custom_call.1} parent=5 // pred_region
        %s159 = ssub.s32 %s12, 1
        %p160 = scmp.lt.s32.totalorder %s21, 1
        %s161 = scalar_select %p160, %s21, 1
        %s162 = smul.addr %s161, 43
        %s163 = smul.addr %s162, 8
        %s164 = scalar_lea.vmem %s0, %s163
        %p165 = pneg %p50
        %p166 = pneg %p47
        %p167 = pneg %p71
        %p168 = pneg %p68
        %p169 = pneg %p92
        %p170 = pneg %p89
        %p171 = pneg %p120
        %p172 = pneg %p117
        %s173 = sand.u32 %s107, 1
        %s174 = scalar_lea.sflag [#allocation4], %s173
        %s175 = sand.u32 %s107, 1
        %s176 = smul.addr %s175, 288
        %s177 = scalar_lea.vmem [#allocation3], %s176
        %p178 = scmp.lt.s32.totalorder %s21, 1
        %s179 = scalar_select %p178, %s21, 1
        %s180 = smul.addr %s179, 43
        %s181 = smul.addr %s180, 8
        %s182 = scalar_lea.vmem %s0, %s181
        %s183 = smul.u32 36, %s22
        %s184 = smul.u32 %s22, 288
        %s185 = scalar_lea.vmem %s182, %s184
        %v186 = vld [vmem:[%s185] sm:$0xff]
        %v187 = vld [vmem:[%s185 + $0x8] sm:$0xff]
        %v188 = vld [vmem:[%s185 + $0x10] sm:$0xff]
        %v189 = vld [vmem:[%s185 + $0x18] sm:$0xff]
        %v190 = vld [vmem:[%s185 + $0x20] sm:$0xff]
        %v191 = vld [vmem:[%s185 + $0x28] sm:$0xff]
        %v192 = vld [vmem:[%s185 + $0x30] sm:$0xff]
        %v193 = vld [vmem:[%s185 + $0x38] sm:$0xff]
        %v194 = vld [vmem:[%s185 + $0x40] sm:$0xff]
        %v195 = vld [vmem:[%s185 + $0x48] sm:$0xff]
        %v196 = vld [vmem:[%s185 + $0x50] sm:$0xff]
        %v197 = vld [vmem:[%s185 + $0x58] sm:$0xff]
        %v198 = vld [vmem:[%s185 + $0x60] sm:$0xff]
        %v199 = vld [vmem:[%s185 + $0x68] sm:$0xff]
        %v200 = vld [vmem:[%s185 + $0x70] sm:$0xff]
        %v201 = vld [vmem:[%s185 + $0x78] sm:$0xff]
        %v202 = vld [vmem:[%s185 + $0x80] sm:$0xff]
        %v203 = vld [vmem:[%s185 + $0x88] sm:$0xff]
        %v204 = vld [vmem:[%s185 + $0x90] sm:$0xff]
        %v205 = vld [vmem:[%s185 + $0x98] sm:$0xff]
        %v206 = vld [vmem:[%s185 + $0xa0] sm:$0xff]
        %v207 = vld [vmem:[%s185 + $0xa8] sm:$0xff]
        %v208 = vld [vmem:[%s185 + $0xb0] sm:$0xff]
        %v209 = vld [vmem:[%s185 + $0xb8] sm:$0xff]
        %v210 = vld [vmem:[%s185 + $0xc0] sm:$0xff]
        %v211 = vld [vmem:[%s185 + $0xc8] sm:$0xff]
        %v212 = vld [vmem:[%s185 + $0xd0] sm:$0xff]
        %v213 = vld [vmem:[%s185 + $0xd8] sm:$0xff]
        %v214 = vld [vmem:[%s185 + $0xe0] sm:$0xff]
        %v215 = vld [vmem:[%s185 + $0xe8] sm:$0xff]
        %v216 = vld [vmem:[%s185 + $0xf0] sm:$0xff]
        %v217 = vld [vmem:[%s185 + $0xf8] sm:$0xff]
        %v218 = vld [vmem:[%s185 + $0x100] sm:$0xff]
        %v219 = vld [vmem:[%s185 + $0x108] sm:$0xff]
        %v220 = vld [vmem:[%s185 + $0x110] sm:$0xff]
        %v221 = vld [vmem:[%s185 + $0x118] sm:$0xff]
        %v222 = vld [vmem:[%s185 + $0x120] sm:$0xff]
        %v223 = vld [vmem:[%s185 + $0x128] sm:$0xff]
        %v224 = vld [vmem:[%s185 + $0x130] sm:$0xff]
        %v225 = vld [vmem:[%s185 + $0x138] sm:$0xff]
        %v226 = vld [vmem:[%s185 + $0x140] sm:$0x3f]
        %v227 = vmul.f32 %v186, 32.0
        %v228 = vmul.f32 %v187, 32.0
        %v229 = vmul.f32 %v188, 32.0
        %v230 = vmul.f32 %v189, 32.0
        %v231 = vmul.f32 %v190, 32.0
        %v232 = vmul.f32 %v191, 32.0
        %v233 = vmul.f32 %v192, 32.0
        %v234 = vmul.f32 %v193, 32.0
        %v235 = vmul.f32 %v194, 32.0
        %v236 = vmul.f32 %v195, 32.0
        %v237 = vmul.f32 %v196, 32.0
        %v238 = vmul.f32 %v197, 32.0
        %v239 = vmul.f32 %v198, 32.0
        %v240 = vmul.f32 %v199, 32.0
        %v241 = vmul.f32 %v200, 32.0
        %v242 = vmul.f32 %v201, 32.0
        %v243 = vmul.f32 %v202, 32.0
        %v244 = vmul.f32 %v203, 32.0
        %v245 = vmul.f32 %v204, 32.0
        %v246 = vmul.f32 %v205, 32.0
        %v247 = vmul.f32 %v206, 32.0
        %v248 = vmul.f32 %v207, 32.0
        %v249 = vmul.f32 %v208, 32.0
        %v250 = vmul.f32 %v209, 32.0
        %v251 = vmul.f32 %v210, 32.0
        %v252 = vmul.f32 %v211, 32.0
        %v253 = vmul.f32 %v212, 32.0
        %v254 = vmul.f32 %v213, 32.0
        %v255 = vmul.f32 %v214, 32.0
        %v256 = vmul.f32 %v215, 32.0
        %v257 = vmul.f32 %v216, 32.0
        %v258 = vmul.f32 %v217, 32.0
        %v259 = vmul.f32 %v218, 32.0
        %v260 = vmul.f32 %v219, 32.0
        %v261 = vmul.f32 %v220, 32.0
        %v262 = vmul.f32 %v221, 32.0
        %v263 = vmul.f32 %v222, 32.0
        %v264 = vmul.f32 %v223, 32.0
        %v265 = vmul.f32 %v224, 32.0
        %v266 = vmul.f32 %v225, 32.0
        %v267 = vmul.f32 %v226, 32.0
        %vm268 = vcmp.lt.f32.partialorder %v227, 0.0
        %vm269 = vcmp.lt.f32.partialorder %v228, 0.0
        %vm270 = vcmp.lt.f32.partialorder %v229, 0.0
        %vm271 = vcmp.lt.f32.partialorder %v230, 0.0
        %vm272 = vcmp.lt.f32.partialorder %v231, 0.0
        %vm273 = vcmp.lt.f32.partialorder %v232, 0.0
        %vm274 = vcmp.lt.f32.partialorder %v233, 0.0
        %vm275 = vcmp.lt.f32.partialorder %v234, 0.0
        %vm276 = vcmp.lt.f32.partialorder %v235, 0.0
        %vm277 = vcmp.lt.f32.partialorder %v236, 0.0
        %vm278 = vcmp.lt.f32.partialorder %v237, 0.0
        %vm279 = vcmp.lt.f32.partialorder %v238, 0.0
        %vm280 = vcmp.lt.f32.partialorder %v239, 0.0
        %vm281 = vcmp.lt.f32.partialorder %v240, 0.0
        %vm282 = vcmp.lt.f32.partialorder %v241, 0.0
        %vm283 = vcmp.lt.f32.partialorder %v242, 0.0
        %vm284 = vcmp.lt.f32.partialorder %v243, 0.0
        %vm285 = vcmp.lt.f32.partialorder %v244, 0.0
        %vm286 = vcmp.lt.f32.partialorder %v245, 0.0
        %vm287 = vcmp.lt.f32.partialorder %v246, 0.0
        %vm288 = vcmp.lt.f32.partialorder %v247, 0.0
        %vm289 = vcmp.lt.f32.partialorder %v248, 0.0
        %vm290 = vcmp.lt.f32.partialorder %v249, 0.0
        %vm291 = vcmp.lt.f32.partialorder %v250, 0.0
        %vm292 = vcmp.lt.f32.partialorder %v251, 0.0
        %vm293 = vcmp.lt.f32.partialorder %v252, 0.0
        %vm294 = vcmp.lt.f32.partialorder %v253, 0.0
        %vm295 = vcmp.lt.f32.partialorder %v254, 0.0
        %vm296 = vcmp.lt.f32.partialorder %v255, 0.0
        %vm297 = vcmp.lt.f32.partialorder %v256, 0.0
        %vm298 = vcmp.lt.f32.partialorder %v257, 0.0
        %vm299 = vcmp.lt.f32.partialorder %v258, 0.0
        %vm300 = vcmp.lt.f32.partialorder %v259, 0.0
        %vm301 = vcmp.lt.f32.partialorder %v260, 0.0
        %vm302 = vcmp.lt.f32.partialorder %v261, 0.0
        %vm303 = vcmp.lt.f32.partialorder %v262, 0.0
        %vm304 = vcmp.lt.f32.partialorder %v263, 0.0
        %vm305 = vcmp.lt.f32.partialorder %v264, 0.0
        %vm306 = vcmp.lt.f32.partialorder %v265, 0.0
        %vm307 = vcmp.lt.f32.partialorder %v266, 0.0
        %vm308 = vcmp.lt.f32.partialorder %v267, 0.0
        %v309 = vceil.f32 %v227
        %v310 = vceil.f32 %v228
        %v311 = vceil.f32 %v229
        %v312 = vceil.f32 %v230
        %v313 = vceil.f32 %v231
        %v314 = vceil.f32 %v232
        %v315 = vceil.f32 %v233
        %v316 = vceil.f32 %v234
        %v317 = vceil.f32 %v235
        %v318 = vceil.f32 %v236
        %v319 = vceil.f32 %v237
        %v320 = vceil.f32 %v238
        %v321 = vceil.f32 %v239
        %v322 = vceil.f32 %v240
        %v323 = vceil.f32 %v241
        %v324 = vceil.f32 %v242
        %v325 = vceil.f32 %v243
        %v326 = vceil.f32 %v244
        %v327 = vceil.f32 %v245
        %v328 = vceil.f32 %v246
        %v329 = vceil.f32 %v247
        %v330 = vceil.f32 %v248
        %v331 = vceil.f32 %v249
        %v332 = vceil.f32 %v250
        %v333 = vceil.f32 %v251
        %v334 = vceil.f32 %v252
        %v335 = vceil.f32 %v253
        %v336 = vceil.f32 %v254
        %v337 = vceil.f32 %v255
        %v338 = vceil.f32 %v256
        %v339 = vceil.f32 %v257
        %v340 = vceil.f32 %v258
        %v341 = vceil.f32 %v259
        %v342 = vceil.f32 %v260
        %v343 = vceil.f32 %v261
        %v344 = vceil.f32 %v262
        %v345 = vceil.f32 %v263
        %v346 = vceil.f32 %v264
        %v347 = vceil.f32 %v265
        %v348 = vceil.f32 %v266
        %v349 = vceil.f32 %v267
        %v350 = vfloor.f32 %v227
        %v351 = vfloor.f32 %v228
        %v352 = vfloor.f32 %v229
        %v353 = vfloor.f32 %v230
        %v354 = vfloor.f32 %v231
        %v355 = vfloor.f32 %v232
        %v356 = vfloor.f32 %v233
        %v357 = vfloor.f32 %v234
        %v358 = vfloor.f32 %v235
        %v359 = vfloor.f32 %v236
        %v360 = vfloor.f32 %v237
        %v361 = vfloor.f32 %v238
        %v362 = vfloor.f32 %v239
        %v363 = vfloor.f32 %v240
        %v364 = vfloor.f32 %v241
        %v365 = vfloor.f32 %v242
        %v366 = vfloor.f32 %v243
        %v367 = vfloor.f32 %v244
        %v368 = vfloor.f32 %v245
        %v369 = vfloor.f32 %v246
        %v370 = vfloor.f32 %v247
        %v371 = vfloor.f32 %v248
        %v372 = vfloor.f32 %v249
        %v373 = vfloor.f32 %v250
        %v374 = vfloor.f32 %v251
        %v375 = vfloor.f32 %v252
        %v376 = vfloor.f32 %v253
        %v377 = vfloor.f32 %v254
        %v378 = vfloor.f32 %v255
        %v379 = vfloor.f32 %v256
        %v380 = vfloor.f32 %v257
        %v381 = vfloor.f32 %v258
        %v382 = vfloor.f32 %v259
        %v383 = vfloor.f32 %v260
        %v384 = vfloor.f32 %v261
        %v385 = vfloor.f32 %v262
        %v386 = vfloor.f32 %v263
        %v387 = vfloor.f32 %v264
        %v388 = vfloor.f32 %v265
        %v389 = vfloor.f32 %v266
        %v390 = vfloor.f32 %v267
        %v391 = vsel %vm268, %v309, %v350
        %v392 = vsel %vm269, %v310, %v351
        %v393 = vsel %vm270, %v311, %v352
        %v394 = vsel %vm271, %v312, %v353
        %v395 = vsel %vm272, %v313, %v354
        %v396 = vsel %vm273, %v314, %v355
        %v397 = vsel %vm274, %v315, %v356
        %v398 = vsel %vm275, %v316, %v357
        %v399 = vsel %vm276, %v317, %v358
        %v400 = vsel %vm277, %v318, %v359
        %v401 = vsel %vm278, %v319, %v360
        %v402 = vsel %vm279, %v320, %v361
        %v403 = vsel %vm280, %v321, %v362
        %v404 = vsel %vm281, %v322, %v363
        %v405 = vsel %vm282, %v323, %v364
        %v406 = vsel %vm283, %v324, %v365
        %v407 = vsel %vm284, %v325, %v366
        %v408 = vsel %vm285, %v326, %v367
        %v409 = vsel %vm286, %v327, %v368
        %v410 = vsel %vm287, %v328, %v369
        %v411 = vsel %vm288, %v329, %v370
        %v412 = vsel %vm289, %v330, %v371
        %v413 = vsel %vm290, %v331, %v372
        %v414 = vsel %vm291, %v332, %v373
        %v415 = vsel %vm292, %v333, %v374
        %v416 = vsel %vm293, %v334, %v375
        %v417 = vsel %vm294, %v335, %v376
        %v418 = vsel %vm295, %v336, %v377
        %v419 = vsel %vm296, %v337, %v378
        %v420 = vsel %vm297, %v338, %v379
        %v421 = vsel %vm298, %v339, %v380
        %v422 = vsel %vm299, %v340, %v381
        %v423 = vsel %vm300, %v341, %v382
        %v424 = vsel %vm301, %v342, %v383
        %v425 = vsel %vm302, %v343, %v384
        %v426 = vsel %vm303, %v344, %v385
        %v427 = vsel %vm304, %v345, %v386
        %v428 = vsel %vm305, %v346, %v387
        %v429 = vsel %vm306, %v347, %v388
        %v430 = vsel %vm307, %v348, %v389
        %v431 = vsel %vm308, %v349, %v390
        %v432 = vmul.f32 %v391, 0.03125
        %v433 = vmul.f32 %v392, 0.03125
        %v434 = vmul.f32 %v393, 0.03125
        %v435 = vmul.f32 %v394, 0.03125
        %v436 = vmul.f32 %v395, 0.03125
        %v437 = vmul.f32 %v396, 0.03125
        %v438 = vmul.f32 %v397, 0.03125
        %v439 = vmul.f32 %v398, 0.03125
        %v440 = vmul.f32 %v399, 0.03125
        %v441 = vmul.f32 %v400, 0.03125
        %v442 = vmul.f32 %v401, 0.03125
        %v443 = vmul.f32 %v402, 0.03125
        %v444 = vmul.f32 %v403, 0.03125
        %v445 = vmul.f32 %v404, 0.03125
        %v446 = vmul.f32 %v405, 0.03125
        %v447 = vmul.f32 %v406, 0.03125
        %v448 = vmul.f32 %v407, 0.03125
        %v449 = vmul.f32 %v408, 0.03125
        %v450 = vmul.f32 %v409, 0.03125
        %v451 = vmul.f32 %v410, 0.03125
        %v452 = vmul.f32 %v411, 0.03125
        %v453 = vmul.f32 %v412, 0.03125
        %v454 = vmul.f32 %v413, 0.03125
        %v455 = vmul.f32 %v414, 0.03125
        %v456 = vmul.f32 %v415, 0.03125
        %v457 = vmul.f32 %v416, 0.03125
        %v458 = vmul.f32 %v417, 0.03125
        %v459 = vmul.f32 %v418, 0.03125
        %v460 = vmul.f32 %v419, 0.03125
        %v461 = vmul.f32 %v420, 0.03125
        %v462 = vmul.f32 %v421, 0.03125
        %v463 = vmul.f32 %v422, 0.03125
        %v464 = vmul.f32 %v423, 0.03125
        %v465 = vmul.f32 %v424, 0.03125
        %v466 = vmul.f32 %v425, 0.03125
        %v467 = vmul.f32 %v426, 0.03125
        %v468 = vmul.f32 %v427, 0.03125
        %v469 = vmul.f32 %v428, 0.03125
        %v470 = vmul.f32 %v429, 0.03125
        %v471 = vmul.f32 %v430, 0.03125
        %v472 = vmul.f32 %v431, 0.03125
        %v473 = vmax.f32 %v432, -4.0
        %v474 = vmax.f32 %v433, -4.0
        %v475 = vmax.f32 %v434, -4.0
        %v476 = vmax.f32 %v435, -4.0
        %v477 = vmax.f32 %v436, -4.0
        %v478 = vmax.f32 %v437, -4.0
        %v479 = vmax.f32 %v438, -4.0
        %v480 = vmax.f32 %v439, -4.0
        %v481 = vmax.f32 %v440, -4.0
        %v482 = vmax.f32 %v441, -4.0
        %v483 = vmax.f32 %v442, -4.0
        %v484 = vmax.f32 %v443, -4.0
        %v485 = vmax.f32 %v444, -4.0
        %v486 = vmax.f32 %v445, -4.0
        %v487 = vmax.f32 %v446, -4.0
        %v488 = vmax.f32 %v447, -4.0
        %v489 = vmax.f32 %v448, -4.0
        %v490 = vmax.f32 %v449, -4.0
        %v491 = vmax.f32 %v450, -4.0
        %v492 = vmax.f32 %v451, -4.0
        %v493 = vmax.f32 %v452, -4.0
        %v494 = vmax.f32 %v453, -4.0
        %v495 = vmax.f32 %v454, -4.0
        %v496 = vmax.f32 %v455, -4.0
        %v497 = vmax.f32 %v456, -4.0
        %v498 = vmax.f32 %v457, -4.0
        %v499 = vmax.f32 %v458, -4.0
        %v500 = vmax.f32 %v459, -4.0
        %v501 = vmax.f32 %v460, -4.0
        %v502 = vmax.f32 %v461, -4.0
        %v503 = vmax.f32 %v462, -4.0
        %v504 = vmax.f32 %v463, -4.0
        %v505 = vmax.f32 %v464, -4.0
        %v506 = vmax.f32 %v465, -4.0
        %v507 = vmax.f32 %v466, -4.0
        %v508 = vmax.f32 %v467, -4.0
        %v509 = vmax.f32 %v468, -4.0
        %v510 = vmax.f32 %v469, -4.0
        %v511 = vmax.f32 %v470, -4.0
        %v512 = vmax.f32 %v471, -4.0
        %v513 = vmax.f32 %v472, -4.0
        %v514 = vmin.f32 %v473, 3.96875
        %v515 = vmin.f32 %v474, 3.96875
        %v516 = vmin.f32 %v475, 3.96875
        %v517 = vmin.f32 %v476, 3.96875
        %v518 = vmin.f32 %v477, 3.96875
        %v519 = vmin.f32 %v478, 3.96875
        %v520 = vmin.f32 %v479, 3.96875
        %v521 = vmin.f32 %v480, 3.96875
        %v522 = vmin.f32 %v481, 3.96875
        %v523 = vmin.f32 %v482, 3.96875
        %v524 = vmin.f32 %v483, 3.96875
        %v525 = vmin.f32 %v484, 3.96875
        %v526 = vmin.f32 %v485, 3.96875
        %v527 = vmin.f32 %v486, 3.96875
        %v528 = vmin.f32 %v487, 3.96875
        %v529 = vmin.f32 %v488, 3.96875
        %v530 = vmin.f32 %v489, 3.96875
        %v531 = vmin.f32 %v490, 3.96875
        %v532 = vmin.f32 %v491, 3.96875
        %v533 = vmin.f32 %v492, 3.96875
        %v534 = vmin.f32 %v493, 3.96875
        %v535 = vmin.f32 %v494, 3.96875
        %v536 = vmin.f32 %v495, 3.96875
        %v537 = vmin.f32 %v496, 3.96875
        %v538 = vmin.f32 %v497, 3.96875
        %v539 = vmin.f32 %v498, 3.96875
        %v540 = vmin.f32 %v499, 3.96875
        %v541 = vmin.f32 %v500, 3.96875
        %v542 = vmin.f32 %v501, 3.96875
        %v543 = vmin.f32 %v502, 3.96875
        %v544 = vmin.f32 %v503, 3.96875
        %v545 = vmin.f32 %v504, 3.96875
        %v546 = vmin.f32 %v505, 3.96875
        %v547 = vmin.f32 %v506, 3.96875
        %v548 = vmin.f32 %v507, 3.96875
        %v549 = vmin.f32 %v508, 3.96875
        %v550 = vmin.f32 %v509, 3.96875
        %v551 = vmin.f32 %v510, 3.96875
        %v552 = vmin.f32 %v511, 3.96875
        %v553 = vmin.f32 %v512, 3.96875
        %v554 = vmin.f32 %v513, 3.96875
        %vm555 = vcmask 31744
        %556 = vst.msk [vmem:[#allocation2] sm:$0xff] %vm555, %v514
        %557 = vst.msk [vmem:[#allocation2 + $0x8] sm:$0xff] %vm555, %v515
        %558 = vst.msk [vmem:[#allocation2 + $0x10] sm:$0xff] %vm555, %v516
        %559 = vst.msk [vmem:[#allocation2 + $0x18] sm:$0xff] %vm555, %v517
        %560 = vst.msk [vmem:[#allocation2 + $0x20] sm:$0xff] %vm555, %v518
        %561 = vst.msk [vmem:[#allocation2 + $0x28] sm:$0xff] %vm555, %v519
        %562 = vst.msk [vmem:[#allocation2 + $0x30] sm:$0xff] %vm555, %v520
        %563 = vst.msk [vmem:[#allocation2 + $0x38] sm:$0xff] %vm555, %v521
        %564 = vst.msk [vmem:[#allocation2 + $0x40] sm:$0xff] %vm555, %v522
        %565 = vst.msk [vmem:[#allocation2 + $0x48] sm:$0xff] %vm555, %v523
        %566 = vst.msk [vmem:[#allocation2 + $0x50] sm:$0xff] %vm555, %v524
        %567 = vst.msk [vmem:[#allocation2 + $0x58] sm:$0xff] %vm555, %v525
        %568 = vst.msk [vmem:[#allocation2 + $0x60] sm:$0xff] %vm555, %v526
        %569 = vst.msk [vmem:[#allocation2 + $0x68] sm:$0xff] %vm555, %v527
        %570 = vst.msk [vmem:[#allocation2 + $0x70] sm:$0xff] %vm555, %v528
        %571 = vst.msk [vmem:[#allocation2 + $0x78] sm:$0xff] %vm555, %v529
        %572 = vst.msk [vmem:[#allocation2 + $0x80] sm:$0xff] %vm555, %v530
        %573 = vst.msk [vmem:[#allocation2 + $0x88] sm:$0xff] %vm555, %v531
        %574 = vst.msk [vmem:[#allocation2 + $0x90] sm:$0xff] %vm555, %v532
        %575 = vst.msk [vmem:[#allocation2 + $0x98] sm:$0xff] %vm555, %v533
        %576 = vst.msk [vmem:[#allocation2 + $0xa0] sm:$0xff] %vm555, %v534
        %577 = vst.msk [vmem:[#allocation2 + $0xa8] sm:$0xff] %vm555, %v535
        %578 = vst.msk [vmem:[#allocation2 + $0xb0] sm:$0xff] %vm555, %v536
        %579 = vst.msk [vmem:[#allocation2 + $0xb8] sm:$0xff] %vm555, %v537
        %580 = vst.msk [vmem:[#allocation2 + $0xc0] sm:$0xff] %vm555, %v538
        %581 = vst.msk [vmem:[#allocation2 + $0xc8] sm:$0xff] %vm555, %v539
        %582 = vst.msk [vmem:[#allocation2 + $0xd0] sm:$0xff] %vm555, %v540
        %583 = vst.msk [vmem:[#allocation2 + $0xd8] sm:$0xff] %vm555, %v541
        %584 = vst.msk [vmem:[#allocation2 + $0xe0] sm:$0xff] %vm555, %v542
        %585 = vst.msk [vmem:[#allocation2 + $0xe8] sm:$0xff] %vm555, %v543
        %586 = vst.msk [vmem:[#allocation2 + $0xf0] sm:$0xff] %vm555, %v544
        %587 = vst.msk [vmem:[#allocation2 + $0xf8] sm:$0xff] %vm555, %v545
        %588 = vst.msk [vmem:[#allocation2 + $0x100] sm:$0xff] %vm555, %v546
        %589 = vst.msk [vmem:[#allocation2 + $0x108] sm:$0xff] %vm555, %v547
        %590 = vst.msk [vmem:[#allocation2 + $0x110] sm:$0xff] %vm555, %v548
        %591 = vst.msk [vmem:[#allocation2 + $0x118] sm:$0xff] %vm555, %v549
        %592 = vst.msk [vmem:[#allocation2 + $0x120] sm:$0xff] %vm555, %v550
        %593 = vst.msk [vmem:[#allocation2 + $0x128] sm:$0xff] %vm555, %v551
        %594 = vst.msk [vmem:[#allocation2 + $0x130] sm:$0xff] %vm555, %v552
        %595 = vst.msk [vmem:[#allocation2 + $0x138] sm:$0xff] %vm555, %v553
        %vm596 = vcmask 29696
        %597 = vst.msk [vmem:[#allocation2 + $0x140] sm:$0x3f] %vm596, %v554
        %v598 = vld [vmem:[#allocation2] sm:$0xff]
        %v599 = vld [vmem:[#allocation2 + $0x8] sm:$0xff]
        %v600 = vld [vmem:[#allocation2 + $0x10] sm:$0xff]
        %v601 = vld [vmem:[#allocation2 + $0x18] sm:$0xff]
        %v602 = vld [vmem:[#allocation2 + $0x20] sm:$0xff]
        %v603 = vld [vmem:[#allocation2 + $0x28] sm:$0xff]
        %v604 = vld [vmem:[#allocation2 + $0x30] sm:$0xff]
        %v605 = vld [vmem:[#allocation2 + $0x38] sm:$0xff]
        %v606 = vld [vmem:[#allocation2 + $0x40] sm:$0xff]
        %v607 = vld [vmem:[#allocation2 + $0x48] sm:$0xff]
        %v608 = vld [vmem:[#allocation2 + $0x50] sm:$0xff]
        %v609 = vld [vmem:[#allocation2 + $0x58] sm:$0xff]
        %v610 = vld [vmem:[#allocation2 + $0x60] sm:$0xff]
        %v611 = vld [vmem:[#allocation2 + $0x68] sm:$0xff]
        %v612 = vld [vmem:[#allocation2 + $0x70] sm:$0xff]
        %v613 = vld [vmem:[#allocation2 + $0x78] sm:$0xff]
        %v614 = vld [vmem:[#allocation2 + $0x80] sm:$0xff]
        %v615 = vld [vmem:[#allocation2 + $0x88] sm:$0xff]
        %v616 = vld [vmem:[#allocation2 + $0x90] sm:$0xff]
        %v617 = vld [vmem:[#allocation2 + $0x98] sm:$0xff]
        %v618 = vld [vmem:[#allocation2 + $0xa0] sm:$0xff]
        %v619 = vld [vmem:[#allocation2 + $0xa8] sm:$0xff]
        %v620 = vld [vmem:[#allocation2 + $0xb0] sm:$0xff]
        %v621 = vld [vmem:[#allocation2 + $0xb8] sm:$0xff]
        %v622 = vld [vmem:[#allocation2 + $0xc0] sm:$0xff]
        %v623 = vld [vmem:[#allocation2 + $0xc8] sm:$0xff]
        %v624 = vld [vmem:[#allocation2 + $0xd0] sm:$0xff]
        %v625 = vld [vmem:[#allocation2 + $0xd8] sm:$0xff]
        %v626 = vld [vmem:[#allocation2 + $0xe0] sm:$0xff]
        %v627 = vld [vmem:[#allocation2 + $0xe8] sm:$0xff]
        %v628 = vld [vmem:[#allocation2 + $0xf0] sm:$0xff]
        %v629 = vld [vmem:[#allocation2 + $0xf8] sm:$0xff]
        %v630 = vld [vmem:[#allocation2 + $0x100] sm:$0xff]
        %v631 = vld [vmem:[#allocation2 + $0x108] sm:$0xff]
        %v632 = vld [vmem:[#allocation2 + $0x110] sm:$0xff]
        %v633 = vld [vmem:[#allocation2 + $0x118] sm:$0xff]
        %v634 = vld [vmem:[%s1] sm:$0xf]
        %v636 = vsel %vm555, %v598, 0
        %v639 = vsel %vm555, %v599, 0
        %v642 = vsel %vm555, %v600, 0
        %v645 = vsel %vm555, %v601, 0
        %v648 = vsel %vm555, %v602, 0
        %v651 = vsel %vm555, %v603, 0
        %v654 = vsel %vm555, %v604, 0
        %v657 = vsel %vm555, %v605, 0
        %v660 = vsel %vm555, %v606, 0
        %v663 = vsel %vm555, %v607, 0
        %v666 = vsel %vm555, %v608, 0
        %v669 = vsel %vm555, %v609, 0
        %v672 = vsel %vm555, %v610, 0
        %v675 = vsel %vm555, %v611, 0
        %v678 = vsel %vm555, %v612, 0
        %v681 = vsel %vm555, %v613, 0
        %v684 = vsel %vm555, %v614, 0
        %v687 = vsel %vm555, %v615, 0
        %v690 = vsel %vm555, %v616, 0
        %v693 = vsel %vm555, %v617, 0
        %v696 = vsel %vm555, %v618, 0
        %v699 = vsel %vm555, %v619, 0
        %v702 = vsel %vm555, %v620, 0
        %v705 = vsel %vm555, %v621, 0
        %v708 = vsel %vm555, %v622, 0
        %v711 = vsel %vm555, %v623, 0
        %v714 = vsel %vm555, %v624, 0
        %v717 = vsel %vm555, %v625, 0
        %v720 = vsel %vm555, %v626, 0
        %v723 = vsel %vm555, %v627, 0
        %v726 = vsel %vm555, %v628, 0
        %v729 = vsel %vm555, %v629, 0
        %v732 = vsel %vm555, %v630, 0
        %v735 = vsel %vm555, %v631, 0
        %v738 = vsel %vm555, %v632, 0
        %v741 = vsel %vm555, %v633, 0
        %vm743 = vcmask 1043456
        %v745 = vsel %vm743, %v634, 0
        %747 = vmatprep.subr.mxu0 0.0
        %748 = vmatpush1.msra.mxu0 0.0
        %749 = vmatprep.subr.mxu0 0.0
        %750 = vmatpush1.msra.mxu0 0.0
        %751 = vmatprep.subr.mxu0 0.0
        %752 = vmatpush1.msra.mxu0 0.0
        %753 = vmatprep.subr.mxu0 0.0
        %754 = vmatpush1.msra.mxu0 0.0
        %755 = vmatprep.subr.mxu0 0.0
        %756 = vmatpush1.msra.mxu0 0.0
        %757 = vmatprep.subr.mxu0 0.0
        %758 = vmatpush1.msra.mxu0 0.0
        %759 = vmatprep.subr.mxu0 0.0
        %760 = vmatpush1.msra.mxu0 0.0
        %761 = vmatprep.subr.mxu0 0.0
        %762 = vmatpush1.msra.mxu0 0.0
        %763 = vmatprep.subr.mxu0 0.0
        %764 = vmatpush1.msra.mxu0 0.0
        %765 = vmatprep.subr.mxu0 0.0
        %766 = vmatpush1.msra.mxu0 0.0
        %767 = vmatprep.subr.mxu0 0.0
        %768 = vmatpush1.msra.mxu0 0.0
        %769 = vmatprep.subr.mxu0 0.0
        %770 = vmatpush1.msra.mxu0 0.0
        %771 = vmatprep.subr.mxu0 0.0
        %772 = vmatpush1.msra.mxu0 0.0
        %773 = vmatprep.subr.mxu0 0.0
        %774 = vmatpush1.msra.mxu0 0.0
        %775 = vmatprep.subr.mxu0 0.0
        %776 = vmatpush1.msra.mxu0 0.0
        %777 = vmatprep.subr.mxu0 0.0
        %778 = vmatpush1.msra.mxu0 %v745
        %779 = vmatprep.subr.mxu0 0.0
        %780 = vmatpush2.msra.mxu0 0.0
        %781 = vmatprep.subr.mxu0 0.0
        %782 = vmatpush2.msra.mxu0 0.0
        %783 = vmatprep.subr.mxu0 0.0
        %784 = vmatpush2.msra.mxu0 0.0
        %785 = vmatprep.subr.mxu0 0.0
        %786 = vmatpush2.msra.mxu0 0.0
        %787 = vmatprep.subr.mxu0 0.0
        %788 = vmatpush2.msra.mxu0 0.0
        %789 = vmatprep.subr.mxu0 0.0
        %790 = vmatpush2.msra.mxu0 0.0
        %791 = vmatprep.subr.mxu0 0.0
        %792 = vmatpush2.msra.mxu0 0.0
        %793 = vmatprep.subr.mxu0 0.0
        %794 = vmatpush2.msra.mxu0 0.0
        %795 = vmatprep.subr.mxu0 0.0
        %796 = vmatpush2.msra.mxu0 0.0
        %797 = vmatprep.subr.mxu0 0.0
        %798 = vmatpush2.msra.mxu0 0.0
        %799 = vmatprep.subr.mxu0 0.0
        %800 = vmatpush2.msra.mxu0 0.0
        %801 = vmatprep.subr.mxu0 0.0
        %802 = vmatpush2.msra.mxu0 0.0
        %803 = vmatprep.subr.mxu0 0.0
        %804 = vmatpush2.msra.mxu0 0.0
        %805 = vmatprep.subr.mxu0 0.0
        %806 = vmatpush2.msra.mxu0 0.0
        %807 = vmatprep.subr.mxu0 0.0
        %808 = vmatpush2.msra.mxu0 0.0
        %809 = vmatprep.subr.mxu0 0.0
        %810 = vmatpush2.msra.mxu0 0.0
        %811 = vmatprep.mubr.f32.mxu0 0.0
        %812 = vmatmul.mubr.f32.gmra.mxu0 %v636
        %v813 = vpop.f32.mrf.mxu0
        %v814 = vadd.f32 0.0, %v813
        %v815 = vpop.f32.mrf.mxu0
        %816 = vmatprep.mubr.f32.mxu0 0.0
        %817 = vmatmul.mubr.f32.gmra.mxu0 %v639
        %v818 = vpop.f32.mrf.mxu0
        %v819 = vadd.f32 0.0, %v818
        %v820 = vpop.f32.mrf.mxu0
        %821 = vmatprep.mubr.f32.mxu0 0.0
        %822 = vmatmul.mubr.f32.gmra.mxu0 %v642
        %v823 = vpop.f32.mrf.mxu0
        %v824 = vadd.f32 0.0, %v823
        %v825 = vpop.f32.mrf.mxu0
        %826 = vmatprep.mubr.f32.mxu0 0.0
        %827 = vmatmul.mubr.f32.gmra.mxu0 %v645
        %v828 = vpop.f32.mrf.mxu0
        %v829 = vadd.f32 0.0, %v828
        %v830 = vpop.f32.mrf.mxu0
        %831 = vmatprep.mubr.f32.mxu0 0.0
        %832 = vmatmul.mubr.f32.gmra.mxu0 %v648
        %v833 = vpop.f32.mrf.mxu0
        %v834 = vadd.f32 0.0, %v833
        %v835 = vpop.f32.mrf.mxu0
        %836 = vmatprep.mubr.f32.mxu0 0.0
        %837 = vmatmul.mubr.f32.gmra.mxu0 %v651
        %v838 = vpop.f32.mrf.mxu0
        %v839 = vadd.f32 0.0, %v838
        %v840 = vpop.f32.mrf.mxu0
        %841 = vmatprep.mubr.f32.mxu0 0.0
        %842 = vmatmul.mubr.f32.gmra.mxu0 %v654
        %v843 = vpop.f32.mrf.mxu0
        %v844 = vadd.f32 0.0, %v843
        %v845 = vpop.f32.mrf.mxu0
        %846 = vmatprep.mubr.f32.mxu0 0.0
        %847 = vmatmul.mubr.f32.gmra.mxu0 %v657
        %v848 = vpop.f32.mrf.mxu0
        %v849 = vadd.f32 0.0, %v848
        %v850 = vpop.f32.mrf.mxu0
        %851 = vmatprep.mubr.f32.mxu0 0.0
        %852 = vmatmul.mubr.f32.gmra.mxu0 %v660
        %v853 = vpop.f32.mrf.mxu0
        %v854 = vadd.f32 0.0, %v853
        %v855 = vpop.f32.mrf.mxu0
        %856 = vmatprep.mubr.f32.mxu0 0.0
        %857 = vmatmul.mubr.f32.gmra.mxu0 %v663
        %v858 = vpop.f32.mrf.mxu0
        %v859 = vadd.f32 0.0, %v858
        %v860 = vpop.f32.mrf.mxu0
        %861 = vmatprep.mubr.f32.mxu0 0.0
        %862 = vmatmul.mubr.f32.gmra.mxu0 %v666
        %v863 = vpop.f32.mrf.mxu0
        %v864 = vadd.f32 0.0, %v863
        %v865 = vpop.f32.mrf.mxu0
        %866 = vmatprep.mubr.f32.mxu0 0.0
        %867 = vmatmul.mubr.f32.gmra.mxu0 %v669
        %v868 = vpop.f32.mrf.mxu0
        %v869 = vadd.f32 0.0, %v868
        %v870 = vpop.f32.mrf.mxu0
        %871 = vmatprep.mubr.f32.mxu0 0.0
        %872 = vmatmul.mubr.f32.gmra.mxu0 %v672
        %v873 = vpop.f32.mrf.mxu0
        %v874 = vadd.f32 0.0, %v873
        %v875 = vpop.f32.mrf.mxu0
        %876 = vmatprep.mubr.f32.mxu0 0.0
        %877 = vmatmul.mubr.f32.gmra.mxu0 %v675
        %v878 = vpop.f32.mrf.mxu0
        %v879 = vadd.f32 0.0, %v878
        %v880 = vpop.f32.mrf.mxu0
        %881 = vmatprep.mubr.f32.mxu0 0.0
        %882 = vmatmul.mubr.f32.gmra.mxu0 %v678
        %v883 = vpop.f32.mrf.mxu0
        %v884 = vadd.f32 0.0, %v883
        %v885 = vpop.f32.mrf.mxu0
        %886 = vmatprep.mubr.f32.mxu0 0.0
        %887 = vmatmul.mubr.f32.gmra.mxu0 %v681
        %v888 = vpop.f32.mrf.mxu0
        %v889 = vadd.f32 0.0, %v888
        %v890 = vpop.f32.mrf.mxu0
        %891 = vmatprep.mubr.f32.mxu0 0.0
        %892 = vmatmul.mubr.f32.gmra.mxu0 %v684
        %v893 = vpop.f32.mrf.mxu0
        %v894 = vadd.f32 0.0, %v893
        %v895 = vpop.f32.mrf.mxu0
        %896 = vmatprep.mubr.f32.mxu0 0.0
        %897 = vmatmul.mubr.f32.gmra.mxu0 %v687
        %v898 = vpop.f32.mrf.mxu0
        %v899 = vadd.f32 0.0, %v898
        %v900 = vpop.f32.mrf.mxu0
        %901 = vmatprep.mubr.f32.mxu0 0.0
        %902 = vmatmul.mubr.f32.gmra.mxu0 %v690
        %v903 = vpop.f32.mrf.mxu0
        %v904 = vadd.f32 0.0, %v903
        %v905 = vpop.f32.mrf.mxu0
        %906 = vmatprep.mubr.f32.mxu0 0.0
        %907 = vmatmul.mubr.f32.gmra.mxu0 %v693
        %v908 = vpop.f32.mrf.mxu0
        %v909 = vadd.f32 0.0, %v908
        %v910 = vpop.f32.mrf.mxu0
        %911 = vmatprep.mubr.f32.mxu0 0.0
        %912 = vmatmul.mubr.f32.gmra.mxu0 %v696
        %v913 = vpop.f32.mrf.mxu0
        %v914 = vadd.f32 0.0, %v913
        %v915 = vpop.f32.mrf.mxu0
        %916 = vmatprep.mubr.f32.mxu0 0.0
        %917 = vmatmul.mubr.f32.gmra.mxu0 %v699
        %v918 = vpop.f32.mrf.mxu0
        %v919 = vadd.f32 0.0, %v918
        %v920 = vpop.f32.mrf.mxu0
        %921 = vmatprep.mubr.f32.mxu0 0.0
        %922 = vmatmul.mubr.f32.gmra.mxu0 %v702
        %v923 = vpop.f32.mrf.mxu0
        %v924 = vadd.f32 0.0, %v923
        %v925 = vpop.f32.mrf.mxu0
        %926 = vmatprep.mubr.f32.mxu0 0.0
        %927 = vmatmul.mubr.f32.gmra.mxu0 %v705
        %v928 = vpop.f32.mrf.mxu0
        %v929 = vadd.f32 0.0, %v928
        %v930 = vpop.f32.mrf.mxu0
        %931 = vmatprep.mubr.f32.mxu0 0.0
        %932 = vmatmul.mubr.f32.gmra.mxu0 %v708
        %v933 = vpop.f32.mrf.mxu0
        %v934 = vadd.f32 0.0, %v933
        %v935 = vpop.f32.mrf.mxu0
        %936 = vmatprep.mubr.f32.mxu0 0.0
        %937 = vmatmul.mubr.f32.gmra.mxu0 %v711
        %v938 = vpop.f32.mrf.mxu0
        %v939 = vadd.f32 0.0, %v938
        %v940 = vpop.f32.mrf.mxu0
        %941 = vmatprep.mubr.f32.mxu0 0.0
        %942 = vmatmul.mubr.f32.gmra.mxu0 %v714
        %v943 = vpop.f32.mrf.mxu0
        %v944 = vadd.f32 0.0, %v943
        %v945 = vpop.f32.mrf.mxu0
        %946 = vmatprep.mubr.f32.mxu0 0.0
        %947 = vmatmul.mubr.f32.gmra.mxu0 %v717
        %v948 = vpop.f32.mrf.mxu0
        %v949 = vadd.f32 0.0, %v948
        %v950 = vpop.f32.mrf.mxu0
        %951 = vmatprep.mubr.f32.mxu0 0.0
        %952 = vmatmul.mubr.f32.gmra.mxu0 %v720
        %v953 = vpop.f32.mrf.mxu0
        %v954 = vadd.f32 0.0, %v953
        %v955 = vpop.f32.mrf.mxu0
        %956 = vmatprep.mubr.f32.mxu0 0.0
        %957 = vmatmul.mubr.f32.gmra.mxu0 %v723
        %v958 = vpop.f32.mrf.mxu0
        %v959 = vadd.f32 0.0, %v958
        %v960 = vpop.f32.mrf.mxu0
        %961 = vmatprep.mubr.f32.mxu0 0.0
        %962 = vmatmul.mubr.f32.gmra.mxu0 %v726
        %v963 = vpop.f32.mrf.mxu0
        %v964 = vadd.f32 0.0, %v963
        %v965 = vpop.f32.mrf.mxu0
        %966 = vmatprep.mubr.f32.mxu0 0.0
        %967 = vmatmul.mubr.f32.gmra.mxu0 %v729
        %v968 = vpop.f32.mrf.mxu0
        %v969 = vadd.f32 0.0, %v968
        %v970 = vpop.f32.mrf.mxu0
        %971 = vmatprep.mubr.f32.mxu0 0.0
        %972 = vmatmul.mubr.f32.gmra.mxu0 %v732
        %v973 = vpop.f32.mrf.mxu0
        %v974 = vadd.f32 0.0, %v973
        %v975 = vpop.f32.mrf.mxu0
        %976 = vmatprep.mubr.f32.mxu0 0.0
        %977 = vmatmul.mubr.f32.gmra.mxu0 %v735
        %v978 = vpop.f32.mrf.mxu0
        %v979 = vadd.f32 0.0, %v978
        %v980 = vpop.f32.mrf.mxu0
        %981 = vmatprep.mubr.f32.mxu0 0.0
        %982 = vmatmul.mubr.f32.gmra.mxu0 %v738
        %v983 = vpop.f32.mrf.mxu0
        %v984 = vadd.f32 0.0, %v983
        %v985 = vpop.f32.mrf.mxu0
        %986 = vmatprep.mubr.f32.mxu0 0.0
        %987 = vmatmul.mubr.f32.gmra.mxu0 %v741
        %v988 = vpop.f32.mrf.mxu0
        %v989 = vadd.f32 0.0, %v988
        %v990 = vpop.f32.mrf.mxu0
        %991 = vdwg.mxu0
        %992 = vst [vmem:[%s177] sm:$0xff] %v814
        %993 = vst [vmem:[%s177 + $0x8] sm:$0xff] %v819
        %994 = vst [vmem:[%s177 + $0x10] sm:$0xff] %v824
        %995 = vst [vmem:[%s177 + $0x18] sm:$0xff] %v829
        %996 = vst [vmem:[%s177 + $0x20] sm:$0xff] %v834
        %997 = vst [vmem:[%s177 + $0x28] sm:$0xff] %v839
        %998 = vst [vmem:[%s177 + $0x30] sm:$0xff] %v844
        %999 = vst [vmem:[%s177 + $0x38] sm:$0xff] %v849
        %1000 = vst [vmem:[%s177 + $0x40] sm:$0xff] %v854
        %1001 = vst [vmem:[%s177 + $0x48] sm:$0xff] %v859
        %1002 = vst [vmem:[%s177 + $0x50] sm:$0xff] %v864
        %1003 = vst [vmem:[%s177 + $0x58] sm:$0xff] %v869
        %1004 = vst [vmem:[%s177 + $0x60] sm:$0xff] %v874
        %1005 = vst [vmem:[%s177 + $0x68] sm:$0xff] %v879
        %1006 = vst [vmem:[%s177 + $0x70] sm:$0xff] %v884
        %1007 = vst [vmem:[%s177 + $0x78] sm:$0xff] %v889
        %1008 = vst [vmem:[%s177 + $0x80] sm:$0xff] %v894
        %1009 = vst [vmem:[%s177 + $0x88] sm:$0xff] %v899
        %1010 = vst [vmem:[%s177 + $0x90] sm:$0xff] %v904
        %1011 = vst [vmem:[%s177 + $0x98] sm:$0xff] %v909
        %1012 = vst [vmem:[%s177 + $0xa0] sm:$0xff] %v914
        %1013 = vst [vmem:[%s177 + $0xa8] sm:$0xff] %v919
        %1014 = vst [vmem:[%s177 + $0xb0] sm:$0xff] %v924
        %1015 = vst [vmem:[%s177 + $0xb8] sm:$0xff] %v929
        %1016 = vst [vmem:[%s177 + $0xc0] sm:$0xff] %v934
        %1017 = vst [vmem:[%s177 + $0xc8] sm:$0xff] %v939
        %1018 = vst [vmem:[%s177 + $0xd0] sm:$0xff] %v944
        %1019 = vst [vmem:[%s177 + $0xd8] sm:$0xff] %v949
        %1020 = vst [vmem:[%s177 + $0xe0] sm:$0xff] %v954
        %1021 = vst [vmem:[%s177 + $0xe8] sm:$0xff] %v959
        %1022 = vst [vmem:[%s177 + $0xf0] sm:$0xff] %v964
        %1023 = vst [vmem:[%s177 + $0xf8] sm:$0xff] %v969
        %1024 = vst [vmem:[%s177 + $0x100] sm:$0xff] %v974
        %1025 = vst [vmem:[%s177 + $0x108] sm:$0xff] %v979
        %1026 = vst [vmem:[%s177 + $0x110] sm:$0xff] %v984
        %1027 = vst [vmem:[%s177 + $0x118] sm:$0xff] %v989
        %v1028 = vld [vmem:[#allocation2 + $0x1] sm:$0xff]
        %v1029 = vld [vmem:[#allocation2 + $0x9] sm:$0xff]
        %v1030 = vld [vmem:[#allocation2 + $0x11] sm:$0xff]
        %v1031 = vld [vmem:[#allocation2 + $0x19] sm:$0xff]
        %v1032 = vld [vmem:[#allocation2 + $0x21] sm:$0xff]
        %v1033 = vld [vmem:[#allocation2 + $0x29] sm:$0xff]
        %v1034 = vld [vmem:[#allocation2 + $0x31] sm:$0xff]
        %v1035 = vld [vmem:[#allocation2 + $0x39] sm:$0xff]
        %v1036 = vld [vmem:[#allocation2 + $0x41] sm:$0xff]
        %v1037 = vld [vmem:[#allocation2 + $0x49] sm:$0xff]
        %v1038 = vld [vmem:[#allocation2 + $0x51] sm:$0xff]
        %v1039 = vld [vmem:[#allocation2 + $0x59] sm:$0xff]
        %v1040 = vld [vmem:[#allocation2 + $0x61] sm:$0xff]
        %v1041 = vld [vmem:[#allocation2 + $0x69] sm:$0xff]
        %v1042 = vld [vmem:[#allocation2 + $0x71] sm:$0xff]
        %v1043 = vld [vmem:[#allocation2 + $0x79] sm:$0xff]
        %v1044 = vld [vmem:[#allocation2 + $0x81] sm:$0xff]
        %v1045 = vld [vmem:[#allocation2 + $0x89] sm:$0xff]
        %v1046 = vld [vmem:[#allocation2 + $0x91] sm:$0xff]
        %v1047 = vld [vmem:[#allocation2 + $0x99] sm:$0xff]
        %v1048 = vld [vmem:[#allocation2 + $0xa1] sm:$0xff]
        %v1049 = vld [vmem:[#allocation2 + $0xa9] sm:$0xff]
        %v1050 = vld [vmem:[#allocation2 + $0xb1] sm:$0xff]
        %v1051 = vld [vmem:[#allocation2 + $0xb9] sm:$0xff]
        %v1052 = vld [vmem:[#allocation2 + $0xc1] sm:$0xff]
        %v1053 = vld [vmem:[#allocation2 + $0xc9] sm:$0xff]
        %v1054 = vld [vmem:[#allocation2 + $0xd1] sm:$0xff]
        %v1055 = vld [vmem:[#allocation2 + $0xd9] sm:$0xff]
        %v1056 = vld [vmem:[#allocation2 + $0xe1] sm:$0xff]
        %v1057 = vld [vmem:[#allocation2 + $0xe9] sm:$0xff]
        %v1058 = vld [vmem:[#allocation2 + $0xf1] sm:$0xff]
        %v1059 = vld [vmem:[#allocation2 + $0xf9] sm:$0xff]
        %v1060 = vld [vmem:[#allocation2 + $0x101] sm:$0xff]
        %v1061 = vld [vmem:[#allocation2 + $0x109] sm:$0xff]
        %v1062 = vld [vmem:[#allocation2 + $0x111] sm:$0xff]
        %v1063 = vld [vmem:[#allocation2 + $0x119] sm:$0xff]
        %s1064 = scalar_lea.vmem %s1, 4
        %v1065 = vld [vmem:[%s1064] sm:$0xf]
        %v1067 = vsel %vm555, %v1028, 0
        %v1070 = vsel %vm555, %v1029, 0
        %v1073 = vsel %vm555, %v1030, 0
        %v1076 = vsel %vm555, %v1031, 0
        %v1079 = vsel %vm555, %v1032, 0
        %v1082 = vsel %vm555, %v1033, 0
        %v1085 = vsel %vm555, %v1034, 0
        %v1088 = vsel %vm555, %v1035, 0
        %v1091 = vsel %vm555, %v1036, 0
        %v1094 = vsel %vm555, %v1037, 0
        %v1097 = vsel %vm555, %v1038, 0
        %v1100 = vsel %vm555, %v1039, 0
        %v1103 = vsel %vm555, %v1040, 0
        %v1106 = vsel %vm555, %v1041, 0
        %v1109 = vsel %vm555, %v1042, 0
        %v1112 = vsel %vm555, %v1043, 0
        %v1115 = vsel %vm555, %v1044, 0
        %v1118 = vsel %vm555, %v1045, 0
        %v1121 = vsel %vm555, %v1046, 0
        %v1124 = vsel %vm555, %v1047, 0
        %v1127 = vsel %vm555, %v1048, 0
        %v1130 = vsel %vm555, %v1049, 0
        %v1133 = vsel %vm555, %v1050, 0
        %v1136 = vsel %vm555, %v1051, 0
        %v1139 = vsel %vm555, %v1052, 0
        %v1142 = vsel %vm555, %v1053, 0
        %v1145 = vsel %vm555, %v1054, 0
        %v1148 = vsel %vm555, %v1055, 0
        %v1151 = vsel %vm555, %v1056, 0
        %v1154 = vsel %vm555, %v1057, 0
        %v1157 = vsel %vm555, %v1058, 0
        %v1160 = vsel %vm555, %v1059, 0
        %v1163 = vsel %vm555, %v1060, 0
        %v1166 = vsel %vm555, %v1061, 0
        %v1169 = vsel %vm555, %v1062, 0
        %v1172 = vsel %vm555, %v1063, 0
        %v1175 = vsel %vm743, %v1065, 0
        %1177 = vmatprep.subr.mxu0 0.0
        %1178 = vmatpush1.msra.mxu0 0.0
        %1179 = vmatprep.subr.mxu0 0.0
        %1180 = vmatpush1.msra.mxu0 0.0
        %1181 = vmatprep.subr.mxu0 0.0
        %1182 = vmatpush1.msra.mxu0 0.0
        %1183 = vmatprep.subr.mxu0 0.0
        %1184 = vmatpush1.msra.mxu0 0.0
        %1185 = vmatprep.subr.mxu0 0.0
        %1186 = vmatpush1.msra.mxu0 0.0
        %1187 = vmatprep.subr.mxu0 0.0
        %1188 = vmatpush1.msra.mxu0 0.0
        %1189 = vmatprep.subr.mxu0 0.0
        %1190 = vmatpush1.msra.mxu0 0.0
        %1191 = vmatprep.subr.mxu0 0.0
        %1192 = vmatpush1.msra.mxu0 0.0
        %1193 = vmatprep.subr.mxu0 0.0
        %1194 = vmatpush1.msra.mxu0 0.0
        %1195 = vmatprep.subr.mxu0 0.0
        %1196 = vmatpush1.msra.mxu0 0.0
        %1197 = vmatprep.subr.mxu0 0.0
        %1198 = vmatpush1.msra.mxu0 0.0
        %1199 = vmatprep.subr.mxu0 0.0
        %1200 = vmatpush1.msra.mxu0 0.0
        %1201 = vmatprep.subr.mxu0 0.0
        %1202 = vmatpush1.msra.mxu0 0.0
        %1203 = vmatprep.subr.mxu0 0.0
        %1204 = vmatpush1.msra.mxu0 0.0
        %1205 = vmatprep.subr.mxu0 0.0
        %1206 = vmatpush1.msra.mxu0 0.0
        %1207 = vmatprep.subr.mxu0 0.0
        %1208 = vmatpush1.msra.mxu0 %v1175
        %1209 = vmatprep.subr.mxu0 0.0
        %1210 = vmatpush2.msra.mxu0 0.0
        %1211 = vmatprep.subr.mxu0 0.0
        %1212 = vmatpush2.msra.mxu0 0.0
        %1213 = vmatprep.subr.mxu0 0.0
        %1214 = vmatpush2.msra.mxu0 0.0
        %1215 = vmatprep.subr.mxu0 0.0
        %1216 = vmatpush2.msra.mxu0 0.0
        %1217 = vmatprep.subr.mxu0 0.0
        %1218 = vmatpush2.msra.mxu0 0.0
        %1219 = vmatprep.subr.mxu0 0.0
        %1220 = vmatpush2.msra.mxu0 0.0
        %1221 = vmatprep.subr.mxu0 0.0
        %1222 = vmatpush2.msra.mxu0 0.0
        %1223 = vmatprep.subr.mxu0 0.0
        %1224 = vmatpush2.msra.mxu0 0.0
        %1225 = vmatprep.subr.mxu0 0.0
        %1226 = vmatpush2.msra.mxu0 0.0
        %1227 = vmatprep.subr.mxu0 0.0
        %1228 = vmatpush2.msra.mxu0 0.0
        %1229 = vmatprep.subr.mxu0 0.0
        %1230 = vmatpush2.msra.mxu0 0.0
        %1231 = vmatprep.subr.mxu0 0.0
        %1232 = vmatpush2.msra.mxu0 0.0
        %1233 = vmatprep.subr.mxu0 0.0
        %1234 = vmatpush2.msra.mxu0 0.0
        %1235 = vmatprep.subr.mxu0 0.0
        %1236 = vmatpush2.msra.mxu0 0.0
        %1237 = vmatprep.subr.mxu0 0.0
        %1238 = vmatpush2.msra.mxu0 0.0
        %1239 = vmatprep.subr.mxu0 0.0
        %1240 = vmatpush2.msra.mxu0 0.0
        %1241 = vmatprep.mubr.f32.mxu0 0.0
        %1242 = vmatmul.mubr.f32.gmra.mxu0 %v1067
        %v1243 = vpop.f32.mrf.mxu0
        %v1244 = vadd.f32 0.0, %v1243
        %v1245 = vpop.f32.mrf.mxu0
        %1246 = vmatprep.mubr.f32.mxu0 0.0
        %1247 = vmatmul.mubr.f32.gmra.mxu0 %v1070
        %v1248 = vpop.f32.mrf.mxu0
        %v1249 = vadd.f32 0.0, %v1248
        %v1250 = vpop.f32.mrf.mxu0
        %1251 = vmatprep.mubr.f32.mxu0 0.0
        %1252 = vmatmul.mubr.f32.gmra.mxu0 %v1073
        %v1253 = vpop.f32.mrf.mxu0
        %v1254 = vadd.f32 0.0, %v1253
        %v1255 = vpop.f32.mrf.mxu0
        %1256 = vmatprep.mubr.f32.mxu0 0.0
        %1257 = vmatmul.mubr.f32.gmra.mxu0 %v1076
        %v1258 = vpop.f32.mrf.mxu0
        %v1259 = vadd.f32 0.0, %v1258
        %v1260 = vpop.f32.mrf.mxu0
        %1261 = vmatprep.mubr.f32.mxu0 0.0
        %1262 = vmatmul.mubr.f32.gmra.mxu0 %v1079
        %v1263 = vpop.f32.mrf.mxu0
        %v1264 = vadd.f32 0.0, %v1263
        %v1265 = vpop.f32.mrf.mxu0
        %1266 = vmatprep.mubr.f32.mxu0 0.0
        %1267 = vmatmul.mubr.f32.gmra.mxu0 %v1082
        %v1268 = vpop.f32.mrf.mxu0
        %v1269 = vadd.f32 0.0, %v1268
        %v1270 = vpop.f32.mrf.mxu0
        %1271 = vmatprep.mubr.f32.mxu0 0.0
        %1272 = vmatmul.mubr.f32.gmra.mxu0 %v1085
        %v1273 = vpop.f32.mrf.mxu0
        %v1274 = vadd.f32 0.0, %v1273
        %v1275 = vpop.f32.mrf.mxu0
        %1276 = vmatprep.mubr.f32.mxu0 0.0
        %1277 = vmatmul.mubr.f32.gmra.mxu0 %v1088
        %v1278 = vpop.f32.mrf.mxu0
        %v1279 = vadd.f32 0.0, %v1278
        %v1280 = vpop.f32.mrf.mxu0
        %1281 = vmatprep.mubr.f32.mxu0 0.0
        %1282 = vmatmul.mubr.f32.gmra.mxu0 %v1091
        %v1283 = vpop.f32.mrf.mxu0
        %v1284 = vadd.f32 0.0, %v1283
        %v1285 = vpop.f32.mrf.mxu0
        %1286 = vmatprep.mubr.f32.mxu0 0.0
        %1287 = vmatmul.mubr.f32.gmra.mxu0 %v1094
        %v1288 = vpop.f32.mrf.mxu0
        %v1289 = vadd.f32 0.0, %v1288
        %v1290 = vpop.f32.mrf.mxu0
        %1291 = vmatprep.mubr.f32.mxu0 0.0
        %1292 = vmatmul.mubr.f32.gmra.mxu0 %v1097
        %v1293 = vpop.f32.mrf.mxu0
        %v1294 = vadd.f32 0.0, %v1293
        %v1295 = vpop.f32.mrf.mxu0
        %1296 = vmatprep.mubr.f32.mxu0 0.0
        %1297 = vmatmul.mubr.f32.gmra.mxu0 %v1100
        %v1298 = vpop.f32.mrf.mxu0
        %v1299 = vadd.f32 0.0, %v1298
        %v1300 = vpop.f32.mrf.mxu0
        %1301 = vmatprep.mubr.f32.mxu0 0.0
        %1302 = vmatmul.mubr.f32.gmra.mxu0 %v1103
        %v1303 = vpop.f32.mrf.mxu0
        %v1304 = vadd.f32 0.0, %v1303
        %v1305 = vpop.f32.mrf.mxu0
        %1306 = vmatprep.mubr.f32.mxu0 0.0
        %1307 = vmatmul.mubr.f32.gmra.mxu0 %v1106
        %v1308 = vpop.f32.mrf.mxu0
        %v1309 = vadd.f32 0.0, %v1308
        %v1310 = vpop.f32.mrf.mxu0
        %1311 = vmatprep.mubr.f32.mxu0 0.0
        %1312 = vmatmul.mubr.f32.gmra.mxu0 %v1109
        %v1313 = vpop.f32.mrf.mxu0
        %v1314 = vadd.f32 0.0, %v1313
        %v1315 = vpop.f32.mrf.mxu0
        %1316 = vmatprep.mubr.f32.mxu0 0.0
        %1317 = vmatmul.mubr.f32.gmra.mxu0 %v1112
        %v1318 = vpop.f32.mrf.mxu0
        %v1319 = vadd.f32 0.0, %v1318
        %v1320 = vpop.f32.mrf.mxu0
        %1321 = vmatprep.mubr.f32.mxu0 0.0
        %1322 = vmatmul.mubr.f32.gmra.mxu0 %v1115
        %v1323 = vpop.f32.mrf.mxu0
        %v1324 = vadd.f32 0.0, %v1323
        %v1325 = vpop.f32.mrf.mxu0
        %1326 = vmatprep.mubr.f32.mxu0 0.0
        %1327 = vmatmul.mubr.f32.gmra.mxu0 %v1118
        %v1328 = vpop.f32.mrf.mxu0
        %v1329 = vadd.f32 0.0, %v1328
        %v1330 = vpop.f32.mrf.mxu0
        %1331 = vmatprep.mubr.f32.mxu0 0.0
        %1332 = vmatmul.mubr.f32.gmra.mxu0 %v1121
        %v1333 = vpop.f32.mrf.mxu0
        %v1334 = vadd.f32 0.0, %v1333
        %v1335 = vpop.f32.mrf.mxu0
        %1336 = vmatprep.mubr.f32.mxu0 0.0
        %1337 = vmatmul.mubr.f32.gmra.mxu0 %v1124
        %v1338 = vpop.f32.mrf.mxu0
        %v1339 = vadd.f32 0.0, %v1338
        %v1340 = vpop.f32.mrf.mxu0
        %1341 = vmatprep.mubr.f32.mxu0 0.0
        %1342 = vmatmul.mubr.f32.gmra.mxu0 %v1127
        %v1343 = vpop.f32.mrf.mxu0
        %v1344 = vadd.f32 0.0, %v1343
        %v1345 = vpop.f32.mrf.mxu0
        %1346 = vmatprep.mubr.f32.mxu0 0.0
        %1347 = vmatmul.mubr.f32.gmra.mxu0 %v1130
        %v1348 = vpop.f32.mrf.mxu0
        %v1349 = vadd.f32 0.0, %v1348
        %v1350 = vpop.f32.mrf.mxu0
        %1351 = vmatprep.mubr.f32.mxu0 0.0
        %1352 = vmatmul.mubr.f32.gmra.mxu0 %v1133
        %v1353 = vpop.f32.mrf.mxu0
        %v1354 = vadd.f32 0.0, %v1353
        %v1355 = vpop.f32.mrf.mxu0
        %1356 = vmatprep.mubr.f32.mxu0 0.0
        %1357 = vmatmul.mubr.f32.gmra.mxu0 %v1136
        %v1358 = vpop.f32.mrf.mxu0
        %v1359 = vadd.f32 0.0, %v1358
        %v1360 = vpop.f32.mrf.mxu0
        %1361 = vmatprep.mubr.f32.mxu0 0.0
        %1362 = vmatmul.mubr.f32.gmra.mxu0 %v1139
        %v1363 = vpop.f32.mrf.mxu0
        %v1364 = vadd.f32 0.0, %v1363
        %v1365 = vpop.f32.mrf.mxu0
        %1366 = vmatprep.mubr.f32.mxu0 0.0
        %1367 = vmatmul.mubr.f32.gmra.mxu0 %v1142
        %v1368 = vpop.f32.mrf.mxu0
        %v1369 = vadd.f32 0.0, %v1368
        %v1370 = vpop.f32.mrf.mxu0
        %1371 = vmatprep.mubr.f32.mxu0 0.0
        %1372 = vmatmul.mubr.f32.gmra.mxu0 %v1145
        %v1373 = vpop.f32.mrf.mxu0
        %v1374 = vadd.f32 0.0, %v1373
        %v1375 = vpop.f32.mrf.mxu0
        %1376 = vmatprep.mubr.f32.mxu0 0.0
        %1377 = vmatmul.mubr.f32.gmra.mxu0 %v1148
        %v1378 = vpop.f32.mrf.mxu0
        %v1379 = vadd.f32 0.0, %v1378
        %v1380 = vpop.f32.mrf.mxu0
        %1381 = vmatprep.mubr.f32.mxu0 0.0
        %1382 = vmatmul.mubr.f32.gmra.mxu0 %v1151
        %v1383 = vpop.f32.mrf.mxu0
        %v1384 = vadd.f32 0.0, %v1383
        %v1385 = vpop.f32.mrf.mxu0
        %1386 = vmatprep.mubr.f32.mxu0 0.0
        %1387 = vmatmul.mubr.f32.gmra.mxu0 %v1154
        %v1388 = vpop.f32.mrf.mxu0
        %v1389 = vadd.f32 0.0, %v1388
        %v1390 = vpop.f32.mrf.mxu0
        %1391 = vmatprep.mubr.f32.mxu0 0.0
        %1392 = vmatmul.mubr.f32.gmra.mxu0 %v1157
        %v1393 = vpop.f32.mrf.mxu0
        %v1394 = vadd.f32 0.0, %v1393
        %v1395 = vpop.f32.mrf.mxu0
        %1396 = vmatprep.mubr.f32.mxu0 0.0
        %1397 = vmatmul.mubr.f32.gmra.mxu0 %v1160
        %v1398 = vpop.f32.mrf.mxu0
        %v1399 = vadd.f32 0.0, %v1398
        %v1400 = vpop.f32.mrf.mxu0
        %1401 = vmatprep.mubr.f32.mxu0 0.0
        %1402 = vmatmul.mubr.f32.gmra.mxu0 %v1163
        %v1403 = vpop.f32.mrf.mxu0
        %v1404 = vadd.f32 0.0, %v1403
        %v1405 = vpop.f32.mrf.mxu0
        %1406 = vmatprep.mubr.f32.mxu0 0.0
        %1407 = vmatmul.mubr.f32.gmra.mxu0 %v1166
        %v1408 = vpop.f32.mrf.mxu0
        %v1409 = vadd.f32 0.0, %v1408
        %v1410 = vpop.f32.mrf.mxu0
        %1411 = vmatprep.mubr.f32.mxu0 0.0
        %1412 = vmatmul.mubr.f32.gmra.mxu0 %v1169
        %v1413 = vpop.f32.mrf.mxu0
        %v1414 = vadd.f32 0.0, %v1413
        %v1415 = vpop.f32.mrf.mxu0
        %1416 = vmatprep.mubr.f32.mxu0 0.0
        %1417 = vmatmul.mubr.f32.gmra.mxu0 %v1172
        %v1418 = vpop.f32.mrf.mxu0
        %v1419 = vadd.f32 0.0, %v1418
        %v1420 = vpop.f32.mrf.mxu0
        %1421 = vdwg.mxu0
        %v1422 = vld [vmem:[%s177] sm:$0xff]
        %v1423 = vld [vmem:[%s177 + $0x8] sm:$0xff]
        %v1424 = vld [vmem:[%s177 + $0x10] sm:$0xff]
        %v1425 = vld [vmem:[%s177 + $0x18] sm:$0xff]
        %v1426 = vld [vmem:[%s177 + $0x20] sm:$0xff]
        %v1427 = vld [vmem:[%s177 + $0x28] sm:$0xff]
        %v1428 = vld [vmem:[%s177 + $0x30] sm:$0xff]
        %v1429 = vld [vmem:[%s177 + $0x38] sm:$0xff]
        %v1430 = vld [vmem:[%s177 + $0x40] sm:$0xff]
        %v1431 = vld [vmem:[%s177 + $0x48] sm:$0xff]
        %v1432 = vld [vmem:[%s177 + $0x50] sm:$0xff]
        %v1433 = vld [vmem:[%s177 + $0x58] sm:$0xff]
        %v1434 = vld [vmem:[%s177 + $0x60] sm:$0xff]
        %v1435 = vld [vmem:[%s177 + $0x68] sm:$0xff]
        %v1436 = vld [vmem:[%s177 + $0x70] sm:$0xff]
        %v1437 = vld [vmem:[%s177 + $0x78] sm:$0xff]
        %v1438 = vld [vmem:[%s177 + $0x80] sm:$0xff]
        %v1439 = vld [vmem:[%s177 + $0x88] sm:$0xff]
        %v1440 = vld [vmem:[%s177 + $0x90] sm:$0xff]
        %v1441 = vld [vmem:[%s177 + $0x98] sm:$0xff]
        %v1442 = vld [vmem:[%s177 + $0xa0] sm:$0xff]
        %v1443 = vld [vmem:[%s177 + $0xa8] sm:$0xff]
        %v1444 = vld [vmem:[%s177 + $0xb0] sm:$0xff]
        %v1445 = vld [vmem:[%s177 + $0xb8] sm:$0xff]
        %v1446 = vld [vmem:[%s177 + $0xc0] sm:$0xff]
        %v1447 = vld [vmem:[%s177 + $0xc8] sm:$0xff]
        %v1448 = vld [vmem:[%s177 + $0xd0] sm:$0xff]
        %v1449 = vld [vmem:[%s177 + $0xd8] sm:$0xff]
        %v1450 = vld [vmem:[%s177 + $0xe0] sm:$0xff]
        %v1451 = vld [vmem:[%s177 + $0xe8] sm:$0xff]
        %v1452 = vld [vmem:[%s177 + $0xf0] sm:$0xff]
        %v1453 = vld [vmem:[%s177 + $0xf8] sm:$0xff]
        %v1454 = vld [vmem:[%s177 + $0x100] sm:$0xff]
        %v1455 = vld [vmem:[%s177 + $0x108] sm:$0xff]
        %v1456 = vld [vmem:[%s177 + $0x110] sm:$0xff]
        %v1457 = vld [vmem:[%s177 + $0x118] sm:$0xff]
        %v1458 = vadd.f32 %v1422, %v1244
        %v1459 = vadd.f32 %v1423, %v1249
        %v1460 = vadd.f32 %v1424, %v1254
        %v1461 = vadd.f32 %v1425, %v1259
        %v1462 = vadd.f32 %v1426, %v1264
        %v1463 = vadd.f32 %v1427, %v1269
        %v1464 = vadd.f32 %v1428, %v1274
        %v1465 = vadd.f32 %v1429, %v1279
        %v1466 = vadd.f32 %v1430, %v1284
        %v1467 = vadd.f32 %v1431, %v1289
        %v1468 = vadd.f32 %v1432, %v1294
        %v1469 = vadd.f32 %v1433, %v1299
        %v1470 = vadd.f32 %v1434, %v1304
        %v1471 = vadd.f32 %v1435, %v1309
        %v1472 = vadd.f32 %v1436, %v1314
        %v1473 = vadd.f32 %v1437, %v1319
        %v1474 = vadd.f32 %v1438, %v1324
        %v1475 = vadd.f32 %v1439, %v1329
        %v1476 = vadd.f32 %v1440, %v1334
        %v1477 = vadd.f32 %v1441, %v1339
        %v1478 = vadd.f32 %v1442, %v1344
        %v1479 = vadd.f32 %v1443, %v1349
        %v1480 = vadd.f32 %v1444, %v1354
        %v1481 = vadd.f32 %v1445, %v1359
        %v1482 = vadd.f32 %v1446, %v1364
        %v1483 = vadd.f32 %v1447, %v1369
        %v1484 = vadd.f32 %v1448, %v1374
        %v1485 = vadd.f32 %v1449, %v1379
        %v1486 = vadd.f32 %v1450, %v1384
        %v1487 = vadd.f32 %v1451, %v1389
        %v1488 = vadd.f32 %v1452, %v1394
        %v1489 = vadd.f32 %v1453, %v1399
        %v1490 = vadd.f32 %v1454, %v1404
        %v1491 = vadd.f32 %v1455, %v1409
        %v1492 = vadd.f32 %v1456, %v1414
        %v1493 = vadd.f32 %v1457, %v1419
        %1494 = vst [vmem:[%s177] sm:$0xff] %v1458
        %1495 = vst [vmem:[%s177 + $0x8] sm:$0xff] %v1459
        %1496 = vst [vmem:[%s177 + $0x10] sm:$0xff] %v1460
        %1497 = vst [vmem:[%s177 + $0x18] sm:$0xff] %v1461
        %1498 = vst [vmem:[%s177 + $0x20] sm:$0xff] %v1462
        %1499 = vst [vmem:[%s177 + $0x28] sm:$0xff] %v1463
        %1500 = vst [vmem:[%s177 + $0x30] sm:$0xff] %v1464
        %1501 = vst [vmem:[%s177 + $0x38] sm:$0xff] %v1465
        %1502 = vst [vmem:[%s177 + $0x40] sm:$0xff] %v1466
        %1503 = vst [vmem:[%s177 + $0x48] sm:$0xff] %v1467
        %1504 = vst [vmem:[%s177 + $0x50] sm:$0xff] %v1468
        %1505 = vst [vmem:[%s177 + $0x58] sm:$0xff] %v1469
        %1506 = vst [vmem:[%s177 + $0x60] sm:$0xff] %v1470
        %1507 = vst [vmem:[%s177 + $0x68] sm:$0xff] %v1471
        %1508 = vst [vmem:[%s177 + $0x70] sm:$0xff] %v1472
        %1509 = vst [vmem:[%s177 + $0x78] sm:$0xff] %v1473
        %1510 = vst [vmem:[%s177 + $0x80] sm:$0xff] %v1474
        %1511 = vst [vmem:[%s177 + $0x88] sm:$0xff] %v1475
        %1512 = vst [vmem:[%s177 + $0x90] sm:$0xff] %v1476
        %1513 = vst [vmem:[%s177 + $0x98] sm:$0xff] %v1477
        %1514 = vst [vmem:[%s177 + $0xa0] sm:$0xff] %v1478
        %1515 = vst [vmem:[%s177 + $0xa8] sm:$0xff] %v1479
        %1516 = vst [vmem:[%s177 + $0xb0] sm:$0xff] %v1480
        %1517 = vst [vmem:[%s177 + $0xb8] sm:$0xff] %v1481
        %1518 = vst [vmem:[%s177 + $0xc0] sm:$0xff] %v1482
        %1519 = vst [vmem:[%s177 + $0xc8] sm:$0xff] %v1483
        %1520 = vst [vmem:[%s177 + $0xd0] sm:$0xff] %v1484
        %1521 = vst [vmem:[%s177 + $0xd8] sm:$0xff] %v1485
        %1522 = vst [vmem:[%s177 + $0xe0] sm:$0xff] %v1486
        %1523 = vst [vmem:[%s177 + $0xe8] sm:$0xff] %v1487
        %1524 = vst [vmem:[%s177 + $0xf0] sm:$0xff] %v1488
        %1525 = vst [vmem:[%s177 + $0xf8] sm:$0xff] %v1489
        %1526 = vst [vmem:[%s177 + $0x100] sm:$0xff] %v1490
        %1527 = vst [vmem:[%s177 + $0x108] sm:$0xff] %v1491
        %1528 = vst [vmem:[%s177 + $0x110] sm:$0xff] %v1492
        %1529 = vst [vmem:[%s177 + $0x118] sm:$0xff] %v1493
        %v1530 = vld [vmem:[#allocation2 + $0x2] sm:$0xff]
        %v1531 = vld [vmem:[#allocation2 + $0xa] sm:$0xff]
        %v1532 = vld [vmem:[#allocation2 + $0x12] sm:$0xff]
        %v1533 = vld [vmem:[#allocation2 + $0x1a] sm:$0xff]
        %v1534 = vld [vmem:[#allocation2 + $0x22] sm:$0xff]
        %v1535 = vld [vmem:[#allocation2 + $0x2a] sm:$0xff]
        %v1536 = vld [vmem:[#allocation2 + $0x32] sm:$0xff]
        %v1537 = vld [vmem:[#allocation2 + $0x3a] sm:$0xff]
        %v1538 = vld [vmem:[#allocation2 + $0x42] sm:$0xff]
        %v1539 = vld [vmem:[#allocation2 + $0x4a] sm:$0xff]
        %v1540 = vld [vmem:[#allocation2 + $0x52] sm:$0xff]
        %v1541 = vld [vmem:[#allocation2 + $0x5a] sm:$0xff]
        %v1542 = vld [vmem:[#allocation2 + $0x62] sm:$0xff]
        %v1543 = vld [vmem:[#allocation2 + $0x6a] sm:$0xff]
        %v1544 = vld [vmem:[#allocation2 + $0x72] sm:$0xff]
        %v1545 = vld [vmem:[#allocation2 + $0x7a] sm:$0xff]
        %v1546 = vld [vmem:[#allocation2 + $0x82] sm:$0xff]
        %v1547 = vld [vmem:[#allocation2 + $0x8a] sm:$0xff]
        %v1548 = vld [vmem:[#allocation2 + $0x92] sm:$0xff]
        %v1549 = vld [vmem:[#allocation2 + $0x9a] sm:$0xff]
        %v1550 = vld [vmem:[#allocation2 + $0xa2] sm:$0xff]
        %v1551 = vld [vmem:[#allocation2 + $0xaa] sm:$0xff]
        %v1552 = vld [vmem:[#allocation2 + $0xb2] sm:$0xff]
        %v1553 = vld [vmem:[#allocation2 + $0xba] sm:$0xff]
        %v1554 = vld [vmem:[#allocation2 + $0xc2] sm:$0xff]
        %v1555 = vld [vmem:[#allocation2 + $0xca] sm:$0xff]
        %v1556 = vld [vmem:[#allocation2 + $0xd2] sm:$0xff]
        %v1557 = vld [vmem:[#allocation2 + $0xda] sm:$0xff]
        %v1558 = vld [vmem:[#allocation2 + $0xe2] sm:$0xff]
        %v1559 = vld [vmem:[#allocation2 + $0xea] sm:$0xff]
        %v1560 = vld [vmem:[#allocation2 + $0xf2] sm:$0xff]
        %v1561 = vld [vmem:[#allocation2 + $0xfa] sm:$0xff]
        %v1562 = vld [vmem:[#allocation2 + $0x102] sm:$0xff]
        %v1563 = vld [vmem:[#allocation2 + $0x10a] sm:$0xff]
        %v1564 = vld [vmem:[#allocation2 + $0x112] sm:$0xff]
        %v1565 = vld [vmem:[#allocation2 + $0x11a] sm:$0xff]
        %s1566 = scalar_lea.vmem %s1, 8
        %v1567 = vld [vmem:[%s1566] sm:$0xf]
        %v1569 = vsel %vm555, %v1530, 0
        %v1572 = vsel %vm555, %v1531, 0
        %v1575 = vsel %vm555, %v1532, 0
        %v1578 = vsel %vm555, %v1533, 0
        %v1581 = vsel %vm555, %v1534, 0
        %v1584 = vsel %vm555, %v1535, 0
        %v1587 = vsel %vm555, %v1536, 0
        %v1590 = vsel %vm555, %v1537, 0
        %v1593 = vsel %vm555, %v1538, 0
        %v1596 = vsel %vm555, %v1539, 0
        %v1599 = vsel %vm555, %v1540, 0
        %v1602 = vsel %vm555, %v1541, 0
        %v1605 = vsel %vm555, %v1542, 0
        %v1608 = vsel %vm555, %v1543, 0
        %v1611 = vsel %vm555, %v1544, 0
        %v1614 = vsel %vm555, %v1545, 0
        %v1617 = vsel %vm555, %v1546, 0
        %v1620 = vsel %vm555, %v1547, 0
        %v1623 = vsel %vm555, %v1548, 0
        %v1626 = vsel %vm555, %v1549, 0
        %v1629 = vsel %vm555, %v1550, 0
        %v1632 = vsel %vm555, %v1551, 0
        %v1635 = vsel %vm555, %v1552, 0
        %v1638 = vsel %vm555, %v1553, 0
        %v1641 = vsel %vm555, %v1554, 0
        %v1644 = vsel %vm555, %v1555, 0
        %v1647 = vsel %vm555, %v1556, 0
        %v1650 = vsel %vm555, %v1557, 0
        %v1653 = vsel %vm555, %v1558, 0
        %v1656 = vsel %vm555, %v1559, 0
        %v1659 = vsel %vm555, %v1560, 0
        %v1662 = vsel %vm555, %v1561, 0
        %v1665 = vsel %vm555, %v1562, 0
        %v1668 = vsel %vm555, %v1563, 0
        %v1671 = vsel %vm555, %v1564, 0
        %v1674 = vsel %vm555, %v1565, 0
        %v1677 = vsel %vm743, %v1567, 0
        %1679 = vmatprep.subr.mxu0 0.0
        %1680 = vmatpush1.msra.mxu0 0.0
        %1681 = vmatprep.subr.mxu0 0.0
        %1682 = vmatpush1.msra.mxu0 0.0
        %1683 = vmatprep.subr.mxu0 0.0
        %1684 = vmatpush1.msra.mxu0 0.0
        %1685 = vmatprep.subr.mxu0 0.0
        %1686 = vmatpush1.msra.mxu0 0.0
        %1687 = vmatprep.subr.mxu0 0.0
        %1688 = vmatpush1.msra.mxu0 0.0
        %1689 = vmatprep.subr.mxu0 0.0
        %1690 = vmatpush1.msra.mxu0 0.0
        %1691 = vmatprep.subr.mxu0 0.0
        %1692 = vmatpush1.msra.mxu0 0.0
        %1693 = vmatprep.subr.mxu0 0.0
        %1694 = vmatpush1.msra.mxu0 0.0
        %1695 = vmatprep.subr.mxu0 0.0
        %1696 = vmatpush1.msra.mxu0 0.0
        %1697 = vmatprep.subr.mxu0 0.0
        %1698 = vmatpush1.msra.mxu0 0.0
        %1699 = vmatprep.subr.mxu0 0.0
        %1700 = vmatpush1.msra.mxu0 0.0
        %1701 = vmatprep.subr.mxu0 0.0
        %1702 = vmatpush1.msra.mxu0 0.0
        %1703 = vmatprep.subr.mxu0 0.0
        %1704 = vmatpush1.msra.mxu0 0.0
        %1705 = vmatprep.subr.mxu0 0.0
        %1706 = vmatpush1.msra.mxu0 0.0
        %1707 = vmatprep.subr.mxu0 0.0
        %1708 = vmatpush1.msra.mxu0 0.0
        %1709 = vmatprep.subr.mxu0 0.0
        %1710 = vmatpush1.msra.mxu0 %v1677
        %1711 = vmatprep.subr.mxu0 0.0
        %1712 = vmatpush2.msra.mxu0 0.0
        %1713 = vmatprep.subr.mxu0 0.0
        %1714 = vmatpush2.msra.mxu0 0.0
        %1715 = vmatprep.subr.mxu0 0.0
        %1716 = vmatpush2.msra.mxu0 0.0
        %1717 = vmatprep.subr.mxu0 0.0
        %1718 = vmatpush2.msra.mxu0 0.0
        %1719 = vmatprep.subr.mxu0 0.0
        %1720 = vmatpush2.msra.mxu0 0.0
        %1721 = vmatprep.subr.mxu0 0.0
        %1722 = vmatpush2.msra.mxu0 0.0
        %1723 = vmatprep.subr.mxu0 0.0
        %1724 = vmatpush2.msra.mxu0 0.0
        %1725 = vmatprep.subr.mxu0 0.0
        %1726 = vmatpush2.msra.mxu0 0.0
        %1727 = vmatprep.subr.mxu0 0.0
        %1728 = vmatpush2.msra.mxu0 0.0
        %1729 = vmatprep.subr.mxu0 0.0
        %1730 = vmatpush2.msra.mxu0 0.0
        %1731 = vmatprep.subr.mxu0 0.0
        %1732 = vmatpush2.msra.mxu0 0.0
        %1733 = vmatprep.subr.mxu0 0.0
        %1734 = vmatpush2.msra.mxu0 0.0
        %1735 = vmatprep.subr.mxu0 0.0
        %1736 = vmatpush2.msra.mxu0 0.0
        %1737 = vmatprep.subr.mxu0 0.0
        %1738 = vmatpush2.msra.mxu0 0.0
        %1739 = vmatprep.subr.mxu0 0.0
        %1740 = vmatpush2.msra.mxu0 0.0
        %1741 = vmatprep.subr.mxu0 0.0
        %1742 = vmatpush2.msra.mxu0 0.0
        %1743 = vmatprep.mubr.f32.mxu0 0.0
        %1744 = vmatmul.mubr.f32.gmra.mxu0 %v1569
        %v1745 = vpop.f32.mrf.mxu0
        %v1746 = vadd.f32 0.0, %v1745
        %v1747 = vpop.f32.mrf.mxu0
        %1748 = vmatprep.mubr.f32.mxu0 0.0
        %1749 = vmatmul.mubr.f32.gmra.mxu0 %v1572
        %v1750 = vpop.f32.mrf.mxu0
        %v1751 = vadd.f32 0.0, %v1750
        %v1752 = vpop.f32.mrf.mxu0
        %1753 = vmatprep.mubr.f32.mxu0 0.0
        %1754 = vmatmul.mubr.f32.gmra.mxu0 %v1575
        %v1755 = vpop.f32.mrf.mxu0
        %v1756 = vadd.f32 0.0, %v1755
        %v1757 = vpop.f32.mrf.mxu0
        %1758 = vmatprep.mubr.f32.mxu0 0.0
        %1759 = vmatmul.mubr.f32.gmra.mxu0 %v1578
        %v1760 = vpop.f32.mrf.mxu0
        %v1761 = vadd.f32 0.0, %v1760
        %v1762 = vpop.f32.mrf.mxu0
        %1763 = vmatprep.mubr.f32.mxu0 0.0
        %1764 = vmatmul.mubr.f32.gmra.mxu0 %v1581
        %v1765 = vpop.f32.mrf.mxu0
        %v1766 = vadd.f32 0.0, %v1765
        %v1767 = vpop.f32.mrf.mxu0
        %1768 = vmatprep.mubr.f32.mxu0 0.0
        %1769 = vmatmul.mubr.f32.gmra.mxu0 %v1584
        %v1770 = vpop.f32.mrf.mxu0
        %v1771 = vadd.f32 0.0, %v1770
        %v1772 = vpop.f32.mrf.mxu0
        %1773 = vmatprep.mubr.f32.mxu0 0.0
        %1774 = vmatmul.mubr.f32.gmra.mxu0 %v1587
        %v1775 = vpop.f32.mrf.mxu0
        %v1776 = vadd.f32 0.0, %v1775
        %v1777 = vpop.f32.mrf.mxu0
        %1778 = vmatprep.mubr.f32.mxu0 0.0
        %1779 = vmatmul.mubr.f32.gmra.mxu0 %v1590
        %v1780 = vpop.f32.mrf.mxu0
        %v1781 = vadd.f32 0.0, %v1780
        %v1782 = vpop.f32.mrf.mxu0
        %1783 = vmatprep.mubr.f32.mxu0 0.0
        %1784 = vmatmul.mubr.f32.gmra.mxu0 %v1593
        %v1785 = vpop.f32.mrf.mxu0
        %v1786 = vadd.f32 0.0, %v1785
        %v1787 = vpop.f32.mrf.mxu0
        %1788 = vmatprep.mubr.f32.mxu0 0.0
        %1789 = vmatmul.mubr.f32.gmra.mxu0 %v1596
        %v1790 = vpop.f32.mrf.mxu0
        %v1791 = vadd.f32 0.0, %v1790
        %v1792 = vpop.f32.mrf.mxu0
        %1793 = vmatprep.mubr.f32.mxu0 0.0
        %1794 = vmatmul.mubr.f32.gmra.mxu0 %v1599
        %v1795 = vpop.f32.mrf.mxu0
        %v1796 = vadd.f32 0.0, %v1795
        %v1797 = vpop.f32.mrf.mxu0
        %1798 = vmatprep.mubr.f32.mxu0 0.0
        %1799 = vmatmul.mubr.f32.gmra.mxu0 %v1602
        %v1800 = vpop.f32.mrf.mxu0
        %v1801 = vadd.f32 0.0, %v1800
        %v1802 = vpop.f32.mrf.mxu0
        %1803 = vmatprep.mubr.f32.mxu0 0.0
        %1804 = vmatmul.mubr.f32.gmra.mxu0 %v1605
        %v1805 = vpop.f32.mrf.mxu0
        %v1806 = vadd.f32 0.0, %v1805
        %v1807 = vpop.f32.mrf.mxu0
        %1808 = vmatprep.mubr.f32.mxu0 0.0
        %1809 = vmatmul.mubr.f32.gmra.mxu0 %v1608
        %v1810 = vpop.f32.mrf.mxu0
        %v1811 = vadd.f32 0.0, %v1810
        %v1812 = vpop.f32.mrf.mxu0
        %1813 = vmatprep.mubr.f32.mxu0 0.0
        %1814 = vmatmul.mubr.f32.gmra.mxu0 %v1611
        %v1815 = vpop.f32.mrf.mxu0
        %v1816 = vadd.f32 0.0, %v1815
        %v1817 = vpop.f32.mrf.mxu0
        %1818 = vmatprep.mubr.f32.mxu0 0.0
        %1819 = vmatmul.mubr.f32.gmra.mxu0 %v1614
        %v1820 = vpop.f32.mrf.mxu0
        %v1821 = vadd.f32 0.0, %v1820
        %v1822 = vpop.f32.mrf.mxu0
        %1823 = vmatprep.mubr.f32.mxu0 0.0
        %1824 = vmatmul.mubr.f32.gmra.mxu0 %v1617
        %v1825 = vpop.f32.mrf.mxu0
        %v1826 = vadd.f32 0.0, %v1825
        %v1827 = vpop.f32.mrf.mxu0
        %1828 = vmatprep.mubr.f32.mxu0 0.0
        %1829 = vmatmul.mubr.f32.gmra.mxu0 %v1620
        %v1830 = vpop.f32.mrf.mxu0
        %v1831 = vadd.f32 0.0, %v1830
        %v1832 = vpop.f32.mrf.mxu0
        %1833 = vmatprep.mubr.f32.mxu0 0.0
        %1834 = vmatmul.mubr.f32.gmra.mxu0 %v1623
        %v1835 = vpop.f32.mrf.mxu0
        %v1836 = vadd.f32 0.0, %v1835
        %v1837 = vpop.f32.mrf.mxu0
        %1838 = vmatprep.mubr.f32.mxu0 0.0
        %1839 = vmatmul.mubr.f32.gmra.mxu0 %v1626
        %v1840 = vpop.f32.mrf.mxu0
        %v1841 = vadd.f32 0.0, %v1840
        %v1842 = vpop.f32.mrf.mxu0
        %1843 = vmatprep.mubr.f32.mxu0 0.0
        %1844 = vmatmul.mubr.f32.gmra.mxu0 %v1629
        %v1845 = vpop.f32.mrf.mxu0
        %v1846 = vadd.f32 0.0, %v1845
        %v1847 = vpop.f32.mrf.mxu0
        %1848 = vmatprep.mubr.f32.mxu0 0.0
        %1849 = vmatmul.mubr.f32.gmra.mxu0 %v1632
        %v1850 = vpop.f32.mrf.mxu0
        %v1851 = vadd.f32 0.0, %v1850
        %v1852 = vpop.f32.mrf.mxu0
        %1853 = vmatprep.mubr.f32.mxu0 0.0
        %1854 = vmatmul.mubr.f32.gmra.mxu0 %v1635
        %v1855 = vpop.f32.mrf.mxu0
        %v1856 = vadd.f32 0.0, %v1855
        %v1857 = vpop.f32.mrf.mxu0
        %1858 = vmatprep.mubr.f32.mxu0 0.0
        %1859 = vmatmul.mubr.f32.gmra.mxu0 %v1638
        %v1860 = vpop.f32.mrf.mxu0
        %v1861 = vadd.f32 0.0, %v1860
        %v1862 = vpop.f32.mrf.mxu0
        %1863 = vmatprep.mubr.f32.mxu0 0.0
        %1864 = vmatmul.mubr.f32.gmra.mxu0 %v1641
        %v1865 = vpop.f32.mrf.mxu0
        %v1866 = vadd.f32 0.0, %v1865
        %v1867 = vpop.f32.mrf.mxu0
        %1868 = vmatprep.mubr.f32.mxu0 0.0
        %1869 = vmatmul.mubr.f32.gmra.mxu0 %v1644
        %v1870 = vpop.f32.mrf.mxu0
        %v1871 = vadd.f32 0.0, %v1870
        %v1872 = vpop.f32.mrf.mxu0
        %1873 = vmatprep.mubr.f32.mxu0 0.0
        %1874 = vmatmul.mubr.f32.gmra.mxu0 %v1647
        %v1875 = vpop.f32.mrf.mxu0
        %v1876 = vadd.f32 0.0, %v1875
        %v1877 = vpop.f32.mrf.mxu0
        %1878 = vmatprep.mubr.f32.mxu0 0.0
        %1879 = vmatmul.mubr.f32.gmra.mxu0 %v1650
        %v1880 = vpop.f32.mrf.mxu0
        %v1881 = vadd.f32 0.0, %v1880
        %v1882 = vpop.f32.mrf.mxu0
        %1883 = vmatprep.mubr.f32.mxu0 0.0
        %1884 = vmatmul.mubr.f32.gmra.mxu0 %v1653
        %v1885 = vpop.f32.mrf.mxu0
        %v1886 = vadd.f32 0.0, %v1885
        %v1887 = vpop.f32.mrf.mxu0
        %1888 = vmatprep.mubr.f32.mxu0 0.0
        %1889 = vmatmul.mubr.f32.gmra.mxu0 %v1656
        %v1890 = vpop.f32.mrf.mxu0
        %v1891 = vadd.f32 0.0, %v1890
        %v1892 = vpop.f32.mrf.mxu0
        %1893 = vmatprep.mubr.f32.mxu0 0.0
        %1894 = vmatmul.mubr.f32.gmra.mxu0 %v1659
        %v1895 = vpop.f32.mrf.mxu0
        %v1896 = vadd.f32 0.0, %v1895
        %v1897 = vpop.f32.mrf.mxu0
        %1898 = vmatprep.mubr.f32.mxu0 0.0
        %1899 = vmatmul.mubr.f32.gmra.mxu0 %v1662
        %v1900 = vpop.f32.mrf.mxu0
        %v1901 = vadd.f32 0.0, %v1900
        %v1902 = vpop.f32.mrf.mxu0
        %1903 = vmatprep.mubr.f32.mxu0 0.0
        %1904 = vmatmul.mubr.f32.gmra.mxu0 %v1665
        %v1905 = vpop.f32.mrf.mxu0
        %v1906 = vadd.f32 0.0, %v1905
        %v1907 = vpop.f32.mrf.mxu0
        %1908 = vmatprep.mubr.f32.mxu0 0.0
        %1909 = vmatmul.mubr.f32.gmra.mxu0 %v1668
        %v1910 = vpop.f32.mrf.mxu0
        %v1911 = vadd.f32 0.0, %v1910
        %v1912 = vpop.f32.mrf.mxu0
        %1913 = vmatprep.mubr.f32.mxu0 0.0
        %1914 = vmatmul.mubr.f32.gmra.mxu0 %v1671
        %v1915 = vpop.f32.mrf.mxu0
        %v1916 = vadd.f32 0.0, %v1915
        %v1917 = vpop.f32.mrf.mxu0
        %1918 = vmatprep.mubr.f32.mxu0 0.0
        %1919 = vmatmul.mubr.f32.gmra.mxu0 %v1674
        %v1920 = vpop.f32.mrf.mxu0
        %v1921 = vadd.f32 0.0, %v1920
        %v1922 = vpop.f32.mrf.mxu0
        %1923 = vdwg.mxu0
        %v1924 = vld [vmem:[%s177] sm:$0xff]
        %v1925 = vld [vmem:[%s177 + $0x8] sm:$0xff]
        %v1926 = vld [vmem:[%s177 + $0x10] sm:$0xff]
        %v1927 = vld [vmem:[%s177 + $0x18] sm:$0xff]
        %v1928 = vld [vmem:[%s177 + $0x20] sm:$0xff]
        %v1929 = vld [vmem:[%s177 + $0x28] sm:$0xff]
        %v1930 = vld [vmem:[%s177 + $0x30] sm:$0xff]
        %v1931 = vld [vmem:[%s177 + $0x38] sm:$0xff]
        %v1932 = vld [vmem:[%s177 + $0x40] sm:$0xff]
        %v1933 = vld [vmem:[%s177 + $0x48] sm:$0xff]
        %v1934 = vld [vmem:[%s177 + $0x50] sm:$0xff]
        %v1935 = vld [vmem:[%s177 + $0x58] sm:$0xff]
        %v1936 = vld [vmem:[%s177 + $0x60] sm:$0xff]
        %v1937 = vld [vmem:[%s177 + $0x68] sm:$0xff]
        %v1938 = vld [vmem:[%s177 + $0x70] sm:$0xff]
        %v1939 = vld [vmem:[%s177 + $0x78] sm:$0xff]
        %v1940 = vld [vmem:[%s177 + $0x80] sm:$0xff]
        %v1941 = vld [vmem:[%s177 + $0x88] sm:$0xff]
        %v1942 = vld [vmem:[%s177 + $0x90] sm:$0xff]
        %v1943 = vld [vmem:[%s177 + $0x98] sm:$0xff]
        %v1944 = vld [vmem:[%s177 + $0xa0] sm:$0xff]
        %v1945 = vld [vmem:[%s177 + $0xa8] sm:$0xff]
        %v1946 = vld [vmem:[%s177 + $0xb0] sm:$0xff]
        %v1947 = vld [vmem:[%s177 + $0xb8] sm:$0xff]
        %v1948 = vld [vmem:[%s177 + $0xc0] sm:$0xff]
        %v1949 = vld [vmem:[%s177 + $0xc8] sm:$0xff]
        %v1950 = vld [vmem:[%s177 + $0xd0] sm:$0xff]
        %v1951 = vld [vmem:[%s177 + $0xd8] sm:$0xff]
        %v1952 = vld [vmem:[%s177 + $0xe0] sm:$0xff]
        %v1953 = vld [vmem:[%s177 + $0xe8] sm:$0xff]
        %v1954 = vld [vmem:[%s177 + $0xf0] sm:$0xff]
        %v1955 = vld [vmem:[%s177 + $0xf8] sm:$0xff]
        %v1956 = vld [vmem:[%s177 + $0x100] sm:$0xff]
        %v1957 = vld [vmem:[%s177 + $0x108] sm:$0xff]
        %v1958 = vld [vmem:[%s177 + $0x110] sm:$0xff]
        %v1959 = vld [vmem:[%s177 + $0x118] sm:$0xff]
        %v1960 = vadd.f32 %v1924, %v1746
        %v1961 = vadd.f32 %v1925, %v1751
        %v1962 = vadd.f32 %v1926, %v1756
        %v1963 = vadd.f32 %v1927, %v1761
        %v1964 = vadd.f32 %v1928, %v1766
        %v1965 = vadd.f32 %v1929, %v1771
        %v1966 = vadd.f32 %v1930, %v1776
        %v1967 = vadd.f32 %v1931, %v1781
        %v1968 = vadd.f32 %v1932, %v1786
        %v1969 = vadd.f32 %v1933, %v1791
        %v1970 = vadd.f32 %v1934, %v1796
        %v1971 = vadd.f32 %v1935, %v1801
        %v1972 = vadd.f32 %v1936, %v1806
        %v1973 = vadd.f32 %v1937, %v1811
        %v1974 = vadd.f32 %v1938, %v1816
        %v1975 = vadd.f32 %v1939, %v1821
        %v1976 = vadd.f32 %v1940, %v1826
        %v1977 = vadd.f32 %v1941, %v1831
        %v1978 = vadd.f32 %v1942, %v1836
        %v1979 = vadd.f32 %v1943, %v1841
        %v1980 = vadd.f32 %v1944, %v1846
        %v1981 = vadd.f32 %v1945, %v1851
        %v1982 = vadd.f32 %v1946, %v1856
        %v1983 = vadd.f32 %v1947, %v1861
        %v1984 = vadd.f32 %v1948, %v1866
        %v1985 = vadd.f32 %v1949, %v1871
        %v1986 = vadd.f32 %v1950, %v1876
        %v1987 = vadd.f32 %v1951, %v1881
        %v1988 = vadd.f32 %v1952, %v1886
        %v1989 = vadd.f32 %v1953, %v1891
        %v1990 = vadd.f32 %v1954, %v1896
        %v1991 = vadd.f32 %v1955, %v1901
        %v1992 = vadd.f32 %v1956, %v1906
        %v1993 = vadd.f32 %v1957, %v1911
        %v1994 = vadd.f32 %v1958, %v1916
        %v1995 = vadd.f32 %v1959, %v1921
        %1996 = vst [vmem:[%s177] sm:$0xff] %v1960
        %1997 = vst [vmem:[%s177 + $0x8] sm:$0xff] %v1961
        %1998 = vst [vmem:[%s177 + $0x10] sm:$0xff] %v1962
        %1999 = vst [vmem:[%s177 + $0x18] sm:$0xff] %v1963
        %2000 = vst [vmem:[%s177 + $0x20] sm:$0xff] %v1964
        %2001 = vst [vmem:[%s177 + $0x28] sm:$0xff] %v1965
        %2002 = vst [vmem:[%s177 + $0x30] sm:$0xff] %v1966
        %2003 = vst [vmem:[%s177 + $0x38] sm:$0xff] %v1967
        %2004 = vst [vmem:[%s177 + $0x40] sm:$0xff] %v1968
        %2005 = vst [vmem:[%s177 + $0x48] sm:$0xff] %v1969
        %2006 = vst [vmem:[%s177 + $0x50] sm:$0xff] %v1970
        %2007 = vst [vmem:[%s177 + $0x58] sm:$0xff] %v1971
        %2008 = vst [vmem:[%s177 + $0x60] sm:$0xff] %v1972
        %2009 = vst [vmem:[%s177 + $0x68] sm:$0xff] %v1973
        %2010 = vst [vmem:[%s177 + $0x70] sm:$0xff] %v1974
        %2011 = vst [vmem:[%s177 + $0x78] sm:$0xff] %v1975
        %2012 = vst [vmem:[%s177 + $0x80] sm:$0xff] %v1976
        %2013 = vst [vmem:[%s177 + $0x88] sm:$0xff] %v1977
        %2014 = vst [vmem:[%s177 + $0x90] sm:$0xff] %v1978
        %2015 = vst [vmem:[%s177 + $0x98] sm:$0xff] %v1979
        %2016 = vst [vmem:[%s177 + $0xa0] sm:$0xff] %v1980
        %2017 = vst [vmem:[%s177 + $0xa8] sm:$0xff] %v1981
        %2018 = vst [vmem:[%s177 + $0xb0] sm:$0xff] %v1982
        %2019 = vst [vmem:[%s177 + $0xb8] sm:$0xff] %v1983
        %2020 = vst [vmem:[%s177 + $0xc0] sm:$0xff] %v1984
        %2021 = vst [vmem:[%s177 + $0xc8] sm:$0xff] %v1985
        %2022 = vst [vmem:[%s177 + $0xd0] sm:$0xff] %v1986
        %2023 = vst [vmem:[%s177 + $0xd8] sm:$0xff] %v1987
        %2024 = vst [vmem:[%s177 + $0xe0] sm:$0xff] %v1988
        %2025 = vst [vmem:[%s177 + $0xe8] sm:$0xff] %v1989
        %2026 = vst [vmem:[%s177 + $0xf0] sm:$0xff] %v1990
        %2027 = vst [vmem:[%s177 + $0xf8] sm:$0xff] %v1991
        %2028 = vst [vmem:[%s177 + $0x100] sm:$0xff] %v1992
        %2029 = vst [vmem:[%s177 + $0x108] sm:$0xff] %v1993
        %2030 = vst [vmem:[%s177 + $0x110] sm:$0xff] %v1994
        %2031 = vst [vmem:[%s177 + $0x118] sm:$0xff] %v1995
        %v2032 = vld [vmem:[#allocation2 + $0x12] sm:$0xff]
        %v2033 = vld [vmem:[#allocation2 + $0x1a] sm:$0xff]
        %v2034 = vld [vmem:[#allocation2 + $0x22] sm:$0xff]
        %v2035 = vld [vmem:[#allocation2 + $0x2a] sm:$0xff]
        %v2036 = vld [vmem:[#allocation2 + $0x32] sm:$0xff]
        %v2037 = vld [vmem:[#allocation2 + $0x3a] sm:$0xff]
        %v2038 = vld [vmem:[#allocation2 + $0x42] sm:$0xff]
        %v2039 = vld [vmem:[#allocation2 + $0x4a] sm:$0xff]
        %v2040 = vld [vmem:[#allocation2 + $0x52] sm:$0xff]
        %v2041 = vld [vmem:[#allocation2 + $0x5a] sm:$0xff]
        %v2042 = vld [vmem:[#allocation2 + $0x62] sm:$0xff]
        %v2043 = vld [vmem:[#allocation2 + $0x6a] sm:$0xff]
        %v2044 = vld [vmem:[#allocation2 + $0x72] sm:$0xff]
        %v2045 = vld [vmem:[#allocation2 + $0x7a] sm:$0xff]
        %v2046 = vld [vmem:[#allocation2 + $0x82] sm:$0xff]
        %v2047 = vld [vmem:[#allocation2 + $0x8a] sm:$0xff]
        %v2048 = vld [vmem:[#allocation2 + $0x92] sm:$0xff]
        %v2049 = vld [vmem:[#allocation2 + $0x9a] sm:$0xff]
        %v2050 = vld [vmem:[#allocation2 + $0xa2] sm:$0xff]
        %v2051 = vld [vmem:[#allocation2 + $0xaa] sm:$0xff]
        %v2052 = vld [vmem:[#allocation2 + $0xb2] sm:$0xff]
        %v2053 = vld [vmem:[#allocation2 + $0xba] sm:$0xff]
        %v2054 = vld [vmem:[#allocation2 + $0xc2] sm:$0xff]
        %v2055 = vld [vmem:[#allocation2 + $0xca] sm:$0xff]
        %v2056 = vld [vmem:[#allocation2 + $0xd2] sm:$0xff]
        %v2057 = vld [vmem:[#allocation2 + $0xda] sm:$0xff]
        %v2058 = vld [vmem:[#allocation2 + $0xe2] sm:$0xff]
        %v2059 = vld [vmem:[#allocation2 + $0xea] sm:$0xff]
        %v2060 = vld [vmem:[#allocation2 + $0xf2] sm:$0xff]
        %v2061 = vld [vmem:[#allocation2 + $0xfa] sm:$0xff]
        %v2062 = vld [vmem:[#allocation2 + $0x102] sm:$0xff]
        %v2063 = vld [vmem:[#allocation2 + $0x10a] sm:$0xff]
        %v2064 = vld [vmem:[#allocation2 + $0x112] sm:$0xff]
        %v2065 = vld [vmem:[#allocation2 + $0x11a] sm:$0xff]
        %v2066 = vld [vmem:[#allocation2 + $0x122] sm:$0xff]
        %v2067 = vld [vmem:[#allocation2 + $0x12a] sm:$0xff]
        %s2068 = scalar_lea.vmem %s1, 12
        %v2069 = vld [vmem:[%s2068] sm:$0xf]
        %v2071 = vsel %vm555, %v2032, 0
        %v2074 = vsel %vm555, %v2033, 0
        %v2077 = vsel %vm555, %v2034, 0
        %v2080 = vsel %vm555, %v2035, 0
        %v2083 = vsel %vm555, %v2036, 0
        %v2086 = vsel %vm555, %v2037, 0
        %v2089 = vsel %vm555, %v2038, 0
        %v2092 = vsel %vm555, %v2039, 0
        %v2095 = vsel %vm555, %v2040, 0
        %v2098 = vsel %vm555, %v2041, 0
        %v2101 = vsel %vm555, %v2042, 0
        %v2104 = vsel %vm555, %v2043, 0
        %v2107 = vsel %vm555, %v2044, 0
        %v2110 = vsel %vm555, %v2045, 0
        %v2113 = vsel %vm555, %v2046, 0
        %v2116 = vsel %vm555, %v2047, 0
        %v2119 = vsel %vm555, %v2048, 0
        %v2122 = vsel %vm555, %v2049, 0
        %v2125 = vsel %vm555, %v2050, 0
        %v2128 = vsel %vm555, %v2051, 0
        %v2131 = vsel %vm555, %v2052, 0
        %v2134 = vsel %vm555, %v2053, 0
        %v2137 = vsel %vm555, %v2054, 0
        %v2140 = vsel %vm555, %v2055, 0
        %v2143 = vsel %vm555, %v2056, 0
        %v2146 = vsel %vm555, %v2057, 0
        %v2149 = vsel %vm555, %v2058, 0
        %v2152 = vsel %vm555, %v2059, 0
        %v2155 = vsel %vm555, %v2060, 0
        %v2158 = vsel %vm555, %v2061, 0
        %v2161 = vsel %vm555, %v2062, 0
        %v2164 = vsel %vm555, %v2063, 0
        %v2167 = vsel %vm555, %v2064, 0
        %v2170 = vsel %vm555, %v2065, 0
        %v2173 = vsel %vm555, %v2066, 0
        %v2176 = vsel %vm555, %v2067, 0
        %v2179 = vsel %vm743, %v2069, 0
        %2181 = vmatprep.subr.mxu0 0.0
        %2182 = vmatpush1.msra.mxu0 0.0
        %2183 = vmatprep.subr.mxu0 0.0
        %2184 = vmatpush1.msra.mxu0 0.0
        %2185 = vmatprep.subr.mxu0 0.0
        %2186 = vmatpush1.msra.mxu0 0.0
        %2187 = vmatprep.subr.mxu0 0.0
        %2188 = vmatpush1.msra.mxu0 0.0
        %2189 = vmatprep.subr.mxu0 0.0
        %2190 = vmatpush1.msra.mxu0 0.0
        %2191 = vmatprep.subr.mxu0 0.0
        %2192 = vmatpush1.msra.mxu0 0.0
        %2193 = vmatprep.subr.mxu0 0.0
        %2194 = vmatpush1.msra.mxu0 0.0
        %2195 = vmatprep.subr.mxu0 0.0
        %2196 = vmatpush1.msra.mxu0 0.0
        %2197 = vmatprep.subr.mxu0 0.0
        %2198 = vmatpush1.msra.mxu0 0.0
        %2199 = vmatprep.subr.mxu0 0.0
        %2200 = vmatpush1.msra.mxu0 0.0
        %2201 = vmatprep.subr.mxu0 0.0
        %2202 = vmatpush1.msra.mxu0 0.0
        %2203 = vmatprep.subr.mxu0 0.0
        %2204 = vmatpush1.msra.mxu0 0.0
        %2205 = vmatprep.subr.mxu0 0.0
        %2206 = vmatpush1.msra.mxu0 0.0
        %2207 = vmatprep.subr.mxu0 0.0
        %2208 = vmatpush1.msra.mxu0 0.0
        %2209 = vmatprep.subr.mxu0 0.0
        %2210 = vmatpush1.msra.mxu0 0.0
        %2211 = vmatprep.subr.mxu0 0.0
        %2212 = vmatpush1.msra.mxu0 %v2179
        %2213 = vmatprep.subr.mxu0 0.0
        %2214 = vmatpush2.msra.mxu0 0.0
        %2215 = vmatprep.subr.mxu0 0.0
        %2216 = vmatpush2.msra.mxu0 0.0
        %2217 = vmatprep.subr.mxu0 0.0
        %2218 = vmatpush2.msra.mxu0 0.0
        %2219 = vmatprep.subr.mxu0 0.0
        %2220 = vmatpush2.msra.mxu0 0.0
        %2221 = vmatprep.subr.mxu0 0.0
        %2222 = vmatpush2.msra.mxu0 0.0
        %2223 = vmatprep.subr.mxu0 0.0
        %2224 = vmatpush2.msra.mxu0 0.0
        %2225 = vmatprep.subr.mxu0 0.0
        %2226 = vmatpush2.msra.mxu0 0.0
        %2227 = vmatprep.subr.mxu0 0.0
        %2228 = vmatpush2.msra.mxu0 0.0
        %2229 = vmatprep.subr.mxu0 0.0
        %2230 = vmatpush2.msra.mxu0 0.0
        %2231 = vmatprep.subr.mxu0 0.0
        %2232 = vmatpush2.msra.mxu0 0.0
        %2233 = vmatprep.subr.mxu0 0.0
        %2234 = vmatpush2.msra.mxu0 0.0
        %2235 = vmatprep.subr.mxu0 0.0
        %2236 = vmatpush2.msra.mxu0 0.0
        %2237 = vmatprep.subr.mxu0 0.0
        %2238 = vmatpush2.msra.mxu0 0.0
        %2239 = vmatprep.subr.mxu0 0.0
        %2240 = vmatpush2.msra.mxu0 0.0
        %2241 = vmatprep.subr.mxu0 0.0
        %2242 = vmatpush2.msra.mxu0 0.0
        %2243 = vmatprep.subr.mxu0 0.0
        %2244 = vmatpush2.msra.mxu0 0.0
        %2245 = vmatprep.mubr.f32.mxu0 0.0
        %2246 = vmatmul.mubr.f32.gmra.mxu0 %v2071
        %v2247 = vpop.f32.mrf.mxu0
        %v2248 = vadd.f32 0.0, %v2247
        %v2249 = vpop.f32.mrf.mxu0
        %2250 = vmatprep.mubr.f32.mxu0 0.0
        %2251 = vmatmul.mubr.f32.gmra.mxu0 %v2074
        %v2252 = vpop.f32.mrf.mxu0
        %v2253 = vadd.f32 0.0, %v2252
        %v2254 = vpop.f32.mrf.mxu0
        %2255 = vmatprep.mubr.f32.mxu0 0.0
        %2256 = vmatmul.mubr.f32.gmra.mxu0 %v2077
        %v2257 = vpop.f32.mrf.mxu0
        %v2258 = vadd.f32 0.0, %v2257
        %v2259 = vpop.f32.mrf.mxu0
        %2260 = vmatprep.mubr.f32.mxu0 0.0
        %2261 = vmatmul.mubr.f32.gmra.mxu0 %v2080
        %v2262 = vpop.f32.mrf.mxu0
        %v2263 = vadd.f32 0.0, %v2262
        %v2264 = vpop.f32.mrf.mxu0
        %2265 = vmatprep.mubr.f32.mxu0 0.0
        %2266 = vmatmul.mubr.f32.gmra.mxu0 %v2083
        %v2267 = vpop.f32.mrf.mxu0
        %v2268 = vadd.f32 0.0, %v2267
        %v2269 = vpop.f32.mrf.mxu0
        %2270 = vmatprep.mubr.f32.mxu0 0.0
        %2271 = vmatmul.mubr.f32.gmra.mxu0 %v2086
        %v2272 = vpop.f32.mrf.mxu0
        %v2273 = vadd.f32 0.0, %v2272
        %v2274 = vpop.f32.mrf.mxu0
        %2275 = vmatprep.mubr.f32.mxu0 0.0
        %2276 = vmatmul.mubr.f32.gmra.mxu0 %v2089
        %v2277 = vpop.f32.mrf.mxu0
        %v2278 = vadd.f32 0.0, %v2277
        %v2279 = vpop.f32.mrf.mxu0
        %2280 = vmatprep.mubr.f32.mxu0 0.0
        %2281 = vmatmul.mubr.f32.gmra.mxu0 %v2092
        %v2282 = vpop.f32.mrf.mxu0
        %v2283 = vadd.f32 0.0, %v2282
        %v2284 = vpop.f32.mrf.mxu0
        %2285 = vmatprep.mubr.f32.mxu0 0.0
        %2286 = vmatmul.mubr.f32.gmra.mxu0 %v2095
        %v2287 = vpop.f32.mrf.mxu0
        %v2288 = vadd.f32 0.0, %v2287
        %v2289 = vpop.f32.mrf.mxu0
        %2290 = vmatprep.mubr.f32.mxu0 0.0
        %2291 = vmatmul.mubr.f32.gmra.mxu0 %v2098
        %v2292 = vpop.f32.mrf.mxu0
        %v2293 = vadd.f32 0.0, %v2292
        %v2294 = vpop.f32.mrf.mxu0
        %2295 = vmatprep.mubr.f32.mxu0 0.0
        %2296 = vmatmul.mubr.f32.gmra.mxu0 %v2101
        %v2297 = vpop.f32.mrf.mxu0
        %v2298 = vadd.f32 0.0, %v2297
        %v2299 = vpop.f32.mrf.mxu0
        %2300 = vmatprep.mubr.f32.mxu0 0.0
        %2301 = vmatmul.mubr.f32.gmra.mxu0 %v2104
        %v2302 = vpop.f32.mrf.mxu0
        %v2303 = vadd.f32 0.0, %v2302
        %v2304 = vpop.f32.mrf.mxu0
        %2305 = vmatprep.mubr.f32.mxu0 0.0
        %2306 = vmatmul.mubr.f32.gmra.mxu0 %v2107
        %v2307 = vpop.f32.mrf.mxu0
        %v2308 = vadd.f32 0.0, %v2307
        %v2309 = vpop.f32.mrf.mxu0
        %2310 = vmatprep.mubr.f32.mxu0 0.0
        %2311 = vmatmul.mubr.f32.gmra.mxu0 %v2110
        %v2312 = vpop.f32.mrf.mxu0
        %v2313 = vadd.f32 0.0, %v2312
        %v2314 = vpop.f32.mrf.mxu0
        %2315 = vmatprep.mubr.f32.mxu0 0.0
        %2316 = vmatmul.mubr.f32.gmra.mxu0 %v2113
        %v2317 = vpop.f32.mrf.mxu0
        %v2318 = vadd.f32 0.0, %v2317
        %v2319 = vpop.f32.mrf.mxu0
        %2320 = vmatprep.mubr.f32.mxu0 0.0
        %2321 = vmatmul.mubr.f32.gmra.mxu0 %v2116
        %v2322 = vpop.f32.mrf.mxu0
        %v2323 = vadd.f32 0.0, %v2322
        %v2324 = vpop.f32.mrf.mxu0
        %2325 = vmatprep.mubr.f32.mxu0 0.0
        %2326 = vmatmul.mubr.f32.gmra.mxu0 %v2119
        %v2327 = vpop.f32.mrf.mxu0
        %v2328 = vadd.f32 0.0, %v2327
        %v2329 = vpop.f32.mrf.mxu0
        %2330 = vmatprep.mubr.f32.mxu0 0.0
        %2331 = vmatmul.mubr.f32.gmra.mxu0 %v2122
        %v2332 = vpop.f32.mrf.mxu0
        %v2333 = vadd.f32 0.0, %v2332
        %v2334 = vpop.f32.mrf.mxu0
        %2335 = vmatprep.mubr.f32.mxu0 0.0
        %2336 = vmatmul.mubr.f32.gmra.mxu0 %v2125
        %v2337 = vpop.f32.mrf.mxu0
        %v2338 = vadd.f32 0.0, %v2337
        %v2339 = vpop.f32.mrf.mxu0
        %2340 = vmatprep.mubr.f32.mxu0 0.0
        %2341 = vmatmul.mubr.f32.gmra.mxu0 %v2128
        %v2342 = vpop.f32.mrf.mxu0
        %v2343 = vadd.f32 0.0, %v2342
        %v2344 = vpop.f32.mrf.mxu0
        %2345 = vmatprep.mubr.f32.mxu0 0.0
        %2346 = vmatmul.mubr.f32.gmra.mxu0 %v2131
        %v2347 = vpop.f32.mrf.mxu0
        %v2348 = vadd.f32 0.0, %v2347
        %v2349 = vpop.f32.mrf.mxu0
        %2350 = vmatprep.mubr.f32.mxu0 0.0
        %2351 = vmatmul.mubr.f32.gmra.mxu0 %v2134
        %v2352 = vpop.f32.mrf.mxu0
        %v2353 = vadd.f32 0.0, %v2352
        %v2354 = vpop.f32.mrf.mxu0
        %2355 = vmatprep.mubr.f32.mxu0 0.0
        %2356 = vmatmul.mubr.f32.gmra.mxu0 %v2137
        %v2357 = vpop.f32.mrf.mxu0
        %v2358 = vadd.f32 0.0, %v2357
        %v2359 = vpop.f32.mrf.mxu0
        %2360 = vmatprep.mubr.f32.mxu0 0.0
        %2361 = vmatmul.mubr.f32.gmra.mxu0 %v2140
        %v2362 = vpop.f32.mrf.mxu0
        %v2363 = vadd.f32 0.0, %v2362
        %v2364 = vpop.f32.mrf.mxu0
        %2365 = vmatprep.mubr.f32.mxu0 0.0
        %2366 = vmatmul.mubr.f32.gmra.mxu0 %v2143
        %v2367 = vpop.f32.mrf.mxu0
        %v2368 = vadd.f32 0.0, %v2367
        %v2369 = vpop.f32.mrf.mxu0
        %2370 = vmatprep.mubr.f32.mxu0 0.0
        %2371 = vmatmul.mubr.f32.gmra.mxu0 %v2146
        %v2372 = vpop.f32.mrf.mxu0
        %v2373 = vadd.f32 0.0, %v2372
        %v2374 = vpop.f32.mrf.mxu0
        %2375 = vmatprep.mubr.f32.mxu0 0.0
        %2376 = vmatmul.mubr.f32.gmra.mxu0 %v2149
        %v2377 = vpop.f32.mrf.mxu0
        %v2378 = vadd.f32 0.0, %v2377
        %v2379 = vpop.f32.mrf.mxu0
        %2380 = vmatprep.mubr.f32.mxu0 0.0
        %2381 = vmatmul.mubr.f32.gmra.mxu0 %v2152
        %v2382 = vpop.f32.mrf.mxu0
        %v2383 = vadd.f32 0.0, %v2382
        %v2384 = vpop.f32.mrf.mxu0
        %2385 = vmatprep.mubr.f32.mxu0 0.0
        %2386 = vmatmul.mubr.f32.gmra.mxu0 %v2155
        %v2387 = vpop.f32.mrf.mxu0
        %v2388 = vadd.f32 0.0, %v2387
        %v2389 = vpop.f32.mrf.mxu0
        %2390 = vmatprep.mubr.f32.mxu0 0.0
        %2391 = vmatmul.mubr.f32.gmra.mxu0 %v2158
        %v2392 = vpop.f32.mrf.mxu0
        %v2393 = vadd.f32 0.0, %v2392
        %v2394 = vpop.f32.mrf.mxu0
        %2395 = vmatprep.mubr.f32.mxu0 0.0
        %2396 = vmatmul.mubr.f32.gmra.mxu0 %v2161
        %v2397 = vpop.f32.mrf.mxu0
        %v2398 = vadd.f32 0.0, %v2397
        %v2399 = vpop.f32.mrf.mxu0
        %2400 = vmatprep.mubr.f32.mxu0 0.0
        %2401 = vmatmul.mubr.f32.gmra.mxu0 %v2164
        %v2402 = vpop.f32.mrf.mxu0
        %v2403 = vadd.f32 0.0, %v2402
        %v2404 = vpop.f32.mrf.mxu0
        %2405 = vmatprep.mubr.f32.mxu0 0.0
        %2406 = vmatmul.mubr.f32.gmra.mxu0 %v2167
        %v2407 = vpop.f32.mrf.mxu0
        %v2408 = vadd.f32 0.0, %v2407
        %v2409 = vpop.f32.mrf.mxu0
        %2410 = vmatprep.mubr.f32.mxu0 0.0
        %2411 = vmatmul.mubr.f32.gmra.mxu0 %v2170
        %v2412 = vpop.f32.mrf.mxu0
        %v2413 = vadd.f32 0.0, %v2412
        %v2414 = vpop.f32.mrf.mxu0
        %2415 = vmatprep.mubr.f32.mxu0 0.0
        %2416 = vmatmul.mubr.f32.gmra.mxu0 %v2173
        %v2417 = vpop.f32.mrf.mxu0
        %v2418 = vadd.f32 0.0, %v2417
        %v2419 = vpop.f32.mrf.mxu0
        %2420 = vmatprep.mubr.f32.mxu0 0.0
        %2421 = vmatmul.mubr.f32.gmra.mxu0 %v2176
        %v2422 = vpop.f32.mrf.mxu0
        %v2423 = vadd.f32 0.0, %v2422
        %v2424 = vpop.f32.mrf.mxu0
        %2425 = vdwg.mxu0
        %v2426 = vld [vmem:[%s177] sm:$0xff]
        %v2427 = vld [vmem:[%s177 + $0x8] sm:$0xff]
        %v2428 = vld [vmem:[%s177 + $0x10] sm:$0xff]
        %v2429 = vld [vmem:[%s177 + $0x18] sm:$0xff]
        %v2430 = vld [vmem:[%s177 + $0x20] sm:$0xff]
        %v2431 = vld [vmem:[%s177 + $0x28] sm:$0xff]
        %v2432 = vld [vmem:[%s177 + $0x30] sm:$0xff]
        %v2433 = vld [vmem:[%s177 + $0x38] sm:$0xff]
        %v2434 = vld [vmem:[%s177 + $0x40] sm:$0xff]
        %v2435 = vld [vmem:[%s177 + $0x48] sm:$0xff]
        %v2436 = vld [vmem:[%s177 + $0x50] sm:$0xff]
        %v2437 = vld [vmem:[%s177 + $0x58] sm:$0xff]
        %v2438 = vld [vmem:[%s177 + $0x60] sm:$0xff]
        %v2439 = vld [vmem:[%s177 + $0x68] sm:$0xff]
        %v2440 = vld [vmem:[%s177 + $0x70] sm:$0xff]
        %v2441 = vld [vmem:[%s177 + $0x78] sm:$0xff]
        %v2442 = vld [vmem:[%s177 + $0x80] sm:$0xff]
        %v2443 = vld [vmem:[%s177 + $0x88] sm:$0xff]
        %v2444 = vld [vmem:[%s177 + $0x90] sm:$0xff]
        %v2445 = vld [vmem:[%s177 + $0x98] sm:$0xff]
        %v2446 = vld [vmem:[%s177 + $0xa0] sm:$0xff]
        %v2447 = vld [vmem:[%s177 + $0xa8] sm:$0xff]
        %v2448 = vld [vmem:[%s177 + $0xb0] sm:$0xff]
        %v2449 = vld [vmem:[%s177 + $0xb8] sm:$0xff]
        %v2450 = vld [vmem:[%s177 + $0xc0] sm:$0xff]
        %v2451 = vld [vmem:[%s177 + $0xc8] sm:$0xff]
        %v2452 = vld [vmem:[%s177 + $0xd0] sm:$0xff]
        %v2453 = vld [vmem:[%s177 + $0xd8] sm:$0xff]
        %v2454 = vld [vmem:[%s177 + $0xe0] sm:$0xff]
        %v2455 = vld [vmem:[%s177 + $0xe8] sm:$0xff]
        %v2456 = vld [vmem:[%s177 + $0xf0] sm:$0xff]
        %v2457 = vld [vmem:[%s177 + $0xf8] sm:$0xff]
        %v2458 = vld [vmem:[%s177 + $0x100] sm:$0xff]
        %v2459 = vld [vmem:[%s177 + $0x108] sm:$0xff]
        %v2460 = vld [vmem:[%s177 + $0x110] sm:$0xff]
        %v2461 = vld [vmem:[%s177 + $0x118] sm:$0xff]
        %v2462 = vadd.f32 %v2426, %v2248
        %v2463 = vadd.f32 %v2427, %v2253
        %v2464 = vadd.f32 %v2428, %v2258
        %v2465 = vadd.f32 %v2429, %v2263
        %v2466 = vadd.f32 %v2430, %v2268
        %v2467 = vadd.f32 %v2431, %v2273
        %v2468 = vadd.f32 %v2432, %v2278
        %v2469 = vadd.f32 %v2433, %v2283
        %v2470 = vadd.f32 %v2434, %v2288
        %v2471 = vadd.f32 %v2435, %v2293
        %v2472 = vadd.f32 %v2436, %v2298
        %v2473 = vadd.f32 %v2437, %v2303
        %v2474 = vadd.f32 %v2438, %v2308
        %v2475 = vadd.f32 %v2439, %v2313
        %v2476 = vadd.f32 %v2440, %v2318
        %v2477 = vadd.f32 %v2441, %v2323
        %v2478 = vadd.f32 %v2442, %v2328
        %v2479 = vadd.f32 %v2443, %v2333
        %v2480 = vadd.f32 %v2444, %v2338
        %v2481 = vadd.f32 %v2445, %v2343
        %v2482 = vadd.f32 %v2446, %v2348
        %v2483 = vadd.f32 %v2447, %v2353
        %v2484 = vadd.f32 %v2448, %v2358
        %v2485 = vadd.f32 %v2449, %v2363
        %v2486 = vadd.f32 %v2450, %v2368
        %v2487 = vadd.f32 %v2451, %v2373
        %v2488 = vadd.f32 %v2452, %v2378
        %v2489 = vadd.f32 %v2453, %v2383
        %v2490 = vadd.f32 %v2454, %v2388
        %v2491 = vadd.f32 %v2455, %v2393
        %v2492 = vadd.f32 %v2456, %v2398
        %v2493 = vadd.f32 %v2457, %v2403
        %v2494 = vadd.f32 %v2458, %v2408
        %v2495 = vadd.f32 %v2459, %v2413
        %v2496 = vadd.f32 %v2460, %v2418
        %v2497 = vadd.f32 %v2461, %v2423
        %2498 = vst [vmem:[%s177] sm:$0xff] %v2462
        %2499 = vst [vmem:[%s177 + $0x8] sm:$0xff] %v2463
        %2500 = vst [vmem:[%s177 + $0x10] sm:$0xff] %v2464
        %2501 = vst [vmem:[%s177 + $0x18] sm:$0xff] %v2465
        %2502 = vst [vmem:[%s177 + $0x20] sm:$0xff] %v2466
        %2503 = vst [vmem:[%s177 + $0x28] sm:$0xff] %v2467
        %2504 = vst [vmem:[%s177 + $0x30] sm:$0xff] %v2468
        %2505 = vst [vmem:[%s177 + $0x38] sm:$0xff] %v2469
        %2506 = vst [vmem:[%s177 + $0x40] sm:$0xff] %v2470
        %2507 = vst [vmem:[%s177 + $0x48] sm:$0xff] %v2471
        %2508 = vst [vmem:[%s177 + $0x50] sm:$0xff] %v2472
        %2509 = vst [vmem:[%s177 + $0x58] sm:$0xff] %v2473
        %2510 = vst [vmem:[%s177 + $0x60] sm:$0xff] %v2474
        %2511 = vst [vmem:[%s177 + $0x68] sm:$0xff] %v2475
        %2512 = vst [vmem:[%s177 + $0x70] sm:$0xff] %v2476
        %2513 = vst [vmem:[%s177 + $0x78] sm:$0xff] %v2477
        %2514 = vst [vmem:[%s177 + $0x80] sm:$0xff] %v2478
        %2515 = vst [vmem:[%s177 + $0x88] sm:$0xff] %v2479
        %2516 = vst [vmem:[%s177 + $0x90] sm:$0xff] %v2480
        %2517 = vst [vmem:[%s177 + $0x98] sm:$0xff] %v2481
        %2518 = vst [vmem:[%s177 + $0xa0] sm:$0xff] %v2482
        %2519 = vst [vmem:[%s177 + $0xa8] sm:$0xff] %v2483
        %2520 = vst [vmem:[%s177 + $0xb0] sm:$0xff] %v2484
        %2521 = vst [vmem:[%s177 + $0xb8] sm:$0xff] %v2485
        %2522 = vst [vmem:[%s177 + $0xc0] sm:$0xff] %v2486
        %2523 = vst [vmem:[%s177 + $0xc8] sm:$0xff] %v2487
        %2524 = vst [vmem:[%s177 + $0xd0] sm:$0xff] %v2488
        %2525 = vst [vmem:[%s177 + $0xd8] sm:$0xff] %v2489
        %2526 = vst [vmem:[%s177 + $0xe0] sm:$0xff] %v2490
        %2527 = vst [vmem:[%s177 + $0xe8] sm:$0xff] %v2491
        %2528 = vst [vmem:[%s177 + $0xf0] sm:$0xff] %v2492
        %2529 = vst [vmem:[%s177 + $0xf8] sm:$0xff] %v2493
        %2530 = vst [vmem:[%s177 + $0x100] sm:$0xff] %v2494
        %2531 = vst [vmem:[%s177 + $0x108] sm:$0xff] %v2495
        %2532 = vst [vmem:[%s177 + $0x110] sm:$0xff] %v2496
        %2533 = vst [vmem:[%s177 + $0x118] sm:$0xff] %v2497
        %v2534 = vld [vmem:[#allocation2 + $0x13] sm:$0xff]
        %v2535 = vld [vmem:[#allocation2 + $0x1b] sm:$0xff]
        %v2536 = vld [vmem:[#allocation2 + $0x23] sm:$0xff]
        %v2537 = vld [vmem:[#allocation2 + $0x2b] sm:$0xff]
        %v2538 = vld [vmem:[#allocation2 + $0x33] sm:$0xff]
        %v2539 = vld [vmem:[#allocation2 + $0x3b] sm:$0xff]
        %v2540 = vld [vmem:[#allocation2 + $0x43] sm:$0xff]
        %v2541 = vld [vmem:[#allocation2 + $0x4b] sm:$0xff]
        %v2542 = vld [vmem:[#allocation2 + $0x53] sm:$0xff]
        %v2543 = vld [vmem:[#allocation2 + $0x5b] sm:$0xff]
        %v2544 = vld [vmem:[#allocation2 + $0x63] sm:$0xff]
        %v2545 = vld [vmem:[#allocation2 + $0x6b] sm:$0xff]
        %v2546 = vld [vmem:[#allocation2 + $0x73] sm:$0xff]
        %v2547 = vld [vmem:[#allocation2 + $0x7b] sm:$0xff]
        %v2548 = vld [vmem:[#allocation2 + $0x83] sm:$0xff]
        %v2549 = vld [vmem:[#allocation2 + $0x8b] sm:$0xff]
        %v2550 = vld [vmem:[#allocation2 + $0x93] sm:$0xff]
        %v2551 = vld [vmem:[#allocation2 + $0x9b] sm:$0xff]
        %v2552 = vld [vmem:[#allocation2 + $0xa3] sm:$0xff]
        %v2553 = vld [vmem:[#allocation2 + $0xab] sm:$0xff]
        %v2554 = vld [vmem:[#allocation2 + $0xb3] sm:$0xff]
        %v2555 = vld [vmem:[#allocation2 + $0xbb] sm:$0xff]
        %v2556 = vld [vmem:[#allocation2 + $0xc3] sm:$0xff]
        %v2557 = vld [vmem:[#allocation2 + $0xcb] sm:$0xff]
        %v2558 = vld [vmem:[#allocation2 + $0xd3] sm:$0xff]
        %v2559 = vld [vmem:[#allocation2 + $0xdb] sm:$0xff]
        %v2560 = vld [vmem:[#allocation2 + $0xe3] sm:$0xff]
        %v2561 = vld [vmem:[#allocation2 + $0xeb] sm:$0xff]
        %v2562 = vld [vmem:[#allocation2 + $0xf3] sm:$0xff]
        %v2563 = vld [vmem:[#allocation2 + $0xfb] sm:$0xff]
        %v2564 = vld [vmem:[#allocation2 + $0x103] sm:$0xff]
        %v2565 = vld [vmem:[#allocation2 + $0x10b] sm:$0xff]
        %v2566 = vld [vmem:[#allocation2 + $0x113] sm:$0xff]
        %v2567 = vld [vmem:[#allocation2 + $0x11b] sm:$0xff]
        %v2568 = vld [vmem:[#allocation2 + $0x123] sm:$0xff]
        %v2569 = vld [vmem:[#allocation2 + $0x12b] sm:$0xff]
        %s2570 = scalar_lea.vmem %s1, 16
        %v2571 = vld [vmem:[%s2570] sm:$0xf]
        %v2573 = vsel %vm555, %v2534, 0
        %v2576 = vsel %vm555, %v2535, 0
        %v2579 = vsel %vm555, %v2536, 0
        %v2582 = vsel %vm555, %v2537, 0
        %v2585 = vsel %vm555, %v2538, 0
        %v2588 = vsel %vm555, %v2539, 0
        %v2591 = vsel %vm555, %v2540, 0
        %v2594 = vsel %vm555, %v2541, 0
        %v2597 = vsel %vm555, %v2542, 0
        %v2600 = vsel %vm555, %v2543, 0
        %v2603 = vsel %vm555, %v2544, 0
        %v2606 = vsel %vm555, %v2545, 0
        %v2609 = vsel %vm555, %v2546, 0
        %v2612 = vsel %vm555, %v2547, 0
        %v2615 = vsel %vm555, %v2548, 0
        %v2618 = vsel %vm555, %v2549, 0
        %v2621 = vsel %vm555, %v2550, 0
        %v2624 = vsel %vm555, %v2551, 0
        %v2627 = vsel %vm555, %v2552, 0
        %v2630 = vsel %vm555, %v2553, 0
        %v2633 = vsel %vm555, %v2554, 0
        %v2636 = vsel %vm555, %v2555, 0
        %v2639 = vsel %vm555, %v2556, 0
        %v2642 = vsel %vm555, %v2557, 0
        %v2645 = vsel %vm555, %v2558, 0
        %v2648 = vsel %vm555, %v2559, 0
        %v2651 = vsel %vm555, %v2560, 0
        %v2654 = vsel %vm555, %v2561, 0
        %v2657 = vsel %vm555, %v2562, 0
        %v2660 = vsel %vm555, %v2563, 0
        %v2663 = vsel %vm555, %v2564, 0
        %v2666 = vsel %vm555, %v2565, 0
        %v2669 = vsel %vm555, %v2566, 0
        %v2672 = vsel %vm555, %v2567, 0
        %v2675 = vsel %vm555, %v2568, 0
        %v2678 = vsel %vm555, %v2569, 0
        %v2681 = vsel %vm743, %v2571, 0
        %2683 = vmatprep.subr.mxu0 0.0
        %2684 = vmatpush1.msra.mxu0 0.0
        %2685 = vmatprep.subr.mxu0 0.0
        %2686 = vmatpush1.msra.mxu0 0.0
        %2687 = vmatprep.subr.mxu0 0.0
        %2688 = vmatpush1.msra.mxu0 0.0
        %2689 = vmatprep.subr.mxu0 0.0
        %2690 = vmatpush1.msra.mxu0 0.0
        %2691 = vmatprep.subr.mxu0 0.0
        %2692 = vmatpush1.msra.mxu0 0.0
        %2693 = vmatprep.subr.mxu0 0.0
        %2694 = vmatpush1.msra.mxu0 0.0
        %2695 = vmatprep.subr.mxu0 0.0
        %2696 = vmatpush1.msra.mxu0 0.0
        %2697 = vmatprep.subr.mxu0 0.0
        %2698 = vmatpush1.msra.mxu0 0.0
        %2699 = vmatprep.subr.mxu0 0.0
        %2700 = vmatpush1.msra.mxu0 0.0
        %2701 = vmatprep.subr.mxu0 0.0
        %2702 = vmatpush1.msra.mxu0 0.0
        %2703 = vmatprep.subr.mxu0 0.0
        %2704 = vmatpush1.msra.mxu0 0.0
        %2705 = vmatprep.subr.mxu0 0.0
        %2706 = vmatpush1.msra.mxu0 0.0
        %2707 = vmatprep.subr.mxu0 0.0
        %2708 = vmatpush1.msra.mxu0 0.0
        %2709 = vmatprep.subr.mxu0 0.0
        %2710 = vmatpush1.msra.mxu0 0.0
        %2711 = vmatprep.subr.mxu0 0.0
        %2712 = vmatpush1.msra.mxu0 0.0
        %2713 = vmatprep.subr.mxu0 0.0
        %2714 = vmatpush1.msra.mxu0 %v2681
        %2715 = vmatprep.subr.mxu0 0.0
        %2716 = vmatpush2.msra.mxu0 0.0
        %2717 = vmatprep.subr.mxu0 0.0
        %2718 = vmatpush2.msra.mxu0 0.0
        %2719 = vmatprep.subr.mxu0 0.0
        %2720 = vmatpush2.msra.mxu0 0.0
        %2721 = vmatprep.subr.mxu0 0.0
        %2722 = vmatpush2.msra.mxu0 0.0
        %2723 = vmatprep.subr.mxu0 0.0
        %2724 = vmatpush2.msra.mxu0 0.0
        %2725 = vmatprep.subr.mxu0 0.0
        %2726 = vmatpush2.msra.mxu0 0.0
        %2727 = vmatprep.subr.mxu0 0.0
        %2728 = vmatpush2.msra.mxu0 0.0
        %2729 = vmatprep.subr.mxu0 0.0
        %2730 = vmatpush2.msra.mxu0 0.0
        %2731 = vmatprep.subr.mxu0 0.0
        %2732 = vmatpush2.msra.mxu0 0.0
        %2733 = vmatprep.subr.mxu0 0.0
        %2734 = vmatpush2.msra.mxu0 0.0
        %2735 = vmatprep.subr.mxu0 0.0
        %2736 = vmatpush2.msra.mxu0 0.0
        %2737 = vmatprep.subr.mxu0 0.0
        %2738 = vmatpush2.msra.mxu0 0.0
        %2739 = vmatprep.subr.mxu0 0.0
        %2740 = vmatpush2.msra.mxu0 0.0
        %2741 = vmatprep.subr.mxu0 0.0
        %2742 = vmatpush2.msra.mxu0 0.0
        %2743 = vmatprep.subr.mxu0 0.0
        %2744 = vmatpush2.msra.mxu0 0.0
        %2745 = vmatprep.subr.mxu0 0.0
        %2746 = vmatpush2.msra.mxu0 0.0
        %2747 = vmatprep.mubr.f32.mxu0 0.0
        %2748 = vmatmul.mubr.f32.gmra.mxu0 %v2573
        %v2749 = vpop.f32.mrf.mxu0
        %v2750 = vadd.f32 0.0, %v2749
        %v2751 = vpop.f32.mrf.mxu0
        %2752 = vmatprep.mubr.f32.mxu0 0.0
        %2753 = vmatmul.mubr.f32.gmra.mxu0 %v2576
        %v2754 = vpop.f32.mrf.mxu0
        %v2755 = vadd.f32 0.0, %v2754
        %v2756 = vpop.f32.mrf.mxu0
        %2757 = vmatprep.mubr.f32.mxu0 0.0
        %2758 = vmatmul.mubr.f32.gmra.mxu0 %v2579
        %v2759 = vpop.f32.mrf.mxu0
        %v2760 = vadd.f32 0.0, %v2759
        %v2761 = vpop.f32.mrf.mxu0
        %2762 = vmatprep.mubr.f32.mxu0 0.0
        %2763 = vmatmul.mubr.f32.gmra.mxu0 %v2582
        %v2764 = vpop.f32.mrf.mxu0
        %v2765 = vadd.f32 0.0, %v2764
        %v2766 = vpop.f32.mrf.mxu0
        %2767 = vmatprep.mubr.f32.mxu0 0.0
        %2768 = vmatmul.mubr.f32.gmra.mxu0 %v2585
        %v2769 = vpop.f32.mrf.mxu0
        %v2770 = vadd.f32 0.0, %v2769
        %v2771 = vpop.f32.mrf.mxu0
        %2772 = vmatprep.mubr.f32.mxu0 0.0
        %2773 = vmatmul.mubr.f32.gmra.mxu0 %v2588
        %v2774 = vpop.f32.mrf.mxu0
        %v2775 = vadd.f32 0.0, %v2774
        %v2776 = vpop.f32.mrf.mxu0
        %2777 = vmatprep.mubr.f32.mxu0 0.0
        %2778 = vmatmul.mubr.f32.gmra.mxu0 %v2591
        %v2779 = vpop.f32.mrf.mxu0
        %v2780 = vadd.f32 0.0, %v2779
        %v2781 = vpop.f32.mrf.mxu0
        %2782 = vmatprep.mubr.f32.mxu0 0.0
        %2783 = vmatmul.mubr.f32.gmra.mxu0 %v2594
        %v2784 = vpop.f32.mrf.mxu0
        %v2785 = vadd.f32 0.0, %v2784
        %v2786 = vpop.f32.mrf.mxu0
        %2787 = vmatprep.mubr.f32.mxu0 0.0
        %2788 = vmatmul.mubr.f32.gmra.mxu0 %v2597
        %v2789 = vpop.f32.mrf.mxu0
        %v2790 = vadd.f32 0.0, %v2789
        %v2791 = vpop.f32.mrf.mxu0
        %2792 = vmatprep.mubr.f32.mxu0 0.0
        %2793 = vmatmul.mubr.f32.gmra.mxu0 %v2600
        %v2794 = vpop.f32.mrf.mxu0
        %v2795 = vadd.f32 0.0, %v2794
        %v2796 = vpop.f32.mrf.mxu0
        %2797 = vmatprep.mubr.f32.mxu0 0.0
        %2798 = vmatmul.mubr.f32.gmra.mxu0 %v2603
        %v2799 = vpop.f32.mrf.mxu0
        %v2800 = vadd.f32 0.0, %v2799
        %v2801 = vpop.f32.mrf.mxu0
        %2802 = vmatprep.mubr.f32.mxu0 0.0
        %2803 = vmatmul.mubr.f32.gmra.mxu0 %v2606
        %v2804 = vpop.f32.mrf.mxu0
        %v2805 = vadd.f32 0.0, %v2804
        %v2806 = vpop.f32.mrf.mxu0
        %2807 = vmatprep.mubr.f32.mxu0 0.0
        %2808 = vmatmul.mubr.f32.gmra.mxu0 %v2609
        %v2809 = vpop.f32.mrf.mxu0
        %v2810 = vadd.f32 0.0, %v2809
        %v2811 = vpop.f32.mrf.mxu0
        %2812 = vmatprep.mubr.f32.mxu0 0.0
        %2813 = vmatmul.mubr.f32.gmra.mxu0 %v2612
        %v2814 = vpop.f32.mrf.mxu0
        %v2815 = vadd.f32 0.0, %v2814
        %v2816 = vpop.f32.mrf.mxu0
        %2817 = vmatprep.mubr.f32.mxu0 0.0
        %2818 = vmatmul.mubr.f32.gmra.mxu0 %v2615
        %v2819 = vpop.f32.mrf.mxu0
        %v2820 = vadd.f32 0.0, %v2819
        %v2821 = vpop.f32.mrf.mxu0
        %2822 = vmatprep.mubr.f32.mxu0 0.0
        %2823 = vmatmul.mubr.f32.gmra.mxu0 %v2618
        %v2824 = vpop.f32.mrf.mxu0
        %v2825 = vadd.f32 0.0, %v2824
        %v2826 = vpop.f32.mrf.mxu0
        %2827 = vmatprep.mubr.f32.mxu0 0.0
        %2828 = vmatmul.mubr.f32.gmra.mxu0 %v2621
        %v2829 = vpop.f32.mrf.mxu0
        %v2830 = vadd.f32 0.0, %v2829
        %v2831 = vpop.f32.mrf.mxu0
        %2832 = vmatprep.mubr.f32.mxu0 0.0
        %2833 = vmatmul.mubr.f32.gmra.mxu0 %v2624
        %v2834 = vpop.f32.mrf.mxu0
        %v2835 = vadd.f32 0.0, %v2834
        %v2836 = vpop.f32.mrf.mxu0
        %2837 = vmatprep.mubr.f32.mxu0 0.0
        %2838 = vmatmul.mubr.f32.gmra.mxu0 %v2627
        %v2839 = vpop.f32.mrf.mxu0
        %v2840 = vadd.f32 0.0, %v2839
        %v2841 = vpop.f32.mrf.mxu0
        %2842 = vmatprep.mubr.f32.mxu0 0.0
        %2843 = vmatmul.mubr.f32.gmra.mxu0 %v2630
        %v2844 = vpop.f32.mrf.mxu0
        %v2845 = vadd.f32 0.0, %v2844
        %v2846 = vpop.f32.mrf.mxu0
        %2847 = vmatprep.mubr.f32.mxu0 0.0
        %2848 = vmatmul.mubr.f32.gmra.mxu0 %v2633
        %v2849 = vpop.f32.mrf.mxu0
        %v2850 = vadd.f32 0.0, %v2849
        %v2851 = vpop.f32.mrf.mxu0
        %2852 = vmatprep.mubr.f32.mxu0 0.0
        %2853 = vmatmul.mubr.f32.gmra.mxu0 %v2636
        %v2854 = vpop.f32.mrf.mxu0
        %v2855 = vadd.f32 0.0, %v2854
        %v2856 = vpop.f32.mrf.mxu0
        %2857 = vmatprep.mubr.f32.mxu0 0.0
        %2858 = vmatmul.mubr.f32.gmra.mxu0 %v2639
        %v2859 = vpop.f32.mrf.mxu0
        %v2860 = vadd.f32 0.0, %v2859
        %v2861 = vpop.f32.mrf.mxu0
        %2862 = vmatprep.mubr.f32.mxu0 0.0
        %2863 = vmatmul.mubr.f32.gmra.mxu0 %v2642
        %v2864 = vpop.f32.mrf.mxu0
        %v2865 = vadd.f32 0.0, %v2864
        %v2866 = vpop.f32.mrf.mxu0
        %2867 = vmatprep.mubr.f32.mxu0 0.0
        %2868 = vmatmul.mubr.f32.gmra.mxu0 %v2645
        %v2869 = vpop.f32.mrf.mxu0
        %v2870 = vadd.f32 0.0, %v2869
        %v2871 = vpop.f32.mrf.mxu0
        %2872 = vmatprep.mubr.f32.mxu0 0.0
        %2873 = vmatmul.mubr.f32.gmra.mxu0 %v2648
        %v2874 = vpop.f32.mrf.mxu0
        %v2875 = vadd.f32 0.0, %v2874
        %v2876 = vpop.f32.mrf.mxu0
        %2877 = vmatprep.mubr.f32.mxu0 0.0
        %2878 = vmatmul.mubr.f32.gmra.mxu0 %v2651
        %v2879 = vpop.f32.mrf.mxu0
        %v2880 = vadd.f32 0.0, %v2879
        %v2881 = vpop.f32.mrf.mxu0
        %2882 = vmatprep.mubr.f32.mxu0 0.0
        %2883 = vmatmul.mubr.f32.gmra.mxu0 %v2654
        %v2884 = vpop.f32.mrf.mxu0
        %v2885 = vadd.f32 0.0, %v2884
        %v2886 = vpop.f32.mrf.mxu0
        %2887 = vmatprep.mubr.f32.mxu0 0.0
        %2888 = vmatmul.mubr.f32.gmra.mxu0 %v2657
        %v2889 = vpop.f32.mrf.mxu0
        %v2890 = vadd.f32 0.0, %v2889
        %v2891 = vpop.f32.mrf.mxu0
        %2892 = vmatprep.mubr.f32.mxu0 0.0
        %2893 = vmatmul.mubr.f32.gmra.mxu0 %v2660
        %v2894 = vpop.f32.mrf.mxu0
        %v2895 = vadd.f32 0.0, %v2894
        %v2896 = vpop.f32.mrf.mxu0
        %2897 = vmatprep.mubr.f32.mxu0 0.0
        %2898 = vmatmul.mubr.f32.gmra.mxu0 %v2663
        %v2899 = vpop.f32.mrf.mxu0
        %v2900 = vadd.f32 0.0, %v2899
        %v2901 = vpop.f32.mrf.mxu0
        %2902 = vmatprep.mubr.f32.mxu0 0.0
        %2903 = vmatmul.mubr.f32.gmra.mxu0 %v2666
        %v2904 = vpop.f32.mrf.mxu0
        %v2905 = vadd.f32 0.0, %v2904
        %v2906 = vpop.f32.mrf.mxu0
        %2907 = vmatprep.mubr.f32.mxu0 0.0
        %2908 = vmatmul.mubr.f32.gmra.mxu0 %v2669
        %v2909 = vpop.f32.mrf.mxu0
        %v2910 = vadd.f32 0.0, %v2909
        %v2911 = vpop.f32.mrf.mxu0
        %2912 = vmatprep.mubr.f32.mxu0 0.0
        %2913 = vmatmul.mubr.f32.gmra.mxu0 %v2672
        %v2914 = vpop.f32.mrf.mxu0
        %v2915 = vadd.f32 0.0, %v2914
        %v2916 = vpop.f32.mrf.mxu0
        %2917 = vmatprep.mubr.f32.mxu0 0.0
        %2918 = vmatmul.mubr.f32.gmra.mxu0 %v2675
        %v2919 = vpop.f32.mrf.mxu0
        %v2920 = vadd.f32 0.0, %v2919
        %v2921 = vpop.f32.mrf.mxu0
        %2922 = vmatprep.mubr.f32.mxu0 0.0
        %2923 = vmatmul.mubr.f32.gmra.mxu0 %v2678
        %v2924 = vpop.f32.mrf.mxu0
        %v2925 = vadd.f32 0.0, %v2924
        %v2926 = vpop.f32.mrf.mxu0
        %2927 = vdwg.mxu0
        %v2928 = vld [vmem:[%s177] sm:$0xff]
        %v2929 = vld [vmem:[%s177 + $0x8] sm:$0xff]
        %v2930 = vld [vmem:[%s177 + $0x10] sm:$0xff]
        %v2931 = vld [vmem:[%s177 + $0x18] sm:$0xff]
        %v2932 = vld [vmem:[%s177 + $0x20] sm:$0xff]
        %v2933 = vld [vmem:[%s177 + $0x28] sm:$0xff]
        %v2934 = vld [vmem:[%s177 + $0x30] sm:$0xff]
        %v2935 = vld [vmem:[%s177 + $0x38] sm:$0xff]
        %v2936 = vld [vmem:[%s177 + $0x40] sm:$0xff]
        %v2937 = vld [vmem:[%s177 + $0x48] sm:$0xff]
        %v2938 = vld [vmem:[%s177 + $0x50] sm:$0xff]
        %v2939 = vld [vmem:[%s177 + $0x58] sm:$0xff]
        %v2940 = vld [vmem:[%s177 + $0x60] sm:$0xff]
        %v2941 = vld [vmem:[%s177 + $0x68] sm:$0xff]
        %v2942 = vld [vmem:[%s177 + $0x70] sm:$0xff]
        %v2943 = vld [vmem:[%s177 + $0x78] sm:$0xff]
        %v2944 = vld [vmem:[%s177 + $0x80] sm:$0xff]
        %v2945 = vld [vmem:[%s177 + $0x88] sm:$0xff]
        %v2946 = vld [vmem:[%s177 + $0x90] sm:$0xff]
        %v2947 = vld [vmem:[%s177 + $0x98] sm:$0xff]
        %v2948 = vld [vmem:[%s177 + $0xa0] sm:$0xff]
        %v2949 = vld [vmem:[%s177 + $0xa8] sm:$0xff]
        %v2950 = vld [vmem:[%s177 + $0xb0] sm:$0xff]
        %v2951 = vld [vmem:[%s177 + $0xb8] sm:$0xff]
        %v2952 = vld [vmem:[%s177 + $0xc0] sm:$0xff]
        %v2953 = vld [vmem:[%s177 + $0xc8] sm:$0xff]
        %v2954 = vld [vmem:[%s177 + $0xd0] sm:$0xff]
        %v2955 = vld [vmem:[%s177 + $0xd8] sm:$0xff]
        %v2956 = vld [vmem:[%s177 + $0xe0] sm:$0xff]
        %v2957 = vld [vmem:[%s177 + $0xe8] sm:$0xff]
        %v2958 = vld [vmem:[%s177 + $0xf0] sm:$0xff]
        %v2959 = vld [vmem:[%s177 + $0xf8] sm:$0xff]
        %v2960 = vld [vmem:[%s177 + $0x100] sm:$0xff]
        %v2961 = vld [vmem:[%s177 + $0x108] sm:$0xff]
        %v2962 = vld [vmem:[%s177 + $0x110] sm:$0xff]
        %v2963 = vld [vmem:[%s177 + $0x118] sm:$0xff]
        %v2964 = vadd.f32 %v2928, %v2750
        %v2965 = vadd.f32 %v2929, %v2755
        %v2966 = vadd.f32 %v2930, %v2760
        %v2967 = vadd.f32 %v2931, %v2765
        %v2968 = vadd.f32 %v2932, %v2770
        %v2969 = vadd.f32 %v2933, %v2775
        %v2970 = vadd.f32 %v2934, %v2780
        %v2971 = vadd.f32 %v2935, %v2785
        %v2972 = vadd.f32 %v2936, %v2790
        %v2973 = vadd.f32 %v2937, %v2795
        %v2974 = vadd.f32 %v2938, %v2800
        %v2975 = vadd.f32 %v2939, %v2805
        %v2976 = vadd.f32 %v2940, %v2810
        %v2977 = vadd.f32 %v2941, %v2815
        %v2978 = vadd.f32 %v2942, %v2820
        %v2979 = vadd.f32 %v2943, %v2825
        %v2980 = vadd.f32 %v2944, %v2830
        %v2981 = vadd.f32 %v2945, %v2835
        %v2982 = vadd.f32 %v2946, %v2840
        %v2983 = vadd.f32 %v2947, %v2845
        %v2984 = vadd.f32 %v2948, %v2850
        %v2985 = vadd.f32 %v2949, %v2855
        %v2986 = vadd.f32 %v2950, %v2860
        %v2987 = vadd.f32 %v2951, %v2865
        %v2988 = vadd.f32 %v2952, %v2870
        %v2989 = vadd.f32 %v2953, %v2875
        %v2990 = vadd.f32 %v2954, %v2880
        %v2991 = vadd.f32 %v2955, %v2885
        %v2992 = vadd.f32 %v2956, %v2890
        %v2993 = vadd.f32 %v2957, %v2895
        %v2994 = vadd.f32 %v2958, %v2900
        %v2995 = vadd.f32 %v2959, %v2905
        %v2996 = vadd.f32 %v2960, %v2910
        %v2997 = vadd.f32 %v2961, %v2915
        %v2998 = vadd.f32 %v2962, %v2920
        %v2999 = vadd.f32 %v2963, %v2925
        %3000 = vst [vmem:[%s177] sm:$0xff] %v2964
        %3001 = vst [vmem:[%s177 + $0x8] sm:$0xff] %v2965
        %3002 = vst [vmem:[%s177 + $0x10] sm:$0xff] %v2966
        %3003 = vst [vmem:[%s177 + $0x18] sm:$0xff] %v2967
        %3004 = vst [vmem:[%s177 + $0x20] sm:$0xff] %v2968
        %3005 = vst [vmem:[%s177 + $0x28] sm:$0xff] %v2969
        %3006 = vst [vmem:[%s177 + $0x30] sm:$0xff] %v2970
        %3007 = vst [vmem:[%s177 + $0x38] sm:$0xff] %v2971
        %3008 = vst [vmem:[%s177 + $0x40] sm:$0xff] %v2972
        %3009 = vst [vmem:[%s177 + $0x48] sm:$0xff] %v2973
        %3010 = vst [vmem:[%s177 + $0x50] sm:$0xff] %v2974
        %3011 = vst [vmem:[%s177 + $0x58] sm:$0xff] %v2975
        %3012 = vst [vmem:[%s177 + $0x60] sm:$0xff] %v2976
        %3013 = vst [vmem:[%s177 + $0x68] sm:$0xff] %v2977
        %3014 = vst [vmem:[%s177 + $0x70] sm:$0xff] %v2978
        %3015 = vst [vmem:[%s177 + $0x78] sm:$0xff] %v2979
        %3016 = vst [vmem:[%s177 + $0x80] sm:$0xff] %v2980
        %3017 = vst [vmem:[%s177 + $0x88] sm:$0xff] %v2981
        %3018 = vst [vmem:[%s177 + $0x90] sm:$0xff] %v2982
        %3019 = vst [vmem:[%s177 + $0x98] sm:$0xff] %v2983
        %3020 = vst [vmem:[%s177 + $0xa0] sm:$0xff] %v2984
        %3021 = vst [vmem:[%s177 + $0xa8] sm:$0xff] %v2985
        %3022 = vst [vmem:[%s177 + $0xb0] sm:$0xff] %v2986
        %3023 = vst [vmem:[%s177 + $0xb8] sm:$0xff] %v2987
        %3024 = vst [vmem:[%s177 + $0xc0] sm:$0xff] %v2988
        %3025 = vst [vmem:[%s177 + $0xc8] sm:$0xff] %v2989
        %3026 = vst [vmem:[%s177 + $0xd0] sm:$0xff] %v2990
        %3027 = vst [vmem:[%s177 + $0xd8] sm:$0xff] %v2991
        %3028 = vst [vmem:[%s177 + $0xe0] sm:$0xff] %v2992
        %3029 = vst [vmem:[%s177 + $0xe8] sm:$0xff] %v2993
        %3030 = vst [vmem:[%s177 + $0xf0] sm:$0xff] %v2994
        %3031 = vst [vmem:[%s177 + $0xf8] sm:$0xff] %v2995
        %3032 = vst [vmem:[%s177 + $0x100] sm:$0xff] %v2996
        %3033 = vst [vmem:[%s177 + $0x108] sm:$0xff] %v2997
        %3034 = vst [vmem:[%s177 + $0x110] sm:$0xff] %v2998
        %3035 = vst [vmem:[%s177 + $0x118] sm:$0xff] %v2999
        %v3036 = vld [vmem:[#allocation2 + $0x14] sm:$0xff]
        %v3037 = vld [vmem:[#allocation2 + $0x1c] sm:$0xff]
        %v3038 = vld [vmem:[#allocation2 + $0x24] sm:$0xff]
        %v3039 = vld [vmem:[#allocation2 + $0x2c] sm:$0xff]
        %v3040 = vld [vmem:[#allocation2 + $0x34] sm:$0xff]
        %v3041 = vld [vmem:[#allocation2 + $0x3c] sm:$0xff]
        %v3042 = vld [vmem:[#allocation2 + $0x44] sm:$0xff]
        %v3043 = vld [vmem:[#allocation2 + $0x4c] sm:$0xff]
        %v3044 = vld [vmem:[#allocation2 + $0x54] sm:$0xff]
        %v3045 = vld [vmem:[#allocation2 + $0x5c] sm:$0xff]
        %v3046 = vld [vmem:[#allocation2 + $0x64] sm:$0xff]
        %v3047 = vld [vmem:[#allocation2 + $0x6c] sm:$0xff]
        %v3048 = vld [vmem:[#allocation2 + $0x74] sm:$0xff]
        %v3049 = vld [vmem:[#allocation2 + $0x7c] sm:$0xff]
        %v3050 = vld [vmem:[#allocation2 + $0x84] sm:$0xff]
        %v3051 = vld [vmem:[#allocation2 + $0x8c] sm:$0xff]
        %v3052 = vld [vmem:[#allocation2 + $0x94] sm:$0xff]
        %v3053 = vld [vmem:[#allocation2 + $0x9c] sm:$0xff]
        %v3054 = vld [vmem:[#allocation2 + $0xa4] sm:$0xff]
        %v3055 = vld [vmem:[#allocation2 + $0xac] sm:$0xff]
        %v3056 = vld [vmem:[#allocation2 + $0xb4] sm:$0xff]
        %v3057 = vld [vmem:[#allocation2 + $0xbc] sm:$0xff]
        %v3058 = vld [vmem:[#allocation2 + $0xc4] sm:$0xff]
        %v3059 = vld [vmem:[#allocation2 + $0xcc] sm:$0xff]
        %v3060 = vld [vmem:[#allocation2 + $0xd4] sm:$0xff]
        %v3061 = vld [vmem:[#allocation2 + $0xdc] sm:$0xff]
        %v3062 = vld [vmem:[#allocation2 + $0xe4] sm:$0xff]
        %v3063 = vld [vmem:[#allocation2 + $0xec] sm:$0xff]
        %v3064 = vld [vmem:[#allocation2 + $0xf4] sm:$0xff]
        %v3065 = vld [vmem:[#allocation2 + $0xfc] sm:$0xff]
        %v3066 = vld [vmem:[#allocation2 + $0x104] sm:$0xff]
        %v3067 = vld [vmem:[#allocation2 + $0x10c] sm:$0xff]
        %v3068 = vld [vmem:[#allocation2 + $0x114] sm:$0xff]
        %v3069 = vld [vmem:[#allocation2 + $0x11c] sm:$0xff]
        %v3070 = vld [vmem:[#allocation2 + $0x124] sm:$0xff]
        %v3071 = vld [vmem:[#allocation2 + $0x12c] sm:$0xff]
        %s3072 = scalar_lea.vmem %s1, 20
        %v3073 = vld [vmem:[%s3072] sm:$0xf]
        %v3075 = vsel %vm555, %v3036, 0
        %v3078 = vsel %vm555, %v3037, 0
        %v3081 = vsel %vm555, %v3038, 0
        %v3084 = vsel %vm555, %v3039, 0
        %v3087 = vsel %vm555, %v3040, 0
        %v3090 = vsel %vm555, %v3041, 0
        %v3093 = vsel %vm555, %v3042, 0
        %v3096 = vsel %vm555, %v3043, 0
        %v3099 = vsel %vm555, %v3044, 0
        %v3102 = vsel %vm555, %v3045, 0
        %v3105 = vsel %vm555, %v3046, 0
        %v3108 = vsel %vm555, %v3047, 0
        %v3111 = vsel %vm555, %v3048, 0
        %v3114 = vsel %vm555, %v3049, 0
        %v3117 = vsel %vm555, %v3050, 0
        %v3120 = vsel %vm555, %v3051, 0
        %v3123 = vsel %vm555, %v3052, 0
        %v3126 = vsel %vm555, %v3053, 0
        %v3129 = vsel %vm555, %v3054, 0
        %v3132 = vsel %vm555, %v3055, 0
        %v3135 = vsel %vm555, %v3056, 0
        %v3138 = vsel %vm555, %v3057, 0
        %v3141 = vsel %vm555, %v3058, 0
        %v3144 = vsel %vm555, %v3059, 0
        %v3147 = vsel %vm555, %v3060, 0
        %v3150 = vsel %vm555, %v3061, 0
        %v3153 = vsel %vm555, %v3062, 0
        %v3156 = vsel %vm555, %v3063, 0
        %v3159 = vsel %vm555, %v3064, 0
        %v3162 = vsel %vm555, %v3065, 0
        %v3165 = vsel %vm555, %v3066, 0
        %v3168 = vsel %vm555, %v3067, 0
        %v3171 = vsel %vm555, %v3068, 0
        %v3174 = vsel %vm555, %v3069, 0
        %v3177 = vsel %vm555, %v3070, 0
        %v3180 = vsel %vm555, %v3071, 0
        %v3183 = vsel %vm743, %v3073, 0
        %3185 = vmatprep.subr.mxu0 0.0
        %3186 = vmatpush1.msra.mxu0 0.0
        %3187 = vmatprep.subr.mxu0 0.0
        %3188 = vmatpush1.msra.mxu0 0.0
        %3189 = vmatprep.subr.mxu0 0.0
        %3190 = vmatpush1.msra.mxu0 0.0
        %3191 = vmatprep.subr.mxu0 0.0
        %3192 = vmatpush1.msra.mxu0 0.0
        %3193 = vmatprep.subr.mxu0 0.0
        %3194 = vmatpush1.msra.mxu0 0.0
        %3195 = vmatprep.subr.mxu0 0.0
        %3196 = vmatpush1.msra.mxu0 0.0
        %3197 = vmatprep.subr.mxu0 0.0
        %3198 = vmatpush1.msra.mxu0 0.0
        %3199 = vmatprep.subr.mxu0 0.0
        %3200 = vmatpush1.msra.mxu0 0.0
        %3201 = vmatprep.subr.mxu0 0.0
        %3202 = vmatpush1.msra.mxu0 0.0
        %3203 = vmatprep.subr.mxu0 0.0
        %3204 = vmatpush1.msra.mxu0 0.0
        %3205 = vmatprep.subr.mxu0 0.0
        %3206 = vmatpush1.msra.mxu0 0.0
        %3207 = vmatprep.subr.mxu0 0.0
        %3208 = vmatpush1.msra.mxu0 0.0
        %3209 = vmatprep.subr.mxu0 0.0
        %3210 = vmatpush1.msra.mxu0 0.0
        %3211 = vmatprep.subr.mxu0 0.0
        %3212 = vmatpush1.msra.mxu0 0.0
        %3213 = vmatprep.subr.mxu0 0.0
        %3214 = vmatpush1.msra.mxu0 0.0
        %3215 = vmatprep.subr.mxu0 0.0
        %3216 = vmatpush1.msra.mxu0 %v3183
        %3217 = vmatprep.subr.mxu0 0.0
        %3218 = vmatpush2.msra.mxu0 0.0
        %3219 = vmatprep.subr.mxu0 0.0
        %3220 = vmatpush2.msra.mxu0 0.0
        %3221 = vmatprep.subr.mxu0 0.0
        %3222 = vmatpush2.msra.mxu0 0.0
        %3223 = vmatprep.subr.mxu0 0.0
        %3224 = vmatpush2.msra.mxu0 0.0
        %3225 = vmatprep.subr.mxu0 0.0
        %3226 = vmatpush2.msra.mxu0 0.0
        %3227 = vmatprep.subr.mxu0 0.0
        %3228 = vmatpush2.msra.mxu0 0.0
        %3229 = vmatprep.subr.mxu0 0.0
        %3230 = vmatpush2.msra.mxu0 0.0
        %3231 = vmatprep.subr.mxu0 0.0
        %3232 = vmatpush2.msra.mxu0 0.0
        %3233 = vmatprep.subr.mxu0 0.0
        %3234 = vmatpush2.msra.mxu0 0.0
        %3235 = vmatprep.subr.mxu0 0.0
        %3236 = vmatpush2.msra.mxu0 0.0
        %3237 = vmatprep.subr.mxu0 0.0
        %3238 = vmatpush2.msra.mxu0 0.0
        %3239 = vmatprep.subr.mxu0 0.0
        %3240 = vmatpush2.msra.mxu0 0.0
        %3241 = vmatprep.subr.mxu0 0.0
        %3242 = vmatpush2.msra.mxu0 0.0
        %3243 = vmatprep.subr.mxu0 0.0
        %3244 = vmatpush2.msra.mxu0 0.0
        %3245 = vmatprep.subr.mxu0 0.0
        %3246 = vmatpush2.msra.mxu0 0.0
        %3247 = vmatprep.subr.mxu0 0.0
        %3248 = vmatpush2.msra.mxu0 0.0
        %3249 = vmatprep.mubr.f32.mxu0 0.0
        %3250 = vmatmul.mubr.f32.gmra.mxu0 %v3075
        %v3251 = vpop.f32.mrf.mxu0
        %v3252 = vadd.f32 0.0, %v3251
        %v3253 = vpop.f32.mrf.mxu0
        %3254 = vmatprep.mubr.f32.mxu0 0.0
        %3255 = vmatmul.mubr.f32.gmra.mxu0 %v3078
        %v3256 = vpop.f32.mrf.mxu0
        %v3257 = vadd.f32 0.0, %v3256
        %v3258 = vpop.f32.mrf.mxu0
        %3259 = vmatprep.mubr.f32.mxu0 0.0
        %3260 = vmatmul.mubr.f32.gmra.mxu0 %v3081
        %v3261 = vpop.f32.mrf.mxu0
        %v3262 = vadd.f32 0.0, %v3261
        %v3263 = vpop.f32.mrf.mxu0
        %3264 = vmatprep.mubr.f32.mxu0 0.0
        %3265 = vmatmul.mubr.f32.gmra.mxu0 %v3084
        %v3266 = vpop.f32.mrf.mxu0
        %v3267 = vadd.f32 0.0, %v3266
        %v3268 = vpop.f32.mrf.mxu0
        %3269 = vmatprep.mubr.f32.mxu0 0.0
        %3270 = vmatmul.mubr.f32.gmra.mxu0 %v3087
        %v3271 = vpop.f32.mrf.mxu0
        %v3272 = vadd.f32 0.0, %v3271
        %v3273 = vpop.f32.mrf.mxu0
        %3274 = vmatprep.mubr.f32.mxu0 0.0
        %3275 = vmatmul.mubr.f32.gmra.mxu0 %v3090
        %v3276 = vpop.f32.mrf.mxu0
        %v3277 = vadd.f32 0.0, %v3276
        %v3278 = vpop.f32.mrf.mxu0
        %3279 = vmatprep.mubr.f32.mxu0 0.0
        %3280 = vmatmul.mubr.f32.gmra.mxu0 %v3093
        %v3281 = vpop.f32.mrf.mxu0
        %v3282 = vadd.f32 0.0, %v3281
        %v3283 = vpop.f32.mrf.mxu0
        %3284 = vmatprep.mubr.f32.mxu0 0.0
        %3285 = vmatmul.mubr.f32.gmra.mxu0 %v3096
        %v3286 = vpop.f32.mrf.mxu0
        %v3287 = vadd.f32 0.0, %v3286
        %v3288 = vpop.f32.mrf.mxu0
        %3289 = vmatprep.mubr.f32.mxu0 0.0
        %3290 = vmatmul.mubr.f32.gmra.mxu0 %v3099
        %v3291 = vpop.f32.mrf.mxu0
        %v3292 = vadd.f32 0.0, %v3291
        %v3293 = vpop.f32.mrf.mxu0
        %3294 = vmatprep.mubr.f32.mxu0 0.0
        %3295 = vmatmul.mubr.f32.gmra.mxu0 %v3102
        %v3296 = vpop.f32.mrf.mxu0
        %v3297 = vadd.f32 0.0, %v3296
        %v3298 = vpop.f32.mrf.mxu0
        %3299 = vmatprep.mubr.f32.mxu0 0.0
        %3300 = vmatmul.mubr.f32.gmra.mxu0 %v3105
        %v3301 = vpop.f32.mrf.mxu0
        %v3302 = vadd.f32 0.0, %v3301
        %v3303 = vpop.f32.mrf.mxu0
        %3304 = vmatprep.mubr.f32.mxu0 0.0
        %3305 = vmatmul.mubr.f32.gmra.mxu0 %v3108
        %v3306 = vpop.f32.mrf.mxu0
        %v3307 = vadd.f32 0.0, %v3306
        %v3308 = vpop.f32.mrf.mxu0
        %3309 = vmatprep.mubr.f32.mxu0 0.0
        %3310 = vmatmul.mubr.f32.gmra.mxu0 %v3111
        %v3311 = vpop.f32.mrf.mxu0
        %v3312 = vadd.f32 0.0, %v3311
        %v3313 = vpop.f32.mrf.mxu0
        %3314 = vmatprep.mubr.f32.mxu0 0.0
        %3315 = vmatmul.mubr.f32.gmra.mxu0 %v3114
        %v3316 = vpop.f32.mrf.mxu0
        %v3317 = vadd.f32 0.0, %v3316
        %v3318 = vpop.f32.mrf.mxu0
        %3319 = vmatprep.mubr.f32.mxu0 0.0
        %3320 = vmatmul.mubr.f32.gmra.mxu0 %v3117
        %v3321 = vpop.f32.mrf.mxu0
        %v3322 = vadd.f32 0.0, %v3321
        %v3323 = vpop.f32.mrf.mxu0
        %3324 = vmatprep.mubr.f32.mxu0 0.0
        %3325 = vmatmul.mubr.f32.gmra.mxu0 %v3120
        %v3326 = vpop.f32.mrf.mxu0
        %v3327 = vadd.f32 0.0, %v3326
        %v3328 = vpop.f32.mrf.mxu0
        %3329 = vmatprep.mubr.f32.mxu0 0.0
        %3330 = vmatmul.mubr.f32.gmra.mxu0 %v3123
        %v3331 = vpop.f32.mrf.mxu0
        %v3332 = vadd.f32 0.0, %v3331
        %v3333 = vpop.f32.mrf.mxu0
        %3334 = vmatprep.mubr.f32.mxu0 0.0
        %3335 = vmatmul.mubr.f32.gmra.mxu0 %v3126
        %v3336 = vpop.f32.mrf.mxu0
        %v3337 = vadd.f32 0.0, %v3336
        %v3338 = vpop.f32.mrf.mxu0
        %3339 = vmatprep.mubr.f32.mxu0 0.0
        %3340 = vmatmul.mubr.f32.gmra.mxu0 %v3129
        %v3341 = vpop.f32.mrf.mxu0
        %v3342 = vadd.f32 0.0, %v3341
        %v3343 = vpop.f32.mrf.mxu0
        %3344 = vmatprep.mubr.f32.mxu0 0.0
        %3345 = vmatmul.mubr.f32.gmra.mxu0 %v3132
        %v3346 = vpop.f32.mrf.mxu0
        %v3347 = vadd.f32 0.0, %v3346
        %v3348 = vpop.f32.mrf.mxu0
        %3349 = vmatprep.mubr.f32.mxu0 0.0
        %3350 = vmatmul.mubr.f32.gmra.mxu0 %v3135
        %v3351 = vpop.f32.mrf.mxu0
        %v3352 = vadd.f32 0.0, %v3351
        %v3353 = vpop.f32.mrf.mxu0
        %3354 = vmatprep.mubr.f32.mxu0 0.0
        %3355 = vmatmul.mubr.f32.gmra.mxu0 %v3138
        %v3356 = vpop.f32.mrf.mxu0
        %v3357 = vadd.f32 0.0, %v3356
        %v3358 = vpop.f32.mrf.mxu0
        %3359 = vmatprep.mubr.f32.mxu0 0.0
        %3360 = vmatmul.mubr.f32.gmra.mxu0 %v3141
        %v3361 = vpop.f32.mrf.mxu0
        %v3362 = vadd.f32 0.0, %v3361
        %v3363 = vpop.f32.mrf.mxu0
        %3364 = vmatprep.mubr.f32.mxu0 0.0
        %3365 = vmatmul.mubr.f32.gmra.mxu0 %v3144
        %v3366 = vpop.f32.mrf.mxu0
        %v3367 = vadd.f32 0.0, %v3366
        %v3368 = vpop.f32.mrf.mxu0
        %3369 = vmatprep.mubr.f32.mxu0 0.0
        %3370 = vmatmul.mubr.f32.gmra.mxu0 %v3147
        %v3371 = vpop.f32.mrf.mxu0
        %v3372 = vadd.f32 0.0, %v3371
        %v3373 = vpop.f32.mrf.mxu0
        %3374 = vmatprep.mubr.f32.mxu0 0.0
        %3375 = vmatmul.mubr.f32.gmra.mxu0 %v3150
        %v3376 = vpop.f32.mrf.mxu0
        %v3377 = vadd.f32 0.0, %v3376
        %v3378 = vpop.f32.mrf.mxu0
        %3379 = vmatprep.mubr.f32.mxu0 0.0
        %3380 = vmatmul.mubr.f32.gmra.mxu0 %v3153
        %v3381 = vpop.f32.mrf.mxu0
        %v3382 = vadd.f32 0.0, %v3381
        %v3383 = vpop.f32.mrf.mxu0
        %3384 = vmatprep.mubr.f32.mxu0 0.0
        %3385 = vmatmul.mubr.f32.gmra.mxu0 %v3156
        %v3386 = vpop.f32.mrf.mxu0
        %v3387 = vadd.f32 0.0, %v3386
        %v3388 = vpop.f32.mrf.mxu0
        %3389 = vmatprep.mubr.f32.mxu0 0.0
        %3390 = vmatmul.mubr.f32.gmra.mxu0 %v3159
        %v3391 = vpop.f32.mrf.mxu0
        %v3392 = vadd.f32 0.0, %v3391
        %v3393 = vpop.f32.mrf.mxu0
        %3394 = vmatprep.mubr.f32.mxu0 0.0
        %3395 = vmatmul.mubr.f32.gmra.mxu0 %v3162
        %v3396 = vpop.f32.mrf.mxu0
        %v3397 = vadd.f32 0.0, %v3396
        %v3398 = vpop.f32.mrf.mxu0
        %3399 = vmatprep.mubr.f32.mxu0 0.0
        %3400 = vmatmul.mubr.f32.gmra.mxu0 %v3165
        %v3401 = vpop.f32.mrf.mxu0
        %v3402 = vadd.f32 0.0, %v3401
        %v3403 = vpop.f32.mrf.mxu0
        %3404 = vmatprep.mubr.f32.mxu0 0.0
        %3405 = vmatmul.mubr.f32.gmra.mxu0 %v3168
        %v3406 = vpop.f32.mrf.mxu0
        %v3407 = vadd.f32 0.0, %v3406
        %v3408 = vpop.f32.mrf.mxu0
        %3409 = vmatprep.mubr.f32.mxu0 0.0
        %3410 = vmatmul.mubr.f32.gmra.mxu0 %v3171
        %v3411 = vpop.f32.mrf.mxu0
        %v3412 = vadd.f32 0.0, %v3411
        %v3413 = vpop.f32.mrf.mxu0
        %3414 = vmatprep.mubr.f32.mxu0 0.0
        %3415 = vmatmul.mubr.f32.gmra.mxu0 %v3174
        %v3416 = vpop.f32.mrf.mxu0
        %v3417 = vadd.f32 0.0, %v3416
        %v3418 = vpop.f32.mrf.mxu0
        %3419 = vmatprep.mubr.f32.mxu0 0.0
        %3420 = vmatmul.mubr.f32.gmra.mxu0 %v3177
        %v3421 = vpop.f32.mrf.mxu0
        %v3422 = vadd.f32 0.0, %v3421
        %v3423 = vpop.f32.mrf.mxu0
        %3424 = vmatprep.mubr.f32.mxu0 0.0
        %3425 = vmatmul.mubr.f32.gmra.mxu0 %v3180
        %v3426 = vpop.f32.mrf.mxu0
        %v3427 = vadd.f32 0.0, %v3426
        %v3428 = vpop.f32.mrf.mxu0
        %3429 = vdwg.mxu0
        %v3430 = vld [vmem:[%s177] sm:$0xff]
        %v3431 = vld [vmem:[%s177 + $0x8] sm:$0xff]
        %v3432 = vld [vmem:[%s177 + $0x10] sm:$0xff]
        %v3433 = vld [vmem:[%s177 + $0x18] sm:$0xff]
        %v3434 = vld [vmem:[%s177 + $0x20] sm:$0xff]
        %v3435 = vld [vmem:[%s177 + $0x28] sm:$0xff]
        %v3436 = vld [vmem:[%s177 + $0x30] sm:$0xff]
        %v3437 = vld [vmem:[%s177 + $0x38] sm:$0xff]
        %v3438 = vld [vmem:[%s177 + $0x40] sm:$0xff]
        %v3439 = vld [vmem:[%s177 + $0x48] sm:$0xff]
        %v3440 = vld [vmem:[%s177 + $0x50] sm:$0xff]
        %v3441 = vld [vmem:[%s177 + $0x58] sm:$0xff]
        %v3442 = vld [vmem:[%s177 + $0x60] sm:$0xff]
        %v3443 = vld [vmem:[%s177 + $0x68] sm:$0xff]
        %v3444 = vld [vmem:[%s177 + $0x70] sm:$0xff]
        %v3445 = vld [vmem:[%s177 + $0x78] sm:$0xff]
        %v3446 = vld [vmem:[%s177 + $0x80] sm:$0xff]
        %v3447 = vld [vmem:[%s177 + $0x88] sm:$0xff]
        %v3448 = vld [vmem:[%s177 + $0x90] sm:$0xff]
        %v3449 = vld [vmem:[%s177 + $0x98] sm:$0xff]
        %v3450 = vld [vmem:[%s177 + $0xa0] sm:$0xff]
        %v3451 = vld [vmem:[%s177 + $0xa8] sm:$0xff]
        %v3452 = vld [vmem:[%s177 + $0xb0] sm:$0xff]
        %v3453 = vld [vmem:[%s177 + $0xb8] sm:$0xff]
        %v3454 = vld [vmem:[%s177 + $0xc0] sm:$0xff]
        %v3455 = vld [vmem:[%s177 + $0xc8] sm:$0xff]
        %v3456 = vld [vmem:[%s177 + $0xd0] sm:$0xff]
        %v3457 = vld [vmem:[%s177 + $0xd8] sm:$0xff]
        %v3458 = vld [vmem:[%s177 + $0xe0] sm:$0xff]
        %v3459 = vld [vmem:[%s177 + $0xe8] sm:$0xff]
        %v3460 = vld [vmem:[%s177 + $0xf0] sm:$0xff]
        %v3461 = vld [vmem:[%s177 + $0xf8] sm:$0xff]
        %v3462 = vld [vmem:[%s177 + $0x100] sm:$0xff]
        %v3463 = vld [vmem:[%s177 + $0x108] sm:$0xff]
        %v3464 = vld [vmem:[%s177 + $0x110] sm:$0xff]
        %v3465 = vld [vmem:[%s177 + $0x118] sm:$0xff]
        %v3466 = vadd.f32 %v3430, %v3252
        %v3467 = vadd.f32 %v3431, %v3257
        %v3468 = vadd.f32 %v3432, %v3262
        %v3469 = vadd.f32 %v3433, %v3267
        %v3470 = vadd.f32 %v3434, %v3272
        %v3471 = vadd.f32 %v3435, %v3277
        %v3472 = vadd.f32 %v3436, %v3282
        %v3473 = vadd.f32 %v3437, %v3287
        %v3474 = vadd.f32 %v3438, %v3292
        %v3475 = vadd.f32 %v3439, %v3297
        %v3476 = vadd.f32 %v3440, %v3302
        %v3477 = vadd.f32 %v3441, %v3307
        %v3478 = vadd.f32 %v3442, %v3312
        %v3479 = vadd.f32 %v3443, %v3317
        %v3480 = vadd.f32 %v3444, %v3322
        %v3481 = vadd.f32 %v3445, %v3327
        %v3482 = vadd.f32 %v3446, %v3332
        %v3483 = vadd.f32 %v3447, %v3337
        %v3484 = vadd.f32 %v3448, %v3342
        %v3485 = vadd.f32 %v3449, %v3347
        %v3486 = vadd.f32 %v3450, %v3352
        %v3487 = vadd.f32 %v3451, %v3357
        %v3488 = vadd.f32 %v3452, %v3362
        %v3489 = vadd.f32 %v3453, %v3367
        %v3490 = vadd.f32 %v3454, %v3372
        %v3491 = vadd.f32 %v3455, %v3377
        %v3492 = vadd.f32 %v3456, %v3382
        %v3493 = vadd.f32 %v3457, %v3387
        %v3494 = vadd.f32 %v3458, %v3392
        %v3495 = vadd.f32 %v3459, %v3397
        %v3496 = vadd.f32 %v3460, %v3402
        %v3497 = vadd.f32 %v3461, %v3407
        %v3498 = vadd.f32 %v3462, %v3412
        %v3499 = vadd.f32 %v3463, %v3417
        %v3500 = vadd.f32 %v3464, %v3422
        %v3501 = vadd.f32 %v3465, %v3427
        %3502 = vst [vmem:[%s177] sm:$0xff] %v3466
        %3503 = vst [vmem:[%s177 + $0x8] sm:$0xff] %v3467
        %3504 = vst [vmem:[%s177 + $0x10] sm:$0xff] %v3468
        %3505 = vst [vmem:[%s177 + $0x18] sm:$0xff] %v3469
        %3506 = vst [vmem:[%s177 + $0x20] sm:$0xff] %v3470
        %3507 = vst [vmem:[%s177 + $0x28] sm:$0xff] %v3471
        %3508 = vst [vmem:[%s177 + $0x30] sm:$0xff] %v3472
        %3509 = vst [vmem:[%s177 + $0x38] sm:$0xff] %v3473
        %3510 = vst [vmem:[%s177 + $0x40] sm:$0xff] %v3474
        %3511 = vst [vmem:[%s177 + $0x48] sm:$0xff] %v3475
        %3512 = vst [vmem:[%s177 + $0x50] sm:$0xff] %v3476
        %3513 = vst [vmem:[%s177 + $0x58] sm:$0xff] %v3477
        %3514 = vst [vmem:[%s177 + $0x60] sm:$0xff] %v3478
        %3515 = vst [vmem:[%s177 + $0x68] sm:$0xff] %v3479
        %3516 = vst [vmem:[%s177 + $0x70] sm:$0xff] %v3480
        %3517 = vst [vmem:[%s177 + $0x78] sm:$0xff] %v3481
        %3518 = vst [vmem:[%s177 + $0x80] sm:$0xff] %v3482
        %3519 = vst [vmem:[%s177 + $0x88] sm:$0xff] %v3483
        %3520 = vst [vmem:[%s177 + $0x90] sm:$0xff] %v3484
        %3521 = vst [vmem:[%s177 + $0x98] sm:$0xff] %v3485
        %3522 = vst [vmem:[%s177 + $0xa0] sm:$0xff] %v3486
        %3523 = vst [vmem:[%s177 + $0xa8] sm:$0xff] %v3487
        %3524 = vst [vmem:[%s177 + $0xb0] sm:$0xff] %v3488
        %3525 = vst [vmem:[%s177 + $0xb8] sm:$0xff] %v3489
        %3526 = vst [vmem:[%s177 + $0xc0] sm:$0xff] %v3490
        %3527 = vst [vmem:[%s177 + $0xc8] sm:$0xff] %v3491
        %3528 = vst [vmem:[%s177 + $0xd0] sm:$0xff] %v3492
        %3529 = vst [vmem:[%s177 + $0xd8] sm:$0xff] %v3493
        %3530 = vst [vmem:[%s177 + $0xe0] sm:$0xff] %v3494
        %3531 = vst [vmem:[%s177 + $0xe8] sm:$0xff] %v3495
        %3532 = vst [vmem:[%s177 + $0xf0] sm:$0xff] %v3496
        %3533 = vst [vmem:[%s177 + $0xf8] sm:$0xff] %v3497
        %3534 = vst [vmem:[%s177 + $0x100] sm:$0xff] %v3498
        %3535 = vst [vmem:[%s177 + $0x108] sm:$0xff] %v3499
        %3536 = vst [vmem:[%s177 + $0x110] sm:$0xff] %v3500
        %3537 = vst [vmem:[%s177 + $0x118] sm:$0xff] %v3501
        %v3538 = vld [vmem:[#allocation2 + $0x24] sm:$0xff]
        %v3539 = vld [vmem:[#allocation2 + $0x2c] sm:$0xff]
        %v3540 = vld [vmem:[#allocation2 + $0x34] sm:$0xff]
        %v3541 = vld [vmem:[#allocation2 + $0x3c] sm:$0xff]
        %v3542 = vld [vmem:[#allocation2 + $0x44] sm:$0xff]
        %v3543 = vld [vmem:[#allocation2 + $0x4c] sm:$0xff]
        %v3544 = vld [vmem:[#allocation2 + $0x54] sm:$0xff]
        %v3545 = vld [vmem:[#allocation2 + $0x5c] sm:$0xff]
        %v3546 = vld [vmem:[#allocation2 + $0x64] sm:$0xff]
        %v3547 = vld [vmem:[#allocation2 + $0x6c] sm:$0xff]
        %v3548 = vld [vmem:[#allocation2 + $0x74] sm:$0xff]
        %v3549 = vld [vmem:[#allocation2 + $0x7c] sm:$0xff]
        %v3550 = vld [vmem:[#allocation2 + $0x84] sm:$0xff]
        %v3551 = vld [vmem:[#allocation2 + $0x8c] sm:$0xff]
        %v3552 = vld [vmem:[#allocation2 + $0x94] sm:$0xff]
        %v3553 = vld [vmem:[#allocation2 + $0x9c] sm:$0xff]
        %v3554 = vld [vmem:[#allocation2 + $0xa4] sm:$0xff]
        %v3555 = vld [vmem:[#allocation2 + $0xac] sm:$0xff]
        %v3556 = vld [vmem:[#allocation2 + $0xb4] sm:$0xff]
        %v3557 = vld [vmem:[#allocation2 + $0xbc] sm:$0xff]
        %v3558 = vld [vmem:[#allocation2 + $0xc4] sm:$0xff]
        %v3559 = vld [vmem:[#allocation2 + $0xcc] sm:$0xff]
        %v3560 = vld [vmem:[#allocation2 + $0xd4] sm:$0xff]
        %v3561 = vld [vmem:[#allocation2 + $0xdc] sm:$0xff]
        %v3562 = vld [vmem:[#allocation2 + $0xe4] sm:$0xff]
        %v3563 = vld [vmem:[#allocation2 + $0xec] sm:$0xff]
        %v3564 = vld [vmem:[#allocation2 + $0xf4] sm:$0xff]
        %v3565 = vld [vmem:[#allocation2 + $0xfc] sm:$0xff]
        %v3566 = vld [vmem:[#allocation2 + $0x104] sm:$0xff]
        %v3567 = vld [vmem:[#allocation2 + $0x10c] sm:$0xff]
        %v3568 = vld [vmem:[#allocation2 + $0x114] sm:$0xff]
        %v3569 = vld [vmem:[#allocation2 + $0x11c] sm:$0xff]
        %v3570 = vld [vmem:[#allocation2 + $0x124] sm:$0xff]
        %v3571 = vld [vmem:[#allocation2 + $0x12c] sm:$0xff]
        %v3572 = vld [vmem:[#allocation2 + $0x134] sm:$0xff]
        %v3573 = vld [vmem:[#allocation2 + $0x13c] sm:$0xff]
        %s3574 = scalar_lea.vmem %s1, 24
        %v3575 = vld [vmem:[%s3574] sm:$0xf]
        %v3577 = vsel %vm555, %v3538, 0
        %v3580 = vsel %vm555, %v3539, 0
        %v3583 = vsel %vm555, %v3540, 0
        %v3586 = vsel %vm555, %v3541, 0
        %v3589 = vsel %vm555, %v3542, 0
        %v3592 = vsel %vm555, %v3543, 0
        %v3595 = vsel %vm555, %v3544, 0
        %v3598 = vsel %vm555, %v3545, 0
        %v3601 = vsel %vm555, %v3546, 0
        %v3604 = vsel %vm555, %v3547, 0
        %v3607 = vsel %vm555, %v3548, 0
        %v3610 = vsel %vm555, %v3549, 0
        %v3613 = vsel %vm555, %v3550, 0
        %v3616 = vsel %vm555, %v3551, 0
        %v3619 = vsel %vm555, %v3552, 0
        %v3622 = vsel %vm555, %v3553, 0
        %v3625 = vsel %vm555, %v3554, 0
        %v3628 = vsel %vm555, %v3555, 0
        %v3631 = vsel %vm555, %v3556, 0
        %v3634 = vsel %vm555, %v3557, 0
        %v3637 = vsel %vm555, %v3558, 0
        %v3640 = vsel %vm555, %v3559, 0
        %v3643 = vsel %vm555, %v3560, 0
        %v3646 = vsel %vm555, %v3561, 0
        %v3649 = vsel %vm555, %v3562, 0
        %v3652 = vsel %vm555, %v3563, 0
        %v3655 = vsel %vm555, %v3564, 0
        %v3658 = vsel %vm555, %v3565, 0
        %v3661 = vsel %vm555, %v3566, 0
        %v3664 = vsel %vm555, %v3567, 0
        %v3667 = vsel %vm555, %v3568, 0
        %v3670 = vsel %vm555, %v3569, 0
        %v3673 = vsel %vm555, %v3570, 0
        %v3676 = vsel %vm555, %v3571, 0
        %v3679 = vsel %vm555, %v3572, 0
        %v3682 = vsel %vm555, %v3573, 0
        %v3685 = vsel %vm743, %v3575, 0
        %3687 = vmatprep.subr.mxu0 0.0
        %3688 = vmatpush1.msra.mxu0 0.0
        %3689 = vmatprep.subr.mxu0 0.0
        %3690 = vmatpush1.msra.mxu0 0.0
        %3691 = vmatprep.subr.mxu0 0.0
        %3692 = vmatpush1.msra.mxu0 0.0
        %3693 = vmatprep.subr.mxu0 0.0
        %3694 = vmatpush1.msra.mxu0 0.0
        %3695 = vmatprep.subr.mxu0 0.0
        %3696 = vmatpush1.msra.mxu0 0.0
        %3697 = vmatprep.subr.mxu0 0.0
        %3698 = vmatpush1.msra.mxu0 0.0
        %3699 = vmatprep.subr.mxu0 0.0
        %3700 = vmatpush1.msra.mxu0 0.0
        %3701 = vmatprep.subr.mxu0 0.0
        %3702 = vmatpush1.msra.mxu0 0.0
        %3703 = vmatprep.subr.mxu0 0.0
        %3704 = vmatpush1.msra.mxu0 0.0
        %3705 = vmatprep.subr.mxu0 0.0
        %3706 = vmatpush1.msra.mxu0 0.0
        %3707 = vmatprep.subr.mxu0 0.0
        %3708 = vmatpush1.msra.mxu0 0.0
        %3709 = vmatprep.subr.mxu0 0.0
        %3710 = vmatpush1.msra.mxu0 0.0
        %3711 = vmatprep.subr.mxu0 0.0
        %3712 = vmatpush1.msra.mxu0 0.0
        %3713 = vmatprep.subr.mxu0 0.0
        %3714 = vmatpush1.msra.mxu0 0.0
        %3715 = vmatprep.subr.mxu0 0.0
        %3716 = vmatpush1.msra.mxu0 0.0
        %3717 = vmatprep.subr.mxu0 0.0
        %3718 = vmatpush1.msra.mxu0 %v3685
        %3719 = vmatprep.subr.mxu0 0.0
        %3720 = vmatpush2.msra.mxu0 0.0
        %3721 = vmatprep.subr.mxu0 0.0
        %3722 = vmatpush2.msra.mxu0 0.0
        %3723 = vmatprep.subr.mxu0 0.0
        %3724 = vmatpush2.msra.mxu0 0.0
        %3725 = vmatprep.subr.mxu0 0.0
        %3726 = vmatpush2.msra.mxu0 0.0
        %3727 = vmatprep.subr.mxu0 0.0
        %3728 = vmatpush2.msra.mxu0 0.0
        %3729 = vmatprep.subr.mxu0 0.0
        %3730 = vmatpush2.msra.mxu0 0.0
        %3731 = vmatprep.subr.mxu0 0.0
        %3732 = vmatpush2.msra.mxu0 0.0
        %3733 = vmatprep.subr.mxu0 0.0
        %3734 = vmatpush2.msra.mxu0 0.0
        %3735 = vmatprep.subr.mxu0 0.0
        %3736 = vmatpush2.msra.mxu0 0.0
        %3737 = vmatprep.subr.mxu0 0.0
        %3738 = vmatpush2.msra.mxu0 0.0
        %3739 = vmatprep.subr.mxu0 0.0
        %3740 = vmatpush2.msra.mxu0 0.0
        %3741 = vmatprep.subr.mxu0 0.0
        %3742 = vmatpush2.msra.mxu0 0.0
        %3743 = vmatprep.subr.mxu0 0.0
        %3744 = vmatpush2.msra.mxu0 0.0
        %3745 = vmatprep.subr.mxu0 0.0
        %3746 = vmatpush2.msra.mxu0 0.0
        %3747 = vmatprep.subr.mxu0 0.0
        %3748 = vmatpush2.msra.mxu0 0.0
        %3749 = vmatprep.subr.mxu0 0.0
        %3750 = vmatpush2.msra.mxu0 0.0
        %3751 = vmatprep.mubr.f32.mxu0 0.0
        %3752 = vmatmul.mubr.f32.gmra.mxu0 %v3577
        %v3753 = vpop.f32.mrf.mxu0
        %v3754 = vadd.f32 0.0, %v3753
        %v3755 = vpop.f32.mrf.mxu0
        %3756 = vmatprep.mubr.f32.mxu0 0.0
        %3757 = vmatmul.mubr.f32.gmra.mxu0 %v3580
        %v3758 = vpop.f32.mrf.mxu0
        %v3759 = vadd.f32 0.0, %v3758
        %v3760 = vpop.f32.mrf.mxu0
        %3761 = vmatprep.mubr.f32.mxu0 0.0
        %3762 = vmatmul.mubr.f32.gmra.mxu0 %v3583
        %v3763 = vpop.f32.mrf.mxu0
        %v3764 = vadd.f32 0.0, %v3763
        %v3765 = vpop.f32.mrf.mxu0
        %3766 = vmatprep.mubr.f32.mxu0 0.0
        %3767 = vmatmul.mubr.f32.gmra.mxu0 %v3586
        %v3768 = vpop.f32.mrf.mxu0
        %v3769 = vadd.f32 0.0, %v3768
        %v3770 = vpop.f32.mrf.mxu0
        %3771 = vmatprep.mubr.f32.mxu0 0.0
        %3772 = vmatmul.mubr.f32.gmra.mxu0 %v3589
        %v3773 = vpop.f32.mrf.mxu0
        %v3774 = vadd.f32 0.0, %v3773
        %v3775 = vpop.f32.mrf.mxu0
        %3776 = vmatprep.mubr.f32.mxu0 0.0
        %3777 = vmatmul.mubr.f32.gmra.mxu0 %v3592
        %v3778 = vpop.f32.mrf.mxu0
        %v3779 = vadd.f32 0.0, %v3778
        %v3780 = vpop.f32.mrf.mxu0
        %3781 = vmatprep.mubr.f32.mxu0 0.0
        %3782 = vmatmul.mubr.f32.gmra.mxu0 %v3595
        %v3783 = vpop.f32.mrf.mxu0
        %v3784 = vadd.f32 0.0, %v3783
        %v3785 = vpop.f32.mrf.mxu0
        %3786 = vmatprep.mubr.f32.mxu0 0.0
        %3787 = vmatmul.mubr.f32.gmra.mxu0 %v3598
        %v3788 = vpop.f32.mrf.mxu0
        %v3789 = vadd.f32 0.0, %v3788
        %v3790 = vpop.f32.mrf.mxu0
        %3791 = vmatprep.mubr.f32.mxu0 0.0
        %3792 = vmatmul.mubr.f32.gmra.mxu0 %v3601
        %v3793 = vpop.f32.mrf.mxu0
        %v3794 = vadd.f32 0.0, %v3793
        %v3795 = vpop.f32.mrf.mxu0
        %3796 = vmatprep.mubr.f32.mxu0 0.0
        %3797 = vmatmul.mubr.f32.gmra.mxu0 %v3604
        %v3798 = vpop.f32.mrf.mxu0
        %v3799 = vadd.f32 0.0, %v3798
        %v3800 = vpop.f32.mrf.mxu0
        %3801 = vmatprep.mubr.f32.mxu0 0.0
        %3802 = vmatmul.mubr.f32.gmra.mxu0 %v3607
        %v3803 = vpop.f32.mrf.mxu0
        %v3804 = vadd.f32 0.0, %v3803
        %v3805 = vpop.f32.mrf.mxu0
        %3806 = vmatprep.mubr.f32.mxu0 0.0
        %3807 = vmatmul.mubr.f32.gmra.mxu0 %v3610
        %v3808 = vpop.f32.mrf.mxu0
        %v3809 = vadd.f32 0.0, %v3808
        %v3810 = vpop.f32.mrf.mxu0
        %3811 = vmatprep.mubr.f32.mxu0 0.0
        %3812 = vmatmul.mubr.f32.gmra.mxu0 %v3613
        %v3813 = vpop.f32.mrf.mxu0
        %v3814 = vadd.f32 0.0, %v3813
        %v3815 = vpop.f32.mrf.mxu0
        %3816 = vmatprep.mubr.f32.mxu0 0.0
        %3817 = vmatmul.mubr.f32.gmra.mxu0 %v3616
        %v3818 = vpop.f32.mrf.mxu0
        %v3819 = vadd.f32 0.0, %v3818
        %v3820 = vpop.f32.mrf.mxu0
        %3821 = vmatprep.mubr.f32.mxu0 0.0
        %3822 = vmatmul.mubr.f32.gmra.mxu0 %v3619
        %v3823 = vpop.f32.mrf.mxu0
        %v3824 = vadd.f32 0.0, %v3823
        %v3825 = vpop.f32.mrf.mxu0
        %3826 = vmatprep.mubr.f32.mxu0 0.0
        %3827 = vmatmul.mubr.f32.gmra.mxu0 %v3622
        %v3828 = vpop.f32.mrf.mxu0
        %v3829 = vadd.f32 0.0, %v3828
        %v3830 = vpop.f32.mrf.mxu0
        %3831 = vmatprep.mubr.f32.mxu0 0.0
        %3832 = vmatmul.mubr.f32.gmra.mxu0 %v3625
        %v3833 = vpop.f32.mrf.mxu0
        %v3834 = vadd.f32 0.0, %v3833
        %v3835 = vpop.f32.mrf.mxu0
        %3836 = vmatprep.mubr.f32.mxu0 0.0
        %3837 = vmatmul.mubr.f32.gmra.mxu0 %v3628
        %v3838 = vpop.f32.mrf.mxu0
        %v3839 = vadd.f32 0.0, %v3838
        %v3840 = vpop.f32.mrf.mxu0
        %3841 = vmatprep.mubr.f32.mxu0 0.0
        %3842 = vmatmul.mubr.f32.gmra.mxu0 %v3631
        %v3843 = vpop.f32.mrf.mxu0
        %v3844 = vadd.f32 0.0, %v3843
        %v3845 = vpop.f32.mrf.mxu0
        %3846 = vmatprep.mubr.f32.mxu0 0.0
        %3847 = vmatmul.mubr.f32.gmra.mxu0 %v3634
        %v3848 = vpop.f32.mrf.mxu0
        %v3849 = vadd.f32 0.0, %v3848
        %v3850 = vpop.f32.mrf.mxu0
        %3851 = vmatprep.mubr.f32.mxu0 0.0
        %3852 = vmatmul.mubr.f32.gmra.mxu0 %v3637
        %v3853 = vpop.f32.mrf.mxu0
        %v3854 = vadd.f32 0.0, %v3853
        %v3855 = vpop.f32.mrf.mxu0
        %3856 = vmatprep.mubr.f32.mxu0 0.0
        %3857 = vmatmul.mubr.f32.gmra.mxu0 %v3640
        %v3858 = vpop.f32.mrf.mxu0
        %v3859 = vadd.f32 0.0, %v3858
        %v3860 = vpop.f32.mrf.mxu0
        %3861 = vmatprep.mubr.f32.mxu0 0.0
        %3862 = vmatmul.mubr.f32.gmra.mxu0 %v3643
        %v3863 = vpop.f32.mrf.mxu0
        %v3864 = vadd.f32 0.0, %v3863
        %v3865 = vpop.f32.mrf.mxu0
        %3866 = vmatprep.mubr.f32.mxu0 0.0
        %3867 = vmatmul.mubr.f32.gmra.mxu0 %v3646
        %v3868 = vpop.f32.mrf.mxu0
        %v3869 = vadd.f32 0.0, %v3868
        %v3870 = vpop.f32.mrf.mxu0
        %3871 = vmatprep.mubr.f32.mxu0 0.0
        %3872 = vmatmul.mubr.f32.gmra.mxu0 %v3649
        %v3873 = vpop.f32.mrf.mxu0
        %v3874 = vadd.f32 0.0, %v3873
        %v3875 = vpop.f32.mrf.mxu0
        %3876 = vmatprep.mubr.f32.mxu0 0.0
        %3877 = vmatmul.mubr.f32.gmra.mxu0 %v3652
        %v3878 = vpop.f32.mrf.mxu0
        %v3879 = vadd.f32 0.0, %v3878
        %v3880 = vpop.f32.mrf.mxu0
        %3881 = vmatprep.mubr.f32.mxu0 0.0
        %3882 = vmatmul.mubr.f32.gmra.mxu0 %v3655
        %v3883 = vpop.f32.mrf.mxu0
        %v3884 = vadd.f32 0.0, %v3883
        %v3885 = vpop.f32.mrf.mxu0
        %3886 = vmatprep.mubr.f32.mxu0 0.0
        %3887 = vmatmul.mubr.f32.gmra.mxu0 %v3658
        %v3888 = vpop.f32.mrf.mxu0
        %v3889 = vadd.f32 0.0, %v3888
        %v3890 = vpop.f32.mrf.mxu0
        %3891 = vmatprep.mubr.f32.mxu0 0.0
        %3892 = vmatmul.mubr.f32.gmra.mxu0 %v3661
        %v3893 = vpop.f32.mrf.mxu0
        %v3894 = vadd.f32 0.0, %v3893
        %v3895 = vpop.f32.mrf.mxu0
        %3896 = vmatprep.mubr.f32.mxu0 0.0
        %3897 = vmatmul.mubr.f32.gmra.mxu0 %v3664
        %v3898 = vpop.f32.mrf.mxu0
        %v3899 = vadd.f32 0.0, %v3898
        %v3900 = vpop.f32.mrf.mxu0
        %3901 = vmatprep.mubr.f32.mxu0 0.0
        %3902 = vmatmul.mubr.f32.gmra.mxu0 %v3667
        %v3903 = vpop.f32.mrf.mxu0
        %v3904 = vadd.f32 0.0, %v3903
        %v3905 = vpop.f32.mrf.mxu0
        %3906 = vmatprep.mubr.f32.mxu0 0.0
        %3907 = vmatmul.mubr.f32.gmra.mxu0 %v3670
        %v3908 = vpop.f32.mrf.mxu0
        %v3909 = vadd.f32 0.0, %v3908
        %v3910 = vpop.f32.mrf.mxu0
        %3911 = vmatprep.mubr.f32.mxu0 0.0
        %3912 = vmatmul.mubr.f32.gmra.mxu0 %v3673
        %v3913 = vpop.f32.mrf.mxu0
        %v3914 = vadd.f32 0.0, %v3913
        %v3915 = vpop.f32.mrf.mxu0
        %3916 = vmatprep.mubr.f32.mxu0 0.0
        %3917 = vmatmul.mubr.f32.gmra.mxu0 %v3676
        %v3918 = vpop.f32.mrf.mxu0
        %v3919 = vadd.f32 0.0, %v3918
        %v3920 = vpop.f32.mrf.mxu0
        %3921 = vmatprep.mubr.f32.mxu0 0.0
        %3922 = vmatmul.mubr.f32.gmra.mxu0 %v3679
        %v3923 = vpop.f32.mrf.mxu0
        %v3924 = vadd.f32 0.0, %v3923
        %v3925 = vpop.f32.mrf.mxu0
        %3926 = vmatprep.mubr.f32.mxu0 0.0
        %3927 = vmatmul.mubr.f32.gmra.mxu0 %v3682
        %v3928 = vpop.f32.mrf.mxu0
        %v3929 = vadd.f32 0.0, %v3928
        %v3930 = vpop.f32.mrf.mxu0
        %3931 = vdwg.mxu0
        %v3932 = vld [vmem:[%s177] sm:$0xff]
        %v3933 = vld [vmem:[%s177 + $0x8] sm:$0xff]
        %v3934 = vld [vmem:[%s177 + $0x10] sm:$0xff]
        %v3935 = vld [vmem:[%s177 + $0x18] sm:$0xff]
        %v3936 = vld [vmem:[%s177 + $0x20] sm:$0xff]
        %v3937 = vld [vmem:[%s177 + $0x28] sm:$0xff]
        %v3938 = vld [vmem:[%s177 + $0x30] sm:$0xff]
        %v3939 = vld [vmem:[%s177 + $0x38] sm:$0xff]
        %v3940 = vld [vmem:[%s177 + $0x40] sm:$0xff]
        %v3941 = vld [vmem:[%s177 + $0x48] sm:$0xff]
        %v3942 = vld [vmem:[%s177 + $0x50] sm:$0xff]
        %v3943 = vld [vmem:[%s177 + $0x58] sm:$0xff]
        %v3944 = vld [vmem:[%s177 + $0x60] sm:$0xff]
        %v3945 = vld [vmem:[%s177 + $0x68] sm:$0xff]
        %v3946 = vld [vmem:[%s177 + $0x70] sm:$0xff]
        %v3947 = vld [vmem:[%s177 + $0x78] sm:$0xff]
        %v3948 = vld [vmem:[%s177 + $0x80] sm:$0xff]
        %v3949 = vld [vmem:[%s177 + $0x88] sm:$0xff]
        %v3950 = vld [vmem:[%s177 + $0x90] sm:$0xff]
        %v3951 = vld [vmem:[%s177 + $0x98] sm:$0xff]
        %v3952 = vld [vmem:[%s177 + $0xa0] sm:$0xff]
        %v3953 = vld [vmem:[%s177 + $0xa8] sm:$0xff]
        %v3954 = vld [vmem:[%s177 + $0xb0] sm:$0xff]
        %v3955 = vld [vmem:[%s177 + $0xb8] sm:$0xff]
        %v3956 = vld [vmem:[%s177 + $0xc0] sm:$0xff]
        %v3957 = vld [vmem:[%s177 + $0xc8] sm:$0xff]
        %v3958 = vld [vmem:[%s177 + $0xd0] sm:$0xff]
        %v3959 = vld [vmem:[%s177 + $0xd8] sm:$0xff]
        %v3960 = vld [vmem:[%s177 + $0xe0] sm:$0xff]
        %v3961 = vld [vmem:[%s177 + $0xe8] sm:$0xff]
        %v3962 = vld [vmem:[%s177 + $0xf0] sm:$0xff]
        %v3963 = vld [vmem:[%s177 + $0xf8] sm:$0xff]
        %v3964 = vld [vmem:[%s177 + $0x100] sm:$0xff]
        %v3965 = vld [vmem:[%s177 + $0x108] sm:$0xff]
        %v3966 = vld [vmem:[%s177 + $0x110] sm:$0xff]
        %v3967 = vld [vmem:[%s177 + $0x118] sm:$0xff]
        %v3968 = vadd.f32 %v3932, %v3754
        %v3969 = vadd.f32 %v3933, %v3759
        %v3970 = vadd.f32 %v3934, %v3764
        %v3971 = vadd.f32 %v3935, %v3769
        %v3972 = vadd.f32 %v3936, %v3774
        %v3973 = vadd.f32 %v3937, %v3779
        %v3974 = vadd.f32 %v3938, %v3784
        %v3975 = vadd.f32 %v3939, %v3789
        %v3976 = vadd.f32 %v3940, %v3794
        %v3977 = vadd.f32 %v3941, %v3799
        %v3978 = vadd.f32 %v3942, %v3804
        %v3979 = vadd.f32 %v3943, %v3809
        %v3980 = vadd.f32 %v3944, %v3814
        %v3981 = vadd.f32 %v3945, %v3819
        %v3982 = vadd.f32 %v3946, %v3824
        %v3983 = vadd.f32 %v3947, %v3829
        %v3984 = vadd.f32 %v3948, %v3834
        %v3985 = vadd.f32 %v3949, %v3839
        %v3986 = vadd.f32 %v3950, %v3844
        %v3987 = vadd.f32 %v3951, %v3849
        %v3988 = vadd.f32 %v3952, %v3854
        %v3989 = vadd.f32 %v3953, %v3859
        %v3990 = vadd.f32 %v3954, %v3864
        %v3991 = vadd.f32 %v3955, %v3869
        %v3992 = vadd.f32 %v3956, %v3874
        %v3993 = vadd.f32 %v3957, %v3879
        %v3994 = vadd.f32 %v3958, %v3884
        %v3995 = vadd.f32 %v3959, %v3889
        %v3996 = vadd.f32 %v3960, %v3894
        %v3997 = vadd.f32 %v3961, %v3899
        %v3998 = vadd.f32 %v3962, %v3904
        %v3999 = vadd.f32 %v3963, %v3909
        %v4000 = vadd.f32 %v3964, %v3914
        %v4001 = vadd.f32 %v3965, %v3919
        %v4002 = vadd.f32 %v3966, %v3924
        %v4003 = vadd.f32 %v3967, %v3929
        %4004 = vst [vmem:[%s177] sm:$0xff] %v3968
        %4005 = vst [vmem:[%s177 + $0x8] sm:$0xff] %v3969
        %4006 = vst [vmem:[%s177 + $0x10] sm:$0xff] %v3970
        %4007 = vst [vmem:[%s177 + $0x18] sm:$0xff] %v3971
        %4008 = vst [vmem:[%s177 + $0x20] sm:$0xff] %v3972
        %4009 = vst [vmem:[%s177 + $0x28] sm:$0xff] %v3973
        %4010 = vst [vmem:[%s177 + $0x30] sm:$0xff] %v3974
        %4011 = vst [vmem:[%s177 + $0x38] sm:$0xff] %v3975
        %4012 = vst [vmem:[%s177 + $0x40] sm:$0xff] %v3976
        %4013 = vst [vmem:[%s177 + $0x48] sm:$0xff] %v3977
        %4014 = vst [vmem:[%s177 + $0x50] sm:$0xff] %v3978
        %4015 = vst [vmem:[%s177 + $0x58] sm:$0xff] %v3979
        %4016 = vst [vmem:[%s177 + $0x60] sm:$0xff] %v3980
        %4017 = vst [vmem:[%s177 + $0x68] sm:$0xff] %v3981
        %4018 = vst [vmem:[%s177 + $0x70] sm:$0xff] %v3982
        %4019 = vst [vmem:[%s177 + $0x78] sm:$0xff] %v3983
        %4020 = vst [vmem:[%s177 + $0x80] sm:$0xff] %v3984
        %4021 = vst [vmem:[%s177 + $0x88] sm:$0xff] %v3985
        %4022 = vst [vmem:[%s177 + $0x90] sm:$0xff] %v3986
        %4023 = vst [vmem:[%s177 + $0x98] sm:$0xff] %v3987
        %4024 = vst [vmem:[%s177 + $0xa0] sm:$0xff] %v3988
        %4025 = vst [vmem:[%s177 + $0xa8] sm:$0xff] %v3989
        %4026 = vst [vmem:[%s177 + $0xb0] sm:$0xff] %v3990
        %4027 = vst [vmem:[%s177 + $0xb8] sm:$0xff] %v3991
        %4028 = vst [vmem:[%s177 + $0xc0] sm:$0xff] %v3992
        %4029 = vst [vmem:[%s177 + $0xc8] sm:$0xff] %v3993
        %4030 = vst [vmem:[%s177 + $0xd0] sm:$0xff] %v3994
        %4031 = vst [vmem:[%s177 + $0xd8] sm:$0xff] %v3995
        %4032 = vst [vmem:[%s177 + $0xe0] sm:$0xff] %v3996
        %4033 = vst [vmem:[%s177 + $0xe8] sm:$0xff] %v3997
        %4034 = vst [vmem:[%s177 + $0xf0] sm:$0xff] %v3998
        %4035 = vst [vmem:[%s177 + $0xf8] sm:$0xff] %v3999
        %4036 = vst [vmem:[%s177 + $0x100] sm:$0xff] %v4000
        %4037 = vst [vmem:[%s177 + $0x108] sm:$0xff] %v4001
        %4038 = vst [vmem:[%s177 + $0x110] sm:$0xff] %v4002
        %4039 = vst [vmem:[%s177 + $0x118] sm:$0xff] %v4003
        %v4040 = vld [vmem:[#allocation2 + $0x25] sm:$0xff]
        %v4041 = vld [vmem:[#allocation2 + $0x2d] sm:$0xff]
        %v4042 = vld [vmem:[#allocation2 + $0x35] sm:$0xff]
        %v4043 = vld [vmem:[#allocation2 + $0x3d] sm:$0xff]
        %v4044 = vld [vmem:[#allocation2 + $0x45] sm:$0xff]
        %v4045 = vld [vmem:[#allocation2 + $0x4d] sm:$0xff]
        %v4046 = vld [vmem:[#allocation2 + $0x55] sm:$0xff]
        %v4047 = vld [vmem:[#allocation2 + $0x5d] sm:$0xff]
        %v4048 = vld [vmem:[#allocation2 + $0x65] sm:$0xff]
        %v4049 = vld [vmem:[#allocation2 + $0x6d] sm:$0xff]
        %v4050 = vld [vmem:[#allocation2 + $0x75] sm:$0xff]
        %v4051 = vld [vmem:[#allocation2 + $0x7d] sm:$0xff]
        %v4052 = vld [vmem:[#allocation2 + $0x85] sm:$0xff]
        %v4053 = vld [vmem:[#allocation2 + $0x8d] sm:$0xff]
        %v4054 = vld [vmem:[#allocation2 + $0x95] sm:$0xff]
        %v4055 = vld [vmem:[#allocation2 + $0x9d] sm:$0xff]
        %v4056 = vld [vmem:[#allocation2 + $0xa5] sm:$0xff]
        %v4057 = vld [vmem:[#allocation2 + $0xad] sm:$0xff]
        %v4058 = vld [vmem:[#allocation2 + $0xb5] sm:$0xff]
        %v4059 = vld [vmem:[#allocation2 + $0xbd] sm:$0xff]
        %v4060 = vld [vmem:[#allocation2 + $0xc5] sm:$0xff]
        %v4061 = vld [vmem:[#allocation2 + $0xcd] sm:$0xff]
        %v4062 = vld [vmem:[#allocation2 + $0xd5] sm:$0xff]
        %v4063 = vld [vmem:[#allocation2 + $0xdd] sm:$0xff]
        %v4064 = vld [vmem:[#allocation2 + $0xe5] sm:$0xff]
        %v4065 = vld [vmem:[#allocation2 + $0xed] sm:$0xff]
        %v4066 = vld [vmem:[#allocation2 + $0xf5] sm:$0xff]
        %v4067 = vld [vmem:[#allocation2 + $0xfd] sm:$0xff]
        %v4068 = vld [vmem:[#allocation2 + $0x105] sm:$0xff]
        %v4069 = vld [vmem:[#allocation2 + $0x10d] sm:$0xff]
        %v4070 = vld [vmem:[#allocation2 + $0x115] sm:$0xff]
        %v4071 = vld [vmem:[#allocation2 + $0x11d] sm:$0xff]
        %v4072 = vld [vmem:[#allocation2 + $0x125] sm:$0xff]
        %v4073 = vld [vmem:[#allocation2 + $0x12d] sm:$0xff]
        %v4074 = vld [vmem:[#allocation2 + $0x135] sm:$0xff]
        %v4075 = vld [vmem:[#allocation2 + $0x13d] sm:$0xff]
        %s4076 = scalar_lea.vmem %s1, 28
        %v4077 = vld [vmem:[%s4076] sm:$0xf]
        %v4079 = vsel %vm555, %v4040, 0
        %v4082 = vsel %vm555, %v4041, 0
        %v4085 = vsel %vm555, %v4042, 0
        %v4088 = vsel %vm555, %v4043, 0
        %v4091 = vsel %vm555, %v4044, 0
        %v4094 = vsel %vm555, %v4045, 0
        %v4097 = vsel %vm555, %v4046, 0
        %v4100 = vsel %vm555, %v4047, 0
        %v4103 = vsel %vm555, %v4048, 0
        %v4106 = vsel %vm555, %v4049, 0
        %v4109 = vsel %vm555, %v4050, 0
        %v4112 = vsel %vm555, %v4051, 0
        %v4115 = vsel %vm555, %v4052, 0
        %v4118 = vsel %vm555, %v4053, 0
        %v4121 = vsel %vm555, %v4054, 0
        %v4124 = vsel %vm555, %v4055, 0
        %v4127 = vsel %vm555, %v4056, 0
        %v4130 = vsel %vm555, %v4057, 0
        %v4133 = vsel %vm555, %v4058, 0
        %v4136 = vsel %vm555, %v4059, 0
        %v4139 = vsel %vm555, %v4060, 0
        %v4142 = vsel %vm555, %v4061, 0
        %v4145 = vsel %vm555, %v4062, 0
        %v4148 = vsel %vm555, %v4063, 0
        %v4151 = vsel %vm555, %v4064, 0
        %v4154 = vsel %vm555, %v4065, 0
        %v4157 = vsel %vm555, %v4066, 0
        %v4160 = vsel %vm555, %v4067, 0
        %v4163 = vsel %vm555, %v4068, 0
        %v4166 = vsel %vm555, %v4069, 0
        %v4169 = vsel %vm555, %v4070, 0
        %v4172 = vsel %vm555, %v4071, 0
        %v4175 = vsel %vm555, %v4072, 0
        %v4178 = vsel %vm555, %v4073, 0
        %v4181 = vsel %vm555, %v4074, 0
        %v4184 = vsel %vm555, %v4075, 0
        %v4187 = vsel %vm743, %v4077, 0
        %4189 = vmatprep.subr.mxu0 0.0
        %4190 = vmatpush1.msra.mxu0 0.0
        %4191 = vmatprep.subr.mxu0 0.0
        %4192 = vmatpush1.msra.mxu0 0.0
        %4193 = vmatprep.subr.mxu0 0.0
        %4194 = vmatpush1.msra.mxu0 0.0
        %4195 = vmatprep.subr.mxu0 0.0
        %4196 = vmatpush1.msra.mxu0 0.0
        %4197 = vmatprep.subr.mxu0 0.0
        %4198 = vmatpush1.msra.mxu0 0.0
        %4199 = vmatprep.subr.mxu0 0.0
        %4200 = vmatpush1.msra.mxu0 0.0
        %4201 = vmatprep.subr.mxu0 0.0
        %4202 = vmatpush1.msra.mxu0 0.0
        %4203 = vmatprep.subr.mxu0 0.0
        %4204 = vmatpush1.msra.mxu0 0.0
        %4205 = vmatprep.subr.mxu0 0.0
        %4206 = vmatpush1.msra.mxu0 0.0
        %4207 = vmatprep.subr.mxu0 0.0
        %4208 = vmatpush1.msra.mxu0 0.0
        %4209 = vmatprep.subr.mxu0 0.0
        %4210 = vmatpush1.msra.mxu0 0.0
        %4211 = vmatprep.subr.mxu0 0.0
        %4212 = vmatpush1.msra.mxu0 0.0
        %4213 = vmatprep.subr.mxu0 0.0
        %4214 = vmatpush1.msra.mxu0 0.0
        %4215 = vmatprep.subr.mxu0 0.0
        %4216 = vmatpush1.msra.mxu0 0.0
        %4217 = vmatprep.subr.mxu0 0.0
        %4218 = vmatpush1.msra.mxu0 0.0
        %4219 = vmatprep.subr.mxu0 0.0
        %4220 = vmatpush1.msra.mxu0 %v4187
        %4221 = vmatprep.subr.mxu0 0.0
        %4222 = vmatpush2.msra.mxu0 0.0
        %4223 = vmatprep.subr.mxu0 0.0
        %4224 = vmatpush2.msra.mxu0 0.0
        %4225 = vmatprep.subr.mxu0 0.0
        %4226 = vmatpush2.msra.mxu0 0.0
        %4227 = vmatprep.subr.mxu0 0.0
        %4228 = vmatpush2.msra.mxu0 0.0
        %4229 = vmatprep.subr.mxu0 0.0
        %4230 = vmatpush2.msra.mxu0 0.0
        %4231 = vmatprep.subr.mxu0 0.0
        %4232 = vmatpush2.msra.mxu0 0.0
        %4233 = vmatprep.subr.mxu0 0.0
        %4234 = vmatpush2.msra.mxu0 0.0
        %4235 = vmatprep.subr.mxu0 0.0
        %4236 = vmatpush2.msra.mxu0 0.0
        %4237 = vmatprep.subr.mxu0 0.0
        %4238 = vmatpush2.msra.mxu0 0.0
        %4239 = vmatprep.subr.mxu0 0.0
        %4240 = vmatpush2.msra.mxu0 0.0
        %4241 = vmatprep.subr.mxu0 0.0
        %4242 = vmatpush2.msra.mxu0 0.0
        %4243 = vmatprep.subr.mxu0 0.0
        %4244 = vmatpush2.msra.mxu0 0.0
        %4245 = vmatprep.subr.mxu0 0.0
        %4246 = vmatpush2.msra.mxu0 0.0
        %4247 = vmatprep.subr.mxu0 0.0
        %4248 = vmatpush2.msra.mxu0 0.0
        %4249 = vmatprep.subr.mxu0 0.0
        %4250 = vmatpush2.msra.mxu0 0.0
        %4251 = vmatprep.subr.mxu0 0.0
        %4252 = vmatpush2.msra.mxu0 0.0
        %4253 = vmatprep.mubr.f32.mxu0 0.0
        %4254 = vmatmul.mubr.f32.gmra.mxu0 %v4079
        %v4255 = vpop.f32.mrf.mxu0
        %v4256 = vadd.f32 0.0, %v4255
        %v4257 = vpop.f32.mrf.mxu0
        %4258 = vmatprep.mubr.f32.mxu0 0.0
        %4259 = vmatmul.mubr.f32.gmra.mxu0 %v4082
        %v4260 = vpop.f32.mrf.mxu0
        %v4261 = vadd.f32 0.0, %v4260
        %v4262 = vpop.f32.mrf.mxu0
        %4263 = vmatprep.mubr.f32.mxu0 0.0
        %4264 = vmatmul.mubr.f32.gmra.mxu0 %v4085
        %v4265 = vpop.f32.mrf.mxu0
        %v4266 = vadd.f32 0.0, %v4265
        %v4267 = vpop.f32.mrf.mxu0
        %4268 = vmatprep.mubr.f32.mxu0 0.0
        %4269 = vmatmul.mubr.f32.gmra.mxu0 %v4088
        %v4270 = vpop.f32.mrf.mxu0
        %v4271 = vadd.f32 0.0, %v4270
        %v4272 = vpop.f32.mrf.mxu0
        %4273 = vmatprep.mubr.f32.mxu0 0.0
        %4274 = vmatmul.mubr.f32.gmra.mxu0 %v4091
        %v4275 = vpop.f32.mrf.mxu0
        %v4276 = vadd.f32 0.0, %v4275
        %v4277 = vpop.f32.mrf.mxu0
        %4278 = vmatprep.mubr.f32.mxu0 0.0
        %4279 = vmatmul.mubr.f32.gmra.mxu0 %v4094
        %v4280 = vpop.f32.mrf.mxu0
        %v4281 = vadd.f32 0.0, %v4280
        %v4282 = vpop.f32.mrf.mxu0
        %4283 = vmatprep.mubr.f32.mxu0 0.0
        %4284 = vmatmul.mubr.f32.gmra.mxu0 %v4097
        %v4285 = vpop.f32.mrf.mxu0
        %v4286 = vadd.f32 0.0, %v4285
        %v4287 = vpop.f32.mrf.mxu0
        %4288 = vmatprep.mubr.f32.mxu0 0.0
        %4289 = vmatmul.mubr.f32.gmra.mxu0 %v4100
        %v4290 = vpop.f32.mrf.mxu0
        %v4291 = vadd.f32 0.0, %v4290
        %v4292 = vpop.f32.mrf.mxu0
        %4293 = vmatprep.mubr.f32.mxu0 0.0
        %4294 = vmatmul.mubr.f32.gmra.mxu0 %v4103
        %v4295 = vpop.f32.mrf.mxu0
        %v4296 = vadd.f32 0.0, %v4295
        %v4297 = vpop.f32.mrf.mxu0
        %4298 = vmatprep.mubr.f32.mxu0 0.0
        %4299 = vmatmul.mubr.f32.gmra.mxu0 %v4106
        %v4300 = vpop.f32.mrf.mxu0
        %v4301 = vadd.f32 0.0, %v4300
        %v4302 = vpop.f32.mrf.mxu0
        %4303 = vmatprep.mubr.f32.mxu0 0.0
        %4304 = vmatmul.mubr.f32.gmra.mxu0 %v4109
        %v4305 = vpop.f32.mrf.mxu0
        %v4306 = vadd.f32 0.0, %v4305
        %v4307 = vpop.f32.mrf.mxu0
        %4308 = vmatprep.mubr.f32.mxu0 0.0
        %4309 = vmatmul.mubr.f32.gmra.mxu0 %v4112
        %v4310 = vpop.f32.mrf.mxu0
        %v4311 = vadd.f32 0.0, %v4310
        %v4312 = vpop.f32.mrf.mxu0
        %4313 = vmatprep.mubr.f32.mxu0 0.0
        %4314 = vmatmul.mubr.f32.gmra.mxu0 %v4115
        %v4315 = vpop.f32.mrf.mxu0
        %v4316 = vadd.f32 0.0, %v4315
        %v4317 = vpop.f32.mrf.mxu0
        %4318 = vmatprep.mubr.f32.mxu0 0.0
        %4319 = vmatmul.mubr.f32.gmra.mxu0 %v4118
        %v4320 = vpop.f32.mrf.mxu0
        %v4321 = vadd.f32 0.0, %v4320
        %v4322 = vpop.f32.mrf.mxu0
        %4323 = vmatprep.mubr.f32.mxu0 0.0
        %4324 = vmatmul.mubr.f32.gmra.mxu0 %v4121
        %v4325 = vpop.f32.mrf.mxu0
        %v4326 = vadd.f32 0.0, %v4325
        %v4327 = vpop.f32.mrf.mxu0
        %4328 = vmatprep.mubr.f32.mxu0 0.0
        %4329 = vmatmul.mubr.f32.gmra.mxu0 %v4124
        %v4330 = vpop.f32.mrf.mxu0
        %v4331 = vadd.f32 0.0, %v4330
        %v4332 = vpop.f32.mrf.mxu0
        %4333 = vmatprep.mubr.f32.mxu0 0.0
        %4334 = vmatmul.mubr.f32.gmra.mxu0 %v4127
        %v4335 = vpop.f32.mrf.mxu0
        %v4336 = vadd.f32 0.0, %v4335
        %v4337 = vpop.f32.mrf.mxu0
        %4338 = vmatprep.mubr.f32.mxu0 0.0
        %4339 = vmatmul.mubr.f32.gmra.mxu0 %v4130
        %v4340 = vpop.f32.mrf.mxu0
        %v4341 = vadd.f32 0.0, %v4340
        %v4342 = vpop.f32.mrf.mxu0
        %4343 = vmatprep.mubr.f32.mxu0 0.0
        %4344 = vmatmul.mubr.f32.gmra.mxu0 %v4133
        %v4345 = vpop.f32.mrf.mxu0
        %v4346 = vadd.f32 0.0, %v4345
        %v4347 = vpop.f32.mrf.mxu0
        %4348 = vmatprep.mubr.f32.mxu0 0.0
        %4349 = vmatmul.mubr.f32.gmra.mxu0 %v4136
        %v4350 = vpop.f32.mrf.mxu0
        %v4351 = vadd.f32 0.0, %v4350
        %v4352 = vpop.f32.mrf.mxu0
        %4353 = vmatprep.mubr.f32.mxu0 0.0
        %4354 = vmatmul.mubr.f32.gmra.mxu0 %v4139
        %v4355 = vpop.f32.mrf.mxu0
        %v4356 = vadd.f32 0.0, %v4355
        %v4357 = vpop.f32.mrf.mxu0
        %4358 = vmatprep.mubr.f32.mxu0 0.0
        %4359 = vmatmul.mubr.f32.gmra.mxu0 %v4142
        %v4360 = vpop.f32.mrf.mxu0
        %v4361 = vadd.f32 0.0, %v4360
        %v4362 = vpop.f32.mrf.mxu0
        %4363 = vmatprep.mubr.f32.mxu0 0.0
        %4364 = vmatmul.mubr.f32.gmra.mxu0 %v4145
        %v4365 = vpop.f32.mrf.mxu0
        %v4366 = vadd.f32 0.0, %v4365
        %v4367 = vpop.f32.mrf.mxu0
        %4368 = vmatprep.mubr.f32.mxu0 0.0
        %4369 = vmatmul.mubr.f32.gmra.mxu0 %v4148
        %v4370 = vpop.f32.mrf.mxu0
        %v4371 = vadd.f32 0.0, %v4370
        %v4372 = vpop.f32.mrf.mxu0
        %4373 = vmatprep.mubr.f32.mxu0 0.0
        %4374 = vmatmul.mubr.f32.gmra.mxu0 %v4151
        %v4375 = vpop.f32.mrf.mxu0
        %v4376 = vadd.f32 0.0, %v4375
        %v4377 = vpop.f32.mrf.mxu0
        %4378 = vmatprep.mubr.f32.mxu0 0.0
        %4379 = vmatmul.mubr.f32.gmra.mxu0 %v4154
        %v4380 = vpop.f32.mrf.mxu0
        %v4381 = vadd.f32 0.0, %v4380
        %v4382 = vpop.f32.mrf.mxu0
        %4383 = vmatprep.mubr.f32.mxu0 0.0
        %4384 = vmatmul.mubr.f32.gmra.mxu0 %v4157
        %v4385 = vpop.f32.mrf.mxu0
        %v4386 = vadd.f32 0.0, %v4385
        %v4387 = vpop.f32.mrf.mxu0
        %4388 = vmatprep.mubr.f32.mxu0 0.0
        %4389 = vmatmul.mubr.f32.gmra.mxu0 %v4160
        %v4390 = vpop.f32.mrf.mxu0
        %v4391 = vadd.f32 0.0, %v4390
        %v4392 = vpop.f32.mrf.mxu0
        %4393 = vmatprep.mubr.f32.mxu0 0.0
        %4394 = vmatmul.mubr.f32.gmra.mxu0 %v4163
        %v4395 = vpop.f32.mrf.mxu0
        %v4396 = vadd.f32 0.0, %v4395
        %v4397 = vpop.f32.mrf.mxu0
        %4398 = vmatprep.mubr.f32.mxu0 0.0
        %4399 = vmatmul.mubr.f32.gmra.mxu0 %v4166
        %v4400 = vpop.f32.mrf.mxu0
        %v4401 = vadd.f32 0.0, %v4400
        %v4402 = vpop.f32.mrf.mxu0
        %4403 = vmatprep.mubr.f32.mxu0 0.0
        %4404 = vmatmul.mubr.f32.gmra.mxu0 %v4169
        %v4405 = vpop.f32.mrf.mxu0
        %v4406 = vadd.f32 0.0, %v4405
        %v4407 = vpop.f32.mrf.mxu0
        %4408 = vmatprep.mubr.f32.mxu0 0.0
        %4409 = vmatmul.mubr.f32.gmra.mxu0 %v4172
        %v4410 = vpop.f32.mrf.mxu0
        %v4411 = vadd.f32 0.0, %v4410
        %v4412 = vpop.f32.mrf.mxu0
        %4413 = vmatprep.mubr.f32.mxu0 0.0
        %4414 = vmatmul.mubr.f32.gmra.mxu0 %v4175
        %v4415 = vpop.f32.mrf.mxu0
        %v4416 = vadd.f32 0.0, %v4415
        %v4417 = vpop.f32.mrf.mxu0
        %4418 = vmatprep.mubr.f32.mxu0 0.0
        %4419 = vmatmul.mubr.f32.gmra.mxu0 %v4178
        %v4420 = vpop.f32.mrf.mxu0
        %v4421 = vadd.f32 0.0, %v4420
        %v4422 = vpop.f32.mrf.mxu0
        %4423 = vmatprep.mubr.f32.mxu0 0.0
        %4424 = vmatmul.mubr.f32.gmra.mxu0 %v4181
        %v4425 = vpop.f32.mrf.mxu0
        %v4426 = vadd.f32 0.0, %v4425
        %v4427 = vpop.f32.mrf.mxu0
        %4428 = vmatprep.mubr.f32.mxu0 0.0
        %4429 = vmatmul.mubr.f32.gmra.mxu0 %v4184
        %v4430 = vpop.f32.mrf.mxu0
        %v4431 = vadd.f32 0.0, %v4430
        %v4432 = vpop.f32.mrf.mxu0
        %4433 = vdwg.mxu0
        %v4434 = vld [vmem:[%s177] sm:$0xff]
        %v4435 = vld [vmem:[%s177 + $0x8] sm:$0xff]
        %v4436 = vld [vmem:[%s177 + $0x10] sm:$0xff]
        %v4437 = vld [vmem:[%s177 + $0x18] sm:$0xff]
        %v4438 = vld [vmem:[%s177 + $0x20] sm:$0xff]
        %v4439 = vld [vmem:[%s177 + $0x28] sm:$0xff]
        %v4440 = vld [vmem:[%s177 + $0x30] sm:$0xff]
        %v4441 = vld [vmem:[%s177 + $0x38] sm:$0xff]
        %v4442 = vld [vmem:[%s177 + $0x40] sm:$0xff]
        %v4443 = vld [vmem:[%s177 + $0x48] sm:$0xff]
        %v4444 = vld [vmem:[%s177 + $0x50] sm:$0xff]
        %v4445 = vld [vmem:[%s177 + $0x58] sm:$0xff]
        %v4446 = vld [vmem:[%s177 + $0x60] sm:$0xff]
        %v4447 = vld [vmem:[%s177 + $0x68] sm:$0xff]
        %v4448 = vld [vmem:[%s177 + $0x70] sm:$0xff]
        %v4449 = vld [vmem:[%s177 + $0x78] sm:$0xff]
        %v4450 = vld [vmem:[%s177 + $0x80] sm:$0xff]
        %v4451 = vld [vmem:[%s177 + $0x88] sm:$0xff]
        %v4452 = vld [vmem:[%s177 + $0x90] sm:$0xff]
        %v4453 = vld [vmem:[%s177 + $0x98] sm:$0xff]
        %v4454 = vld [vmem:[%s177 + $0xa0] sm:$0xff]
        %v4455 = vld [vmem:[%s177 + $0xa8] sm:$0xff]
        %v4456 = vld [vmem:[%s177 + $0xb0] sm:$0xff]
        %v4457 = vld [vmem:[%s177 + $0xb8] sm:$0xff]
        %v4458 = vld [vmem:[%s177 + $0xc0] sm:$0xff]
        %v4459 = vld [vmem:[%s177 + $0xc8] sm:$0xff]
        %v4460 = vld [vmem:[%s177 + $0xd0] sm:$0xff]
        %v4461 = vld [vmem:[%s177 + $0xd8] sm:$0xff]
        %v4462 = vld [vmem:[%s177 + $0xe0] sm:$0xff]
        %v4463 = vld [vmem:[%s177 + $0xe8] sm:$0xff]
        %v4464 = vld [vmem:[%s177 + $0xf0] sm:$0xff]
        %v4465 = vld [vmem:[%s177 + $0xf8] sm:$0xff]
        %v4466 = vld [vmem:[%s177 + $0x100] sm:$0xff]
        %v4467 = vld [vmem:[%s177 + $0x108] sm:$0xff]
        %v4468 = vld [vmem:[%s177 + $0x110] sm:$0xff]
        %v4469 = vld [vmem:[%s177 + $0x118] sm:$0xff]
        %v4470 = vadd.f32 %v4434, %v4256
        %v4471 = vadd.f32 %v4435, %v4261
        %v4472 = vadd.f32 %v4436, %v4266
        %v4473 = vadd.f32 %v4437, %v4271
        %v4474 = vadd.f32 %v4438, %v4276
        %v4475 = vadd.f32 %v4439, %v4281
        %v4476 = vadd.f32 %v4440, %v4286
        %v4477 = vadd.f32 %v4441, %v4291
        %v4478 = vadd.f32 %v4442, %v4296
        %v4479 = vadd.f32 %v4443, %v4301
        %v4480 = vadd.f32 %v4444, %v4306
        %v4481 = vadd.f32 %v4445, %v4311
        %v4482 = vadd.f32 %v4446, %v4316
        %v4483 = vadd.f32 %v4447, %v4321
        %v4484 = vadd.f32 %v4448, %v4326
        %v4485 = vadd.f32 %v4449, %v4331
        %v4486 = vadd.f32 %v4450, %v4336
        %v4487 = vadd.f32 %v4451, %v4341
        %v4488 = vadd.f32 %v4452, %v4346
        %v4489 = vadd.f32 %v4453, %v4351
        %v4490 = vadd.f32 %v4454, %v4356
        %v4491 = vadd.f32 %v4455, %v4361
        %v4492 = vadd.f32 %v4456, %v4366
        %v4493 = vadd.f32 %v4457, %v4371
        %v4494 = vadd.f32 %v4458, %v4376
        %v4495 = vadd.f32 %v4459, %v4381
        %v4496 = vadd.f32 %v4460, %v4386
        %v4497 = vadd.f32 %v4461, %v4391
        %v4498 = vadd.f32 %v4462, %v4396
        %v4499 = vadd.f32 %v4463, %v4401
        %v4500 = vadd.f32 %v4464, %v4406
        %v4501 = vadd.f32 %v4465, %v4411
        %v4502 = vadd.f32 %v4466, %v4416
        %v4503 = vadd.f32 %v4467, %v4421
        %v4504 = vadd.f32 %v4468, %v4426
        %v4505 = vadd.f32 %v4469, %v4431
        %4506 = vst [vmem:[%s177] sm:$0xff] %v4470
        %4507 = vst [vmem:[%s177 + $0x8] sm:$0xff] %v4471
        %4508 = vst [vmem:[%s177 + $0x10] sm:$0xff] %v4472
        %4509 = vst [vmem:[%s177 + $0x18] sm:$0xff] %v4473
        %4510 = vst [vmem:[%s177 + $0x20] sm:$0xff] %v4474
        %4511 = vst [vmem:[%s177 + $0x28] sm:$0xff] %v4475
        %4512 = vst [vmem:[%s177 + $0x30] sm:$0xff] %v4476
        %4513 = vst [vmem:[%s177 + $0x38] sm:$0xff] %v4477
        %4514 = vst [vmem:[%s177 + $0x40] sm:$0xff] %v4478
        %4515 = vst [vmem:[%s177 + $0x48] sm:$0xff] %v4479
        %4516 = vst [vmem:[%s177 + $0x50] sm:$0xff] %v4480
        %4517 = vst [vmem:[%s177 + $0x58] sm:$0xff] %v4481
        %4518 = vst [vmem:[%s177 + $0x60] sm:$0xff] %v4482
        %4519 = vst [vmem:[%s177 + $0x68] sm:$0xff] %v4483
        %4520 = vst [vmem:[%s177 + $0x70] sm:$0xff] %v4484
        %4521 = vst [vmem:[%s177 + $0x78] sm:$0xff] %v4485
        %4522 = vst [vmem:[%s177 + $0x80] sm:$0xff] %v4486
        %4523 = vst [vmem:[%s177 + $0x88] sm:$0xff] %v4487
        %4524 = vst [vmem:[%s177 + $0x90] sm:$0xff] %v4488
        %4525 = vst [vmem:[%s177 + $0x98] sm:$0xff] %v4489
        %4526 = vst [vmem:[%s177 + $0xa0] sm:$0xff] %v4490
        %4527 = vst [vmem:[%s177 + $0xa8] sm:$0xff] %v4491
        %4528 = vst [vmem:[%s177 + $0xb0] sm:$0xff] %v4492
        %4529 = vst [vmem:[%s177 + $0xb8] sm:$0xff] %v4493
        %4530 = vst [vmem:[%s177 + $0xc0] sm:$0xff] %v4494
        %4531 = vst [vmem:[%s177 + $0xc8] sm:$0xff] %v4495
        %4532 = vst [vmem:[%s177 + $0xd0] sm:$0xff] %v4496
        %4533 = vst [vmem:[%s177 + $0xd8] sm:$0xff] %v4497
        %4534 = vst [vmem:[%s177 + $0xe0] sm:$0xff] %v4498
        %4535 = vst [vmem:[%s177 + $0xe8] sm:$0xff] %v4499
        %4536 = vst [vmem:[%s177 + $0xf0] sm:$0xff] %v4500
        %4537 = vst [vmem:[%s177 + $0xf8] sm:$0xff] %v4501
        %4538 = vst [vmem:[%s177 + $0x100] sm:$0xff] %v4502
        %4539 = vst [vmem:[%s177 + $0x108] sm:$0xff] %v4503
        %4540 = vst [vmem:[%s177 + $0x110] sm:$0xff] %v4504
        %4541 = vst [vmem:[%s177 + $0x118] sm:$0xff] %v4505
        %v4542 = vld [vmem:[#allocation2 + $0x26] sm:$0xff]
        %v4543 = vld [vmem:[#allocation2 + $0x2e] sm:$0xff]
        %v4544 = vld [vmem:[#allocation2 + $0x36] sm:$0xff]
        %v4545 = vld [vmem:[#allocation2 + $0x3e] sm:$0xff]
        %v4546 = vld [vmem:[#allocation2 + $0x46] sm:$0xff]
        %v4547 = vld [vmem:[#allocation2 + $0x4e] sm:$0xff]
        %v4548 = vld [vmem:[#allocation2 + $0x56] sm:$0xff]
        %v4549 = vld [vmem:[#allocation2 + $0x5e] sm:$0xff]
        %v4550 = vld [vmem:[#allocation2 + $0x66] sm:$0xff]
        %v4551 = vld [vmem:[#allocation2 + $0x6e] sm:$0xff]
        %v4552 = vld [vmem:[#allocation2 + $0x76] sm:$0xff]
        %v4553 = vld [vmem:[#allocation2 + $0x7e] sm:$0xff]
        %v4554 = vld [vmem:[#allocation2 + $0x86] sm:$0xff]
        %v4555 = vld [vmem:[#allocation2 + $0x8e] sm:$0xff]
        %v4556 = vld [vmem:[#allocation2 + $0x96] sm:$0xff]
        %v4557 = vld [vmem:[#allocation2 + $0x9e] sm:$0xff]
        %v4558 = vld [vmem:[#allocation2 + $0xa6] sm:$0xff]
        %v4559 = vld [vmem:[#allocation2 + $0xae] sm:$0xff]
        %v4560 = vld [vmem:[#allocation2 + $0xb6] sm:$0xff]
        %v4561 = vld [vmem:[#allocation2 + $0xbe] sm:$0xff]
        %v4562 = vld [vmem:[#allocation2 + $0xc6] sm:$0xff]
        %v4563 = vld [vmem:[#allocation2 + $0xce] sm:$0xff]
        %v4564 = vld [vmem:[#allocation2 + $0xd6] sm:$0xff]
        %v4565 = vld [vmem:[#allocation2 + $0xde] sm:$0xff]
        %v4566 = vld [vmem:[#allocation2 + $0xe6] sm:$0xff]
        %v4567 = vld [vmem:[#allocation2 + $0xee] sm:$0xff]
        %v4568 = vld [vmem:[#allocation2 + $0xf6] sm:$0xff]
        %v4569 = vld [vmem:[#allocation2 + $0xfe] sm:$0xff]
        %v4570 = vld [vmem:[#allocation2 + $0x106] sm:$0xff]
        %v4571 = vld [vmem:[#allocation2 + $0x10e] sm:$0xff]
        %v4572 = vld [vmem:[#allocation2 + $0x116] sm:$0xff]
        %v4573 = vld [vmem:[#allocation2 + $0x11e] sm:$0xff]
        %v4574 = vld [vmem:[#allocation2 + $0x126] sm:$0xff]
        %v4575 = vld [vmem:[#allocation2 + $0x12e] sm:$0xff]
        %v4576 = vld [vmem:[#allocation2 + $0x136] sm:$0xff]
        %v4577 = vld [vmem:[#allocation2 + $0x13e] sm:$0xff]
        %s4578 = scalar_lea.vmem %s1, 32
        %v4579 = vld [vmem:[%s4578] sm:$0xf]
        %v4581 = vsel %vm555, %v4542, 0
        %v4584 = vsel %vm555, %v4543, 0
        %v4587 = vsel %vm555, %v4544, 0
        %v4590 = vsel %vm555, %v4545, 0
        %v4593 = vsel %vm555, %v4546, 0
        %v4596 = vsel %vm555, %v4547, 0
        %v4599 = vsel %vm555, %v4548, 0
        %v4602 = vsel %vm555, %v4549, 0
        %v4605 = vsel %vm555, %v4550, 0
        %v4608 = vsel %vm555, %v4551, 0
        %v4611 = vsel %vm555, %v4552, 0
        %v4614 = vsel %vm555, %v4553, 0
        %v4617 = vsel %vm555, %v4554, 0
        %v4620 = vsel %vm555, %v4555, 0
        %v4623 = vsel %vm555, %v4556, 0
        %v4626 = vsel %vm555, %v4557, 0
        %v4629 = vsel %vm555, %v4558, 0
        %v4632 = vsel %vm555, %v4559, 0
        %v4635 = vsel %vm555, %v4560, 0
        %v4638 = vsel %vm555, %v4561, 0
        %v4641 = vsel %vm555, %v4562, 0
        %v4644 = vsel %vm555, %v4563, 0
        %v4647 = vsel %vm555, %v4564, 0
        %v4650 = vsel %vm555, %v4565, 0
        %v4653 = vsel %vm555, %v4566, 0
        %v4656 = vsel %vm555, %v4567, 0
        %v4659 = vsel %vm555, %v4568, 0
        %v4662 = vsel %vm555, %v4569, 0
        %v4665 = vsel %vm555, %v4570, 0
        %v4668 = vsel %vm555, %v4571, 0
        %v4671 = vsel %vm555, %v4572, 0
        %v4674 = vsel %vm555, %v4573, 0
        %v4677 = vsel %vm555, %v4574, 0
        %v4680 = vsel %vm555, %v4575, 0
        %v4683 = vsel %vm555, %v4576, 0
        %v4686 = vsel %vm555, %v4577, 0
        %v4689 = vsel %vm743, %v4579, 0
        %4691 = vmatprep.subr.mxu0 0.0
        %4692 = vmatpush1.msra.mxu0 0.0
        %4693 = vmatprep.subr.mxu0 0.0
        %4694 = vmatpush1.msra.mxu0 0.0
        %4695 = vmatprep.subr.mxu0 0.0
        %4696 = vmatpush1.msra.mxu0 0.0
        %4697 = vmatprep.subr.mxu0 0.0
        %4698 = vmatpush1.msra.mxu0 0.0
        %4699 = vmatprep.subr.mxu0 0.0
        %4700 = vmatpush1.msra.mxu0 0.0
        %4701 = vmatprep.subr.mxu0 0.0
        %4702 = vmatpush1.msra.mxu0 0.0
        %4703 = vmatprep.subr.mxu0 0.0
        %4704 = vmatpush1.msra.mxu0 0.0
        %4705 = vmatprep.subr.mxu0 0.0
        %4706 = vmatpush1.msra.mxu0 0.0
        %4707 = vmatprep.subr.mxu0 0.0
        %4708 = vmatpush1.msra.mxu0 0.0
        %4709 = vmatprep.subr.mxu0 0.0
        %4710 = vmatpush1.msra.mxu0 0.0
        %4711 = vmatprep.subr.mxu0 0.0
        %4712 = vmatpush1.msra.mxu0 0.0
        %4713 = vmatprep.subr.mxu0 0.0
        %4714 = vmatpush1.msra.mxu0 0.0
        %4715 = vmatprep.subr.mxu0 0.0
        %4716 = vmatpush1.msra.mxu0 0.0
        %4717 = vmatprep.subr.mxu0 0.0
        %4718 = vmatpush1.msra.mxu0 0.0
        %4719 = vmatprep.subr.mxu0 0.0
        %4720 = vmatpush1.msra.mxu0 0.0
        %4721 = vmatprep.subr.mxu0 0.0
        %4722 = vmatpush1.msra.mxu0 %v4689
        %4723 = vmatprep.subr.mxu0 0.0
        %4724 = vmatpush2.msra.mxu0 0.0
        %4725 = vmatprep.subr.mxu0 0.0
        %4726 = vmatpush2.msra.mxu0 0.0
        %4727 = vmatprep.subr.mxu0 0.0
        %4728 = vmatpush2.msra.mxu0 0.0
        %4729 = vmatprep.subr.mxu0 0.0
        %4730 = vmatpush2.msra.mxu0 0.0
        %4731 = vmatprep.subr.mxu0 0.0
        %4732 = vmatpush2.msra.mxu0 0.0
        %4733 = vmatprep.subr.mxu0 0.0
        %4734 = vmatpush2.msra.mxu0 0.0
        %4735 = vmatprep.subr.mxu0 0.0
        %4736 = vmatpush2.msra.mxu0 0.0
        %4737 = vmatprep.subr.mxu0 0.0
        %4738 = vmatpush2.msra.mxu0 0.0
        %4739 = vmatprep.subr.mxu0 0.0
        %4740 = vmatpush2.msra.mxu0 0.0
        %4741 = vmatprep.subr.mxu0 0.0
        %4742 = vmatpush2.msra.mxu0 0.0
        %4743 = vmatprep.subr.mxu0 0.0
        %4744 = vmatpush2.msra.mxu0 0.0
        %4745 = vmatprep.subr.mxu0 0.0
        %4746 = vmatpush2.msra.mxu0 0.0
        %4747 = vmatprep.subr.mxu0 0.0
        %4748 = vmatpush2.msra.mxu0 0.0
        %4749 = vmatprep.subr.mxu0 0.0
        %4750 = vmatpush2.msra.mxu0 0.0
        %4751 = vmatprep.subr.mxu0 0.0
        %4752 = vmatpush2.msra.mxu0 0.0
        %4753 = vmatprep.subr.mxu0 0.0
        %4754 = vmatpush2.msra.mxu0 0.0
        %4755 = vmatprep.mubr.f32.mxu0 0.0
        %4756 = vmatmul.mubr.f32.gmra.mxu0 %v4581
        %v4757 = vpop.f32.mrf.mxu0
        %v4758 = vadd.f32 0.0, %v4757
        %v4759 = vpop.f32.mrf.mxu0
        %4760 = vmatprep.mubr.f32.mxu0 0.0
        %4761 = vmatmul.mubr.f32.gmra.mxu0 %v4584
        %v4762 = vpop.f32.mrf.mxu0
        %v4763 = vadd.f32 0.0, %v4762
        %v4764 = vpop.f32.mrf.mxu0
        %4765 = vmatprep.mubr.f32.mxu0 0.0
        %4766 = vmatmul.mubr.f32.gmra.mxu0 %v4587
        %v4767 = vpop.f32.mrf.mxu0
        %v4768 = vadd.f32 0.0, %v4767
        %v4769 = vpop.f32.mrf.mxu0
        %4770 = vmatprep.mubr.f32.mxu0 0.0
        %4771 = vmatmul.mubr.f32.gmra.mxu0 %v4590
        %v4772 = vpop.f32.mrf.mxu0
        %v4773 = vadd.f32 0.0, %v4772
        %v4774 = vpop.f32.mrf.mxu0
        %4775 = vmatprep.mubr.f32.mxu0 0.0
        %4776 = vmatmul.mubr.f32.gmra.mxu0 %v4593
        %v4777 = vpop.f32.mrf.mxu0
        %v4778 = vadd.f32 0.0, %v4777
        %v4779 = vpop.f32.mrf.mxu0
        %4780 = vmatprep.mubr.f32.mxu0 0.0
        %4781 = vmatmul.mubr.f32.gmra.mxu0 %v4596
        %v4782 = vpop.f32.mrf.mxu0
        %v4783 = vadd.f32 0.0, %v4782
        %v4784 = vpop.f32.mrf.mxu0
        %4785 = vmatprep.mubr.f32.mxu0 0.0
        %4786 = vmatmul.mubr.f32.gmra.mxu0 %v4599
        %v4787 = vpop.f32.mrf.mxu0
        %v4788 = vadd.f32 0.0, %v4787
        %v4789 = vpop.f32.mrf.mxu0
        %4790 = vmatprep.mubr.f32.mxu0 0.0
        %4791 = vmatmul.mubr.f32.gmra.mxu0 %v4602
        %v4792 = vpop.f32.mrf.mxu0
        %v4793 = vadd.f32 0.0, %v4792
        %v4794 = vpop.f32.mrf.mxu0
        %4795 = vmatprep.mubr.f32.mxu0 0.0
        %4796 = vmatmul.mubr.f32.gmra.mxu0 %v4605
        %v4797 = vpop.f32.mrf.mxu0
        %v4798 = vadd.f32 0.0, %v4797
        %v4799 = vpop.f32.mrf.mxu0
        %4800 = vmatprep.mubr.f32.mxu0 0.0
        %4801 = vmatmul.mubr.f32.gmra.mxu0 %v4608
        %v4802 = vpop.f32.mrf.mxu0
        %v4803 = vadd.f32 0.0, %v4802
        %v4804 = vpop.f32.mrf.mxu0
        %4805 = vmatprep.mubr.f32.mxu0 0.0
        %4806 = vmatmul.mubr.f32.gmra.mxu0 %v4611
        %v4807 = vpop.f32.mrf.mxu0
        %v4808 = vadd.f32 0.0, %v4807
        %v4809 = vpop.f32.mrf.mxu0
        %4810 = vmatprep.mubr.f32.mxu0 0.0
        %4811 = vmatmul.mubr.f32.gmra.mxu0 %v4614
        %v4812 = vpop.f32.mrf.mxu0
        %v4813 = vadd.f32 0.0, %v4812
        %v4814 = vpop.f32.mrf.mxu0
        %4815 = vmatprep.mubr.f32.mxu0 0.0
        %4816 = vmatmul.mubr.f32.gmra.mxu0 %v4617
        %v4817 = vpop.f32.mrf.mxu0
        %v4818 = vadd.f32 0.0, %v4817
        %v4819 = vpop.f32.mrf.mxu0
        %4820 = vmatprep.mubr.f32.mxu0 0.0
        %4821 = vmatmul.mubr.f32.gmra.mxu0 %v4620
        %v4822 = vpop.f32.mrf.mxu0
        %v4823 = vadd.f32 0.0, %v4822
        %v4824 = vpop.f32.mrf.mxu0
        %4825 = vmatprep.mubr.f32.mxu0 0.0
        %4826 = vmatmul.mubr.f32.gmra.mxu0 %v4623
        %v4827 = vpop.f32.mrf.mxu0
        %v4828 = vadd.f32 0.0, %v4827
        %v4829 = vpop.f32.mrf.mxu0
        %4830 = vmatprep.mubr.f32.mxu0 0.0
        %4831 = vmatmul.mubr.f32.gmra.mxu0 %v4626
        %v4832 = vpop.f32.mrf.mxu0
        %v4833 = vadd.f32 0.0, %v4832
        %v4834 = vpop.f32.mrf.mxu0
        %4835 = vmatprep.mubr.f32.mxu0 0.0
        %4836 = vmatmul.mubr.f32.gmra.mxu0 %v4629
        %v4837 = vpop.f32.mrf.mxu0
        %v4838 = vadd.f32 0.0, %v4837
        %v4839 = vpop.f32.mrf.mxu0
        %4840 = vmatprep.mubr.f32.mxu0 0.0
        %4841 = vmatmul.mubr.f32.gmra.mxu0 %v4632
        %v4842 = vpop.f32.mrf.mxu0
        %v4843 = vadd.f32 0.0, %v4842
        %v4844 = vpop.f32.mrf.mxu0
        %4845 = vmatprep.mubr.f32.mxu0 0.0
        %4846 = vmatmul.mubr.f32.gmra.mxu0 %v4635
        %v4847 = vpop.f32.mrf.mxu0
        %v4848 = vadd.f32 0.0, %v4847
        %v4849 = vpop.f32.mrf.mxu0
        %4850 = vmatprep.mubr.f32.mxu0 0.0
        %4851 = vmatmul.mubr.f32.gmra.mxu0 %v4638
        %v4852 = vpop.f32.mrf.mxu0
        %v4853 = vadd.f32 0.0, %v4852
        %v4854 = vpop.f32.mrf.mxu0
        %4855 = vmatprep.mubr.f32.mxu0 0.0
        %4856 = vmatmul.mubr.f32.gmra.mxu0 %v4641
        %v4857 = vpop.f32.mrf.mxu0
        %v4858 = vadd.f32 0.0, %v4857
        %v4859 = vpop.f32.mrf.mxu0
        %4860 = vmatprep.mubr.f32.mxu0 0.0
        %4861 = vmatmul.mubr.f32.gmra.mxu0 %v4644
        %v4862 = vpop.f32.mrf.mxu0
        %v4863 = vadd.f32 0.0, %v4862
        %v4864 = vpop.f32.mrf.mxu0
        %4865 = vmatprep.mubr.f32.mxu0 0.0
        %4866 = vmatmul.mubr.f32.gmra.mxu0 %v4647
        %v4867 = vpop.f32.mrf.mxu0
        %v4868 = vadd.f32 0.0, %v4867
        %v4869 = vpop.f32.mrf.mxu0
        %4870 = vmatprep.mubr.f32.mxu0 0.0
        %4871 = vmatmul.mubr.f32.gmra.mxu0 %v4650
        %v4872 = vpop.f32.mrf.mxu0
        %v4873 = vadd.f32 0.0, %v4872
        %v4874 = vpop.f32.mrf.mxu0
        %4875 = vmatprep.mubr.f32.mxu0 0.0
        %4876 = vmatmul.mubr.f32.gmra.mxu0 %v4653
        %v4877 = vpop.f32.mrf.mxu0
        %v4878 = vadd.f32 0.0, %v4877
        %v4879 = vpop.f32.mrf.mxu0
        %4880 = vmatprep.mubr.f32.mxu0 0.0
        %4881 = vmatmul.mubr.f32.gmra.mxu0 %v4656
        %v4882 = vpop.f32.mrf.mxu0
        %v4883 = vadd.f32 0.0, %v4882
        %v4884 = vpop.f32.mrf.mxu0
        %4885 = vmatprep.mubr.f32.mxu0 0.0
        %4886 = vmatmul.mubr.f32.gmra.mxu0 %v4659
        %v4887 = vpop.f32.mrf.mxu0
        %v4888 = vadd.f32 0.0, %v4887
        %v4889 = vpop.f32.mrf.mxu0
        %4890 = vmatprep.mubr.f32.mxu0 0.0
        %4891 = vmatmul.mubr.f32.gmra.mxu0 %v4662
        %v4892 = vpop.f32.mrf.mxu0
        %v4893 = vadd.f32 0.0, %v4892
        %v4894 = vpop.f32.mrf.mxu0
        %4895 = vmatprep.mubr.f32.mxu0 0.0
        %4896 = vmatmul.mubr.f32.gmra.mxu0 %v4665
        %v4897 = vpop.f32.mrf.mxu0
        %v4898 = vadd.f32 0.0, %v4897
        %v4899 = vpop.f32.mrf.mxu0
        %4900 = vmatprep.mubr.f32.mxu0 0.0
        %4901 = vmatmul.mubr.f32.gmra.mxu0 %v4668
        %v4902 = vpop.f32.mrf.mxu0
        %v4903 = vadd.f32 0.0, %v4902
        %v4904 = vpop.f32.mrf.mxu0
        %4905 = vmatprep.mubr.f32.mxu0 0.0
        %4906 = vmatmul.mubr.f32.gmra.mxu0 %v4671
        %v4907 = vpop.f32.mrf.mxu0
        %v4908 = vadd.f32 0.0, %v4907
        %v4909 = vpop.f32.mrf.mxu0
        %4910 = vmatprep.mubr.f32.mxu0 0.0
        %4911 = vmatmul.mubr.f32.gmra.mxu0 %v4674
        %v4912 = vpop.f32.mrf.mxu0
        %v4913 = vadd.f32 0.0, %v4912
        %v4914 = vpop.f32.mrf.mxu0
        %4915 = vmatprep.mubr.f32.mxu0 0.0
        %4916 = vmatmul.mubr.f32.gmra.mxu0 %v4677
        %v4917 = vpop.f32.mrf.mxu0
        %v4918 = vadd.f32 0.0, %v4917
        %v4919 = vpop.f32.mrf.mxu0
        %4920 = vmatprep.mubr.f32.mxu0 0.0
        %4921 = vmatmul.mubr.f32.gmra.mxu0 %v4680
        %v4922 = vpop.f32.mrf.mxu0
        %v4923 = vadd.f32 0.0, %v4922
        %v4924 = vpop.f32.mrf.mxu0
        %4925 = vmatprep.mubr.f32.mxu0 0.0
        %4926 = vmatmul.mubr.f32.gmra.mxu0 %v4683
        %v4927 = vpop.f32.mrf.mxu0
        %v4928 = vadd.f32 0.0, %v4927
        %v4929 = vpop.f32.mrf.mxu0
        %4930 = vmatprep.mubr.f32.mxu0 0.0
        %4931 = vmatmul.mubr.f32.gmra.mxu0 %v4686
        %v4932 = vpop.f32.mrf.mxu0
        %v4933 = vadd.f32 0.0, %v4932
        %v4934 = vpop.f32.mrf.mxu0
        %4935 = vdwg.mxu0
        %v4936 = vld [vmem:[%s177] sm:$0xff]
        %v4937 = vld [vmem:[%s177 + $0x8] sm:$0xff]
        %v4938 = vld [vmem:[%s177 + $0x10] sm:$0xff]
        %v4939 = vld [vmem:[%s177 + $0x18] sm:$0xff]
        %v4940 = vld [vmem:[%s177 + $0x20] sm:$0xff]
        %v4941 = vld [vmem:[%s177 + $0x28] sm:$0xff]
        %v4942 = vld [vmem:[%s177 + $0x30] sm:$0xff]
        %v4943 = vld [vmem:[%s177 + $0x38] sm:$0xff]
        %v4944 = vld [vmem:[%s177 + $0x40] sm:$0xff]
        %v4945 = vld [vmem:[%s177 + $0x48] sm:$0xff]
        %v4946 = vld [vmem:[%s177 + $0x50] sm:$0xff]
        %v4947 = vld [vmem:[%s177 + $0x58] sm:$0xff]
        %v4948 = vld [vmem:[%s177 + $0x60] sm:$0xff]
        %v4949 = vld [vmem:[%s177 + $0x68] sm:$0xff]
        %v4950 = vld [vmem:[%s177 + $0x70] sm:$0xff]
        %v4951 = vld [vmem:[%s177 + $0x78] sm:$0xff]
        %v4952 = vld [vmem:[%s177 + $0x80] sm:$0xff]
        %v4953 = vld [vmem:[%s177 + $0x88] sm:$0xff]
        %v4954 = vld [vmem:[%s177 + $0x90] sm:$0xff]
        %v4955 = vld [vmem:[%s177 + $0x98] sm:$0xff]
        %v4956 = vld [vmem:[%s177 + $0xa0] sm:$0xff]
        %v4957 = vld [vmem:[%s177 + $0xa8] sm:$0xff]
        %v4958 = vld [vmem:[%s177 + $0xb0] sm:$0xff]
        %v4959 = vld [vmem:[%s177 + $0xb8] sm:$0xff]
        %v4960 = vld [vmem:[%s177 + $0xc0] sm:$0xff]
        %v4961 = vld [vmem:[%s177 + $0xc8] sm:$0xff]
        %v4962 = vld [vmem:[%s177 + $0xd0] sm:$0xff]
        %v4963 = vld [vmem:[%s177 + $0xd8] sm:$0xff]
        %v4964 = vld [vmem:[%s177 + $0xe0] sm:$0xff]
        %v4965 = vld [vmem:[%s177 + $0xe8] sm:$0xff]
        %v4966 = vld [vmem:[%s177 + $0xf0] sm:$0xff]
        %v4967 = vld [vmem:[%s177 + $0xf8] sm:$0xff]
        %v4968 = vld [vmem:[%s177 + $0x100] sm:$0xff]
        %v4969 = vld [vmem:[%s177 + $0x108] sm:$0xff]
        %v4970 = vld [vmem:[%s177 + $0x110] sm:$0xff]
        %v4971 = vld [vmem:[%s177 + $0x118] sm:$0xff]
        %v4972 = vadd.f32 %v4936, %v4758
        %v4973 = vadd.f32 %v4937, %v4763
        %v4974 = vadd.f32 %v4938, %v4768
        %v4975 = vadd.f32 %v4939, %v4773
        %v4976 = vadd.f32 %v4940, %v4778
        %v4977 = vadd.f32 %v4941, %v4783
        %v4978 = vadd.f32 %v4942, %v4788
        %v4979 = vadd.f32 %v4943, %v4793
        %v4980 = vadd.f32 %v4944, %v4798
        %v4981 = vadd.f32 %v4945, %v4803
        %v4982 = vadd.f32 %v4946, %v4808
        %v4983 = vadd.f32 %v4947, %v4813
        %v4984 = vadd.f32 %v4948, %v4818
        %v4985 = vadd.f32 %v4949, %v4823
        %v4986 = vadd.f32 %v4950, %v4828
        %v4987 = vadd.f32 %v4951, %v4833
        %v4988 = vadd.f32 %v4952, %v4838
        %v4989 = vadd.f32 %v4953, %v4843
        %v4990 = vadd.f32 %v4954, %v4848
        %v4991 = vadd.f32 %v4955, %v4853
        %v4992 = vadd.f32 %v4956, %v4858
        %v4993 = vadd.f32 %v4957, %v4863
        %v4994 = vadd.f32 %v4958, %v4868
        %v4995 = vadd.f32 %v4959, %v4873
        %v4996 = vadd.f32 %v4960, %v4878
        %v4997 = vadd.f32 %v4961, %v4883
        %v4998 = vadd.f32 %v4962, %v4888
        %v4999 = vadd.f32 %v4963, %v4893
        %v5000 = vadd.f32 %v4964, %v4898
        %v5001 = vadd.f32 %v4965, %v4903
        %v5002 = vadd.f32 %v4966, %v4908
        %v5003 = vadd.f32 %v4967, %v4913
        %v5004 = vadd.f32 %v4968, %v4918
        %v5005 = vadd.f32 %v4969, %v4923
        %v5006 = vadd.f32 %v4970, %v4928
        %v5007 = vadd.f32 %v4971, %v4933
        %5008 = vst [vmem:[%s177] sm:$0xff] %v4972
        %5009 = vst [vmem:[%s177 + $0x8] sm:$0xff] %v4973
        %5010 = vst [vmem:[%s177 + $0x10] sm:$0xff] %v4974
        %5011 = vst [vmem:[%s177 + $0x18] sm:$0xff] %v4975
        %5012 = vst [vmem:[%s177 + $0x20] sm:$0xff] %v4976
        %5013 = vst [vmem:[%s177 + $0x28] sm:$0xff] %v4977
        %5014 = vst [vmem:[%s177 + $0x30] sm:$0xff] %v4978
        %5015 = vst [vmem:[%s177 + $0x38] sm:$0xff] %v4979
        %5016 = vst [vmem:[%s177 + $0x40] sm:$0xff] %v4980
        %5017 = vst [vmem:[%s177 + $0x48] sm:$0xff] %v4981
        %5018 = vst [vmem:[%s177 + $0x50] sm:$0xff] %v4982
        %5019 = vst [vmem:[%s177 + $0x58] sm:$0xff] %v4983
        %5020 = vst [vmem:[%s177 + $0x60] sm:$0xff] %v4984
        %5021 = vst [vmem:[%s177 + $0x68] sm:$0xff] %v4985
        %5022 = vst [vmem:[%s177 + $0x70] sm:$0xff] %v4986
        %5023 = vst [vmem:[%s177 + $0x78] sm:$0xff] %v4987
        %5024 = vst [vmem:[%s177 + $0x80] sm:$0xff] %v4988
        %5025 = vst [vmem:[%s177 + $0x88] sm:$0xff] %v4989
        %5026 = vst [vmem:[%s177 + $0x90] sm:$0xff] %v4990
        %5027 = vst [vmem:[%s177 + $0x98] sm:$0xff] %v4991
        %5028 = vst [vmem:[%s177 + $0xa0] sm:$0xff] %v4992
        %5029 = vst [vmem:[%s177 + $0xa8] sm:$0xff] %v4993
        %5030 = vst [vmem:[%s177 + $0xb0] sm:$0xff] %v4994
        %5031 = vst [vmem:[%s177 + $0xb8] sm:$0xff] %v4995
        %5032 = vst [vmem:[%s177 + $0xc0] sm:$0xff] %v4996
        %5033 = vst [vmem:[%s177 + $0xc8] sm:$0xff] %v4997
        %5034 = vst [vmem:[%s177 + $0xd0] sm:$0xff] %v4998
        %5035 = vst [vmem:[%s177 + $0xd8] sm:$0xff] %v4999
        %5036 = vst [vmem:[%s177 + $0xe0] sm:$0xff] %v5000
        %5037 = vst [vmem:[%s177 + $0xe8] sm:$0xff] %v5001
        %5038 = vst [vmem:[%s177 + $0xf0] sm:$0xff] %v5002
        %5039 = vst [vmem:[%s177 + $0xf8] sm:$0xff] %v5003
        %5040 = vst [vmem:[%s177 + $0x100] sm:$0xff] %v5004
        %5041 = vst [vmem:[%s177 + $0x108] sm:$0xff] %v5005
        %5042 = vst [vmem:[%s177 + $0x110] sm:$0xff] %v5006
        %5043 = vst [vmem:[%s177 + $0x118] sm:$0xff] %v5007
        %v5044 = vld [vmem:[%s177] sm:$0xff]
        %v5045 = vld [vmem:[%s177 + $0x8] sm:$0xff]
        %v5046 = vld [vmem:[%s177 + $0x10] sm:$0xff]
        %v5047 = vld [vmem:[%s177 + $0x18] sm:$0xff]
        %v5048 = vld [vmem:[%s177 + $0x20] sm:$0xff]
        %v5049 = vld [vmem:[%s177 + $0x28] sm:$0xff]
        %v5050 = vld [vmem:[%s177 + $0x30] sm:$0xff]
        %v5051 = vld [vmem:[%s177 + $0x38] sm:$0xff]
        %v5052 = vld [vmem:[%s177 + $0x40] sm:$0xff]
        %v5053 = vld [vmem:[%s177 + $0x48] sm:$0xff]
        %v5054 = vld [vmem:[%s177 + $0x50] sm:$0xff]
        %v5055 = vld [vmem:[%s177 + $0x58] sm:$0xff]
        %v5056 = vld [vmem:[%s177 + $0x60] sm:$0xff]
        %v5057 = vld [vmem:[%s177 + $0x68] sm:$0xff]
        %v5058 = vld [vmem:[%s177 + $0x70] sm:$0xff]
        %v5059 = vld [vmem:[%s177 + $0x78] sm:$0xff]
        %v5060 = vld [vmem:[%s177 + $0x80] sm:$0xff]
        %v5061 = vld [vmem:[%s177 + $0x88] sm:$0xff]
        %v5062 = vld [vmem:[%s177 + $0x90] sm:$0xff]
        %v5063 = vld [vmem:[%s177 + $0x98] sm:$0xff]
        %v5064 = vld [vmem:[%s177 + $0xa0] sm:$0xff]
        %v5065 = vld [vmem:[%s177 + $0xa8] sm:$0xff]
        %v5066 = vld [vmem:[%s177 + $0xb0] sm:$0xff]
        %v5067 = vld [vmem:[%s177 + $0xb8] sm:$0xff]
        %v5068 = vld [vmem:[%s177 + $0xc0] sm:$0xff]
        %v5069 = vld [vmem:[%s177 + $0xc8] sm:$0xff]
        %v5070 = vld [vmem:[%s177 + $0xd0] sm:$0xff]
        %v5071 = vld [vmem:[%s177 + $0xd8] sm:$0xff]
        %v5072 = vld [vmem:[%s177 + $0xe0] sm:$0xff]
        %v5073 = vld [vmem:[%s177 + $0xe8] sm:$0xff]
        %v5074 = vld [vmem:[%s177 + $0xf0] sm:$0xff]
        %v5075 = vld [vmem:[%s177 + $0xf8] sm:$0xff]
        %v5076 = vld [vmem:[%s177 + $0x100] sm:$0xff]
        %v5077 = vld [vmem:[%s177 + $0x108] sm:$0xff]
        %v5078 = vld [vmem:[%s177 + $0x110] sm:$0xff]
        %v5079 = vld [vmem:[%s177 + $0x118] sm:$0xff]
        %v5080 = vld [vmem:[%s2] sm:$0x1]
        %v5082 = vlaneseq
        %v5083 = vshrl.u32 %v5082, 7
        %v5084 = vsub.s32 0, %v5083
        %v5085 = vrot.slane %v5080, %v5084
        %v5087 = vadd.f32 %v5044, %v5085
        %v5088 = vadd.f32 %v5045, %v5085
        %v5089 = vadd.f32 %v5046, %v5085
        %v5090 = vadd.f32 %v5047, %v5085
        %v5091 = vadd.f32 %v5048, %v5085
        %v5092 = vadd.f32 %v5049, %v5085
        %v5093 = vadd.f32 %v5050, %v5085
        %v5094 = vadd.f32 %v5051, %v5085
        %v5095 = vadd.f32 %v5052, %v5085
        %v5096 = vadd.f32 %v5053, %v5085
        %v5097 = vadd.f32 %v5054, %v5085
        %v5098 = vadd.f32 %v5055, %v5085
        %v5099 = vadd.f32 %v5056, %v5085
        %v5100 = vadd.f32 %v5057, %v5085
        %v5101 = vadd.f32 %v5058, %v5085
        %v5102 = vadd.f32 %v5059, %v5085
        %v5103 = vadd.f32 %v5060, %v5085
        %v5104 = vadd.f32 %v5061, %v5085
        %v5105 = vadd.f32 %v5062, %v5085
        %v5106 = vadd.f32 %v5063, %v5085
        %v5107 = vadd.f32 %v5064, %v5085
        %v5108 = vadd.f32 %v5065, %v5085
        %v5109 = vadd.f32 %v5066, %v5085
        %v5110 = vadd.f32 %v5067, %v5085
        %v5111 = vadd.f32 %v5068, %v5085
        %v5112 = vadd.f32 %v5069, %v5085
        %v5113 = vadd.f32 %v5070, %v5085
        %v5114 = vadd.f32 %v5071, %v5085
        %v5115 = vadd.f32 %v5072, %v5085
        %v5116 = vadd.f32 %v5073, %v5085
        %v5117 = vadd.f32 %v5074, %v5085
        %v5118 = vadd.f32 %v5075, %v5085
        %v5119 = vadd.f32 %v5076, %v5085
        %v5120 = vadd.f32 %v5077, %v5085
        %v5121 = vadd.f32 %v5078, %v5085
        %v5122 = vadd.f32 %v5079, %v5085
        %v5123 = vmax.f32 %v5087, 0.0
        %v5124 = vmax.f32 %v5088, 0.0
        %v5125 = vmax.f32 %v5089, 0.0
        %v5126 = vmax.f32 %v5090, 0.0
        %v5127 = vmax.f32 %v5091, 0.0
        %v5128 = vmax.f32 %v5092, 0.0
        %v5129 = vmax.f32 %v5093, 0.0
        %v5130 = vmax.f32 %v5094, 0.0
        %v5131 = vmax.f32 %v5095, 0.0
        %v5132 = vmax.f32 %v5096, 0.0
        %v5133 = vmax.f32 %v5097, 0.0
        %v5134 = vmax.f32 %v5098, 0.0
        %v5135 = vmax.f32 %v5099, 0.0
        %v5136 = vmax.f32 %v5100, 0.0
        %v5137 = vmax.f32 %v5101, 0.0
        %v5138 = vmax.f32 %v5102, 0.0
        %v5139 = vmax.f32 %v5103, 0.0
        %v5140 = vmax.f32 %v5104, 0.0
        %v5141 = vmax.f32 %v5105, 0.0
        %v5142 = vmax.f32 %v5106, 0.0
        %v5143 = vmax.f32 %v5107, 0.0
        %v5144 = vmax.f32 %v5108, 0.0
        %v5145 = vmax.f32 %v5109, 0.0
        %v5146 = vmax.f32 %v5110, 0.0
        %v5147 = vmax.f32 %v5111, 0.0
        %v5148 = vmax.f32 %v5112, 0.0
        %v5149 = vmax.f32 %v5113, 0.0
        %v5150 = vmax.f32 %v5114, 0.0
        %v5151 = vmax.f32 %v5115, 0.0
        %v5152 = vmax.f32 %v5116, 0.0
        %v5153 = vmax.f32 %v5117, 0.0
        %v5154 = vmax.f32 %v5118, 0.0
        %v5155 = vmax.f32 %v5119, 0.0
        %v5156 = vmax.f32 %v5120, 0.0
        %v5157 = vmax.f32 %v5121, 0.0
        %v5158 = vmax.f32 %v5122, 0.0
        %5159 = vst [vmem:[%s177] sm:$0xff] %v5123
        %5160 = vst [vmem:[%s177 + $0x8] sm:$0xff] %v5124
        %5161 = vst [vmem:[%s177 + $0x10] sm:$0xff] %v5125
        %5162 = vst [vmem:[%s177 + $0x18] sm:$0xff] %v5126
        %5163 = vst [vmem:[%s177 + $0x20] sm:$0xff] %v5127
        %5164 = vst [vmem:[%s177 + $0x28] sm:$0xff] %v5128
        %5165 = vst [vmem:[%s177 + $0x30] sm:$0xff] %v5129
        %5166 = vst [vmem:[%s177 + $0x38] sm:$0xff] %v5130
        %5167 = vst [vmem:[%s177 + $0x40] sm:$0xff] %v5131
        %5168 = vst [vmem:[%s177 + $0x48] sm:$0xff] %v5132
        %5169 = vst [vmem:[%s177 + $0x50] sm:$0xff] %v5133
        %5170 = vst [vmem:[%s177 + $0x58] sm:$0xff] %v5134
        %5171 = vst [vmem:[%s177 + $0x60] sm:$0xff] %v5135
        %5172 = vst [vmem:[%s177 + $0x68] sm:$0xff] %v5136
        %5173 = vst [vmem:[%s177 + $0x70] sm:$0xff] %v5137
        %5174 = vst [vmem:[%s177 + $0x78] sm:$0xff] %v5138
        %5175 = vst [vmem:[%s177 + $0x80] sm:$0xff] %v5139
        %5176 = vst [vmem:[%s177 + $0x88] sm:$0xff] %v5140
        %5177 = vst [vmem:[%s177 + $0x90] sm:$0xff] %v5141
        %5178 = vst [vmem:[%s177 + $0x98] sm:$0xff] %v5142
        %5179 = vst [vmem:[%s177 + $0xa0] sm:$0xff] %v5143
        %5180 = vst [vmem:[%s177 + $0xa8] sm:$0xff] %v5144
        %5181 = vst [vmem:[%s177 + $0xb0] sm:$0xff] %v5145
        %5182 = vst [vmem:[%s177 + $0xb8] sm:$0xff] %v5146
        %5183 = vst [vmem:[%s177 + $0xc0] sm:$0xff] %v5147
        %5184 = vst [vmem:[%s177 + $0xc8] sm:$0xff] %v5148
        %5185 = vst [vmem:[%s177 + $0xd0] sm:$0xff] %v5149
        %5186 = vst [vmem:[%s177 + $0xd8] sm:$0xff] %v5150
        %5187 = vst [vmem:[%s177 + $0xe0] sm:$0xff] %v5151
        %5188 = vst [vmem:[%s177 + $0xe8] sm:$0xff] %v5152
        %5189 = vst [vmem:[%s177 + $0xf0] sm:$0xff] %v5153
        %5190 = vst [vmem:[%s177 + $0xf8] sm:$0xff] %v5154
        %5191 = vst [vmem:[%s177 + $0x100] sm:$0xff] %v5155
        %5192 = vst [vmem:[%s177 + $0x108] sm:$0xff] %v5156
        %5193 = vst [vmem:[%s177 + $0x110] sm:$0xff] %v5157
        %5194 = vst [vmem:[%s177 + $0x118] sm:$0xff] %v5158
        %s5195 = sand.u32 %s107, 1
        %s5196 = scalar_lea.sflag [#allocation4], %s5195
        %s5197 = sand.u32 %s107, 1
        %s5198 = smul.addr %s5197, 288
        %s5199 = scalar_lea.vmem [#allocation3], %s5198
        // Predicated region
        $region33: #{tpu_custom_call.1} parent=31 // pred_check
          %p5200 = pneg %p117
        $region34: #{tpu_custom_call.1} parent=31 // pred_check_branch
          %5202 = sbr.rel (%p5200) target = $region36
        $region35: #{tpu_custom_call.1} parent=31 // pred_region
          %s5203 = smul.u32 36, %s22
          %s5205 = ssub.s32 4608, 4608
          %5206 = vsyncadd %s5196, %s5205
          %s5207 = smul.addr %s21, 36
          %s5208 = sadd.s32 %s5203, %s5207
          %s5209 = smul.addr %s5208, 128
          %s5210 = scalar_lea.hbm %s3, %s5209
          %s5211 = sshll.u32 %s5199, 4
          %s5212 = int_to_ptr.vmem [resolvable:$true] %s5211
          %5217 = dma.vmem_to_hbm [thread:$0]  %s5212, 4608, %s5210, %s5196, 128, 128, 8
        $region36: #{tpu_custom_call.1} parent=31 // pred_fallthru
          _
      $region32: #{tpu_custom_call.1} parent=5 // pred_fallthru
        _
      %p5218 = scmp.le.s32.totalorder 2, %s12
      // Predicated region
      $region37: #{tpu_custom_call.1} parent=5 // pred_check
        %p5219 = pneg %p5218
      $region38: #{tpu_custom_call.1} parent=5 // pred_check_branch
        %5221 = sbr.rel (%p5219) target = $region40
      $region39: #{tpu_custom_call.1} parent=5 // pred_region
        %s5222 = ssub.s32 %s12, 2
        // Predicated region
        $region41: #{tpu_custom_call.1} parent=39 // pred_check
          %p5223 = pneg %p123
        $region42: #{tpu_custom_call.1} parent=39 // pred_check_branch
          %5225 = sbr.rel (%p5223) target = $region44
        $region43: #{tpu_custom_call.1} parent=39 // pred_region
          %s5226 = sand.u32 %s108, 1
          %s5227 = scalar_lea.sflag [#allocation4], %s5226
          %s5228 = sand.u32 %s108, 1
          %s5229 = smul.addr %s5228, 288
          %s5230 = scalar_lea.vmem [#allocation3], %s5229
          %5231 = dma.done %s5227, 4608
        $region44: #{tpu_custom_call.1} parent=39 // pred_fallthru
          _
      $region40: #{tpu_custom_call.1} parent=5 // pred_fallthru
        _
    $region6: #{tpu_custom_call.1} parent=1 // loop_footer
      %s16 = sadd.s32 1, %s12
    $region7: #{tpu_custom_call.1} parent=1 // loop_footer_branch
      %11 = sbr.rel target = $region3
    $region8: #{tpu_custom_call.1} parent=1 // loop_exit
      _
    %5232 = vsyncpa [#allocation4], 1
    %s5233 = scalar_lea.sflag [#allocation4], 1
    %5234 = vsyncpa %s5233, 1

</llo_original>
